<compile_context>
chip_gen: v7x
topology: tpu7x:2x2x1
jax: 0.10.0
libtpu: 0.0.40
codegen_flags: <defaults>
</compile_context>

<pallas_src>
import functools

import jax
import jax.numpy as jnp
from jax import lax
from jax.experimental import pallas as pl
from jax.experimental.pallas import tpu as pltpu

PHENO_DIM = 8            # phenotypic_dim
NUM_CLASSES = 4          # class_num default of the module
BATCH = 2
LN_EPS = 1e-5            # nn.LayerNorm default
_SQRT_2_OVER_PI = 0.7978845608028654

# trunk channel widths ("P" suffix = zero-padded to a 128-lane multiple)
C0, C0P = 96, 128
C1, C1P = 192, 256
C2 = 384
C3 = 768


def _gelu(v):
    # TODO(synk): FCLayer source was not provided; assumed Linear/Conv1d(k=1) + GELU
    #             (the module's act_layer default) + Dropout(drop_rate=0) == identity.
    #             PyTorch nn.GELU defaults to the erf form; tanh approximation used here
    #             (the pure-JAX reference below uses the same form).
    return 0.5 * v * (1.0 + jnp.tanh(_SQRT_2_OVER_PI * (v + 0.044715 * (v * v * v))))


def _round_up(x, m):
    return (x + m - 1) // m * m


# ------------------------------------- slab layout ---------------------------------------------
def make_layout(bstep, p=PHENO_DIM, c=NUM_CLASSES):
    """Static row offsets of every sub-tensor inside the two packed weight slabs.

    bstep = batch elements handled per grid step (n-layer weights are block-diagonal
    over bstep, n-layer biases are batch-tiled)."""
    assert BATCH % bstep == 0
    n0, n1, n2, n3 = bstep * p, bstep * 2 * p, bstep * 4 * p, bstep * 8 * p
    L = dict(bstep=bstep, p=p, c=c, n0=n0, n1=n1, n2=n2, n3=n3)

    # ---- f32 slab (lane width C3=768): LN params, all biases, fc0 slabs, head weight ----
    L["R_LNG"], L["R_LNB"] = 0, 1
    L["R_BC3"], L["R_BC2"], L["R_BC1"], L["R_BOUT"] = 2, 3, 4, 5
    L["R_B0R"] = 8                                     # (p, C0P) fc0 bias in (n, k) layout
    L["R_WOUT"] = _round_up(L["R_B0R"] + p, 8)         # (c, C3)  head weight, un-transposed
    r = _round_up(L["R_WOUT"] + c, 8)
    L["R_W0"] = r; r = _round_up(r + p * p, 8)         # p slabs of (p, C0P): w0[:, i].reshape(p, 96)
    L["R_BN1"] = r; r = _round_up(r + n1, 8)           # n-layer column biases, batch-tiled, pre-broadcast
    L["R_BN2"] = r; r = _round_up(r + n2, 8)
    L["R_BN3"] = r; r = _round_up(r + n3, 8)
    L["F_ROWS"] = r

    # ---- bf16 slab (lane width C3): the six trunk weight matrices ----
    r = 0
    L["RW_N1"] = r; r = _round_up(r + n1, 16)          # (n1, n0) block-diag over bstep
    L["RW_N2"] = r; r = _round_up(r + n2, 16)          # (n2, n1)
    L["RW_N3"] = r; r = _round_up(r + n3, 16)          # (n3, n2)
    L["RW_C1"] = r; r = _round_up(r + C0P, 16)         # (C0P, C1P) = wc1^T zero-padded
    L["RW_C2"] = r; r = _round_up(r + C1P, 16)         # (C1P, C2)  = wc2^T zero-padded
    L["RW_C3"] = r; r = _round_up(r + C2, 16)          # (C2, C3)   = wc3^T
    L["W_ROWS"] = r
    return L


# ------------------------------- fused kernel (bstep batch / step) ------------------------------
def _fused_kernel(L, x_ref, f_ref, w_ref, o_ref):
    f32, bf16 = jnp.float32, jnp.bfloat16
    p, c, bstep = L["p"], L["c"], L["bstep"]
    g = pl.program_id(0)

    # fc_phenotypic_n_0 + rearrange 'b (n k) -> b k n' built directly in channels-last
    # (n, c) layout: p scalar*vreg FMAs per batch element on the VPU (x scalars in SMEM),
    # no MXU matmul, no cross-lane relayout.  Padded lanes 96..127 stay exactly zero.
    b0r = f_ref[L["R_B0R"]:L["R_B0R"] + p, 0:C0P]                         # (p, 128)
    slabs = [f_ref[L["R_W0"] + i * p:L["R_W0"] + (i + 1) * p, 0:C0P] for i in range(p)]
    parts = []
    for b in range(bstep):
        acc = b0r
        for i in range(p):
            acc = acc + x_ref[g * bstep + b, i] * slabs[i]
        parts.append(acc)
    X = parts[0] if bstep == 1 else jnp.concatenate(parts, axis=0)
    X = _gelu(X)                                                          # (bstep*p, 128)

    def n_layer(X, wr, n_out, n_in, br, width):   # FCLayer 'n': Linear over the n axis (rows)
        Wn = w_ref[wr:wr + n_out, 0:n_in]                                 # bf16, block-diag over bstep
        bn = f_ref[br:br + n_out, 0:width]                                # f32, pre-broadcast columns
        return _gelu(jnp.dot(Wn, X.astype(bf16), preferred_element_type=f32) + bn)

    def c_layer(X, wr, c_in, c_out, br):          # FCLayer 'c': Conv1d(k=1) over channels (lanes)
        Wc = w_ref[wr:wr + c_in, 0:c_out]                                 # bf16, = W^T zero-padded
        bc = f_ref[br:br + 1, 0:c_out]                                    # f32 row bias (padded lanes 0)
        return _gelu(jnp.dot(X.astype(bf16), Wc, preferred_element_type=f32) + bc)

    X = n_layer(X, L["RW_N1"], L["n1"], L["n0"], L["R_BN1"], C0P)         # (n1, 128)
    X = c_layer(X, L["RW_C1"], C0P, C1P, L["R_BC1"])                      # (n1, 256)
    X = n_layer(X, L["RW_N2"], L["n2"], L["n1"], L["R_BN2"], C1P)         # (n2, 256)
    X = c_layer(X, L["RW_C2"], C1P, C2, L["R_BC2"])                       # (n2, 384)
    X = n_layer(X, L["RW_N3"], L["n3"], L["n2"], L["R_BN3"], C2)          # (n3, 384)
    X = c_layer(X, L["RW_C3"], C2, C3, L["R_BC3"])                        # (n3, 768)

    # norm_phenotypic: LayerNorm(768) over channels (torch applies it after 'b c n -> b n c')
    gamma = f_ref[L["R_LNG"]:L["R_LNG"] + 1, :]
    beta = f_ref[L["R_LNB"]:L["R_LNB"] + 1, :]
    mu = jnp.mean(X, axis=-1, keepdims=True)
    var = jnp.mean(jnp.square(X - mu), axis=-1, keepdims=True)
    Xn = (X - mu) * lax.rsqrt(var + LN_EPS) * gamma + beta

    # avgpool_phenotypic over n (per batch element)
    npb = 8 * p
    if bstep == 1:
        pooled = jnp.mean(Xn, axis=0, keepdims=True)                      # (1, 768)
    else:
        pooled = jnp.concatenate(
            [jnp.mean(Xn[b * npb:(b + 1) * npb, :], axis=0, keepdims=True)
             for b in range(bstep)], axis=0)                              # (bstep, 768)

    # fc_out_phenotypic on the VPU (wout kept (c, 768): no MXU M=1/N=4 matmul, no
    # (768,4)->(768,128) VMEM padding), then numerically-stable log-softmax.
    wout = f_ref[L["R_WOUT"]:L["R_WOUT"] + c, :]                          # (c, 768) f32
    bout = f_ref[L["R_BOUT"]:L["R_BOUT"] + 1, :][:, 0:c]                  # (1, c)
    logits = jnp.concatenate(
        [jnp.sum(pooled * wout[j:j + 1, :], axis=-1, keepdims=True) for j in range(c)],
        axis=1) + bout                                                    # (bstep, c)
    m = jnp.max(logits, axis=-1, keepdims=True)
    lse = jnp.log(jnp.sum(jnp.exp(logits - m), axis=-1, keepdims=True))
    o_ref[0] = logits - m - lse


# ------------------------------------------ params ---------------------------------------------
def init_raw_params(key, p=PHENO_DIM, num_classes=NUM_CLASSES):
    """Weights in torch convention (out, in), f32."""
    ks = jax.random.split(key, 16)
    w = lambda k, shape: (0.05 * jax.random.normal(k, shape)).astype(jnp.float32)
    return {
        "w0":  w(ks[0], (p * 96, p)),       "b0":  w(ks[1], (p * 96,)),
        "wn1": w(ks[2], (p * 2, p)),        "bn1": w(ks[3], (p * 2,)),
        "wc1": w(ks[4], (192, 96)),         "bc1": w(ks[5], (192,)),
        "wn2": w(ks[6], (p * 4, p * 2)),    "bn2": w(ks[7], (p * 4,)),
        "wc2": w(ks[8], (384, 192)),        "bc2": w(ks[9], (384,)),
        "wn3": w(ks[10], (p * 8, p * 4)),   "bn3": w(ks[11], (p * 8,)),
        "wc3": w(ks[12], (768, 384)),       "bc3": w(ks[13], (768,)),
        "ln_g": jnp.ones((768,), jnp.float32),
        "ln_b": jnp.zeros((768,), jnp.float32),
        "wout": w(ks[14], (num_classes, 768)), "bout": w(ks[15], (num_classes,)),
    }


def pack_params(raw, L):
    """One-time, out-of-jit packing: every weight/bias goes into ONE f32 slab + ONE bf16
    slab (so only 3 input DMAs incl. the SMEM scalars), with 96->128 / 192->256 channel
    dims zero-padded so all trunk activations are lane-dense."""
    p, c, bstep = L["p"], L["c"], L["bstep"]

    def put(slab, r0, v):
        v = jnp.asarray(v, slab.dtype)
        return slab.at[r0:r0 + v.shape[0], 0:v.shape[1]].set(v)

    def blkdiag(w):                      # batch fold: block_diag(w, ..., w), bstep copies
        o, i = w.shape
        z = jnp.zeros((bstep * o, bstep * i), w.dtype)
        for b in range(bstep):
            z = z.at[b * o:(b + 1) * o, b * i:(b + 1) * i].set(w)
        return z

    f = jnp.zeros((L["F_ROWS"], C3), jnp.float32)
    f = put(f, L["R_LNG"], raw["ln_g"][None, :])
    f = put(f, L["R_LNB"], raw["ln_b"][None, :])
    f = put(f, L["R_BC3"], raw["bc3"][None, :])
    f = put(f, L["R_BC2"], raw["bc2"][None, :])
    f = put(f, L["R_BC1"], raw["bc1"][None, :])            # lanes 192..255 stay 0 (output pad)
    f = put(f, L["R_BOUT"], raw["bout"][None, :])
    f = put(f, L["R_B0R"], raw["b0"].reshape(p, C0))       # lanes 96..127 stay 0
    f = put(f, L["R_WOUT"], raw["wout"])                   # (c, 768) un-transposed -> VPU head
    f = put(f, L["R_W0"], raw["w0"].T.reshape(p * p, C0))  # slab i, row n, col k = w0[n*96+k, i]
    f = put(f, L["R_BN1"], jnp.tile(raw["bn1"][:, None], (bstep, C0P)))
    f = put(f, L["R_BN2"], jnp.tile(raw["bn2"][:, None], (bstep, C1P)))
    f = put(f, L["R_BN3"], jnp.tile(raw["bn3"][:, None], (bstep, C2)))

    w = jnp.zeros((L["W_ROWS"], C3), jnp.bfloat16)
    w = put(w, L["RW_N1"], blkdiag(raw["wn1"]))
    w = put(w, L["RW_N2"], blkdiag(raw["wn2"]))
    w = put(w, L["RW_N3"], blkdiag(raw["wn3"]))
    w = put(w, L["RW_C1"], raw["wc1"].T)                   # (96,192): rows 96..127 & cols 192..255 stay 0
    w = put(w, L["RW_C2"], raw["wc2"].T)                   # (192,384): rows 192..255 stay 0
    w = put(w, L["RW_C3"], raw["wc3"].T)                   # (384,768)
    return {"fslab": f, "wslab": w}


# ------------------------------------------ wrapper --------------------------------------------
def _pick_bstep():
    """Batch elements per grid step: fold the batch on single-TC chips (v5e/v6e), split it
    across the two TensorCores on v7x via a 'parallel' grid."""
    try:
        kind = jax.devices()[0].device_kind.lower()
    except Exception:
        return BATCH
    return 1 if "v7" in kind else BATCH


def build_forward(bstep):
    L = make_layout(bstep)
    kernel = functools.partial(_fused_kernel, L)
    grid = (BATCH // bstep,)

    @jax.jit
    def forward(params, x_image, x_phenotypic):
        # TODO(synk): image branch (Swin-T backbone + cross-modal attention + fc_out_image)
        #             not implemented; x_image is unused (see header).
        del x_image
        fslab, wslab = params["fslab"], params["wslab"]
        out = pl.pallas_call(
            kernel,
            out_shape=jax.ShapeDtypeStruct((grid[0], bstep, NUM_CLASSES), jnp.float32),
            grid=grid,
            in_specs=[
                pl.BlockSpec(memory_space=pltpu.MemorySpace.SMEM),   # x: (B, p) scalars in SMEM
                pl.BlockSpec(fslab.shape, lambda g: (0, 0)),         # f32 slab, resident in VMEM
                pl.BlockSpec(wslab.shape, lambda g: (0, 0)),         # bf16 slab, resident in VMEM
            ],
            out_specs=pl.BlockSpec((1, bstep, NUM_CLASSES), lambda g: (g, 0, 0)),
            compiler_params=pltpu.CompilerParams(
                dimension_semantics=("parallel",)),   # one bstep-slice per TensorCore on v7x
        )(x_phenotypic, fslab, wslab)
        return out.reshape(BATCH, NUM_CLASSES)

    return forward, L


# ---------------------------------- pure-JAX f32 reference -------------------------------------
def reference_forward(raw, x_phenotypic):
    hi = lax.Precision.HIGHEST
    B, p = x_phenotypic.shape
    x = _gelu(jnp.dot(x_phenotypic, raw["w0"].T, precision=hi) + raw["b0"])        # (B, 96p)
    x = x.reshape(B, p, 96).transpose(0, 2, 1)                                     # 'b (n k) -> b k n'
    x = _gelu(jnp.einsum('bcn,mn->bcm', x, raw["wn1"], precision=hi) + raw["bn1"])
    x = _gelu(jnp.einsum('dc,bcn->bdn', raw["wc1"], x, precision=hi) + raw["bc1"][None, :, None])
    x = _gelu(jnp.einsum('bcn,mn->bcm', x, raw["wn2"], precision=hi) + raw["bn2"])
    x = _gelu(jnp.einsum('dc,bcn->bdn', raw["wc2"], x, precision=hi) + raw["bc2"][None, :, None])
    x = _gelu(jnp.einsum('bcn,mn->bcm', x, raw["wn3"], precision=hi) + raw["bn3"])
    x = _gelu(jnp.einsum('dc,bcn->bdn', raw["wc3"], x, precision=hi) + raw["bc3"][None, :, None])
    x = x.transpose(0, 2, 1)                                                       # (B, 8p, 768)
    mu = x.mean(-1, keepdims=True)
    var = ((x - mu) ** 2).mean(-1, keepdims=True)
    x = (x - mu) / jnp.sqrt(var + LN_EPS) * raw["ln_g"] + raw["ln_b"]
    pooled = x.mean(1)                                                             # (B, 768)
    logits = jnp.dot(pooled, raw["wout"].T, precision=hi) + raw["bout"]
    return jax.nn.log_softmax(logits, axis=-1)


if __name__ == "__main__":
    key = jax.random.PRNGKey(0)
    k_img, k_ph, k_par = jax.random.split(key, 3)
    x_image = jax.random.normal(k_img, (BATCH, 3, 32, 32), jnp.float32)       # NCHW, unused (Swin-T TODO)
    x_phenotypic = jax.random.normal(k_ph, (BATCH, PHENO_DIM), jnp.float32)   # (batch, phenotypic_dim)

    raw = init_raw_params(k_par)
    bstep = _pick_bstep()
    forward, layout = build_forward(bstep)
    params = pack_params(raw, layout)     # one-time packing into 2 slabs

    out = jax.block_until_ready(forward(params, x_image, x_phenotypic))

    ref = reference_forward(raw, x_phenotypic)
    assert out.shape == (BATCH, NUM_CLASSES)
    assert bool(jnp.all(jnp.isfinite(out)))
    # output is a log-probability vector: probabilities must sum to 1
    assert bool(jnp.allclose(jnp.sum(jnp.exp(out), axis=-1), 1.0, atol=1e-4))
    # tolerance accounts for bf16 MXU operands (f32 accumulation) vs the f32 reference
    assert bool(jnp.allclose(out, ref, atol=4e-2, rtol=4e-2)), (out, ref)
    print("KERNEL_OK")
</pallas_src>

<mosaic_0001>
module attributes {stable_mosaic.version = 11 : i64} {
  func.func @_fused_kernel(%arg0: i32, %arg1: memref<2x8xf32, #tpu.memory_space<smem>>, %arg2: memref<312x768xf32, #tpu.memory_space<vmem>>, %arg3: memref<992x768xbf16, #tpu.memory_space<vmem>>, %arg4: memref<1x2x4xf32, #tpu.memory_space<vmem>>) attributes {dimension_semantics = [#tpu.dimension_semantics<parallel>], iteration_bounds = array<i64: 1>, scalar_prefetch = 0 : i64, scratch_operands = 0 : i64, tpu.core_type = #tpu.core_type<tc>, window_params = [{transform_indices = @transform_0, window_bounds = array<i64: 2, 8>}, {pipeline_mode = #tpu.pipeline_mode<synchronous>, transform_indices = @transform_1, window_bounds = array<i64: 312, 768>}, {pipeline_mode = #tpu.pipeline_mode<synchronous>, transform_indices = @transform_2, window_bounds = array<i64: 992, 768>}, {transform_indices = @transform_3, window_bounds = array<i64: 1, 2, 4>}]} {
    %c8 = arith.constant 8 : index
    %c0 = arith.constant 0 : index
    %0 = vector.load %arg2[%c8, %c0] : memref<312x768xf32, #tpu.memory_space<vmem>>, vector<8x128xf32>
    %c24 = arith.constant 24 : index
    %c0_0 = arith.constant 0 : index
    %1 = vector.load %arg2[%c24, %c0_0] : memref<312x768xf32, #tpu.memory_space<vmem>>, vector<8x128xf32>
    %c32 = arith.constant 32 : index
    %c0_1 = arith.constant 0 : index
    %2 = vector.load %arg2[%c32, %c0_1] : memref<312x768xf32, #tpu.memory_space<vmem>>, vector<8x128xf32>
    %c40 = arith.constant 40 : index
    %c0_2 = arith.constant 0 : index
    %3 = vector.load %arg2[%c40, %c0_2] : memref<312x768xf32, #tpu.memory_space<vmem>>, vector<8x128xf32>
    %c48 = arith.constant 48 : index
    %c0_3 = arith.constant 0 : index
    %4 = vector.load %arg2[%c48, %c0_3] : memref<312x768xf32, #tpu.memory_space<vmem>>, vector<8x128xf32>
    %c56 = arith.constant 56 : index
    %c0_4 = arith.constant 0 : index
    %5 = vector.load %arg2[%c56, %c0_4] : memref<312x768xf32, #tpu.memory_space<vmem>>, vector<8x128xf32>
    %c64 = arith.constant 64 : index
    %c0_5 = arith.constant 0 : index
    %6 = vector.load %arg2[%c64, %c0_5] : memref<312x768xf32, #tpu.memory_space<vmem>>, vector<8x128xf32>
    %c72 = arith.constant 72 : index
    %c0_6 = arith.constant 0 : index
    %7 = vector.load %arg2[%c72, %c0_6] : memref<312x768xf32, #tpu.memory_space<vmem>>, vector<8x128xf32>
    %c80 = arith.constant 80 : index
    %c0_7 = arith.constant 0 : index
    %8 = vector.load %arg2[%c80, %c0_7] : memref<312x768xf32, #tpu.memory_space<vmem>>, vector<8x128xf32>
    %c2_i32 = arith.constant 2 : i32
    %9 = arith.muli %arg0, %c2_i32 : i32
    %c0_i32 = arith.constant 0 : i32
    %10 = arith.addi %9, %c0_i32 : i32
    %11 = arith.index_cast %10 : i32 to index
    %c0_8 = arith.constant 0 : index
    %12 = memref.load %arg1[%11, %c0_8] : memref<2x8xf32, #tpu.memory_space<smem>>
    %13 = vector.broadcast %12 : f32 to vector<8x128xf32>
    %14 = arith.mulf %13, %1 : vector<8x128xf32>
    %15 = arith.addf %0, %14 : vector<8x128xf32>
    %c2_i32_9 = arith.constant 2 : i32
    %16 = arith.muli %arg0, %c2_i32_9 : i32
    %c0_i32_10 = arith.constant 0 : i32
    %17 = arith.addi %16, %c0_i32_10 : i32
    %18 = arith.index_cast %17 : i32 to index
    %c1 = arith.constant 1 : index
    %19 = memref.load %arg1[%18, %c1] : memref<2x8xf32, #tpu.memory_space<smem>>
    %20 = vector.broadcast %19 : f32 to vector<8x128xf32>
    %21 = arith.mulf %20, %2 : vector<8x128xf32>
    %22 = arith.addf %15, %21 : vector<8x128xf32>
    %c2_i32_11 = arith.constant 2 : i32
    %23 = arith.muli %arg0, %c2_i32_11 : i32
    %c0_i32_12 = arith.constant 0 : i32
    %24 = arith.addi %23, %c0_i32_12 : i32
    %25 = arith.index_cast %24 : i32 to index
    %c2 = arith.constant 2 : index
    %26 = memref.load %arg1[%25, %c2] : memref<2x8xf32, #tpu.memory_space<smem>>
    %27 = vector.broadcast %26 : f32 to vector<8x128xf32>
    %28 = arith.mulf %27, %3 : vector<8x128xf32>
    %29 = arith.addf %22, %28 : vector<8x128xf32>
    %c2_i32_13 = arith.constant 2 : i32
    %30 = arith.muli %arg0, %c2_i32_13 : i32
    %c0_i32_14 = arith.constant 0 : i32
    %31 = arith.addi %30, %c0_i32_14 : i32
    %32 = arith.index_cast %31 : i32 to index
    %c3 = arith.constant 3 : index
    %33 = memref.load %arg1[%32, %c3] : memref<2x8xf32, #tpu.memory_space<smem>>
    %34 = vector.broadcast %33 : f32 to vector<8x128xf32>
    %35 = arith.mulf %34, %4 : vector<8x128xf32>
    %36 = arith.addf %29, %35 : vector<8x128xf32>
    %c2_i32_15 = arith.constant 2 : i32
    %37 = arith.muli %arg0, %c2_i32_15 : i32
    %c0_i32_16 = arith.constant 0 : i32
    %38 = arith.addi %37, %c0_i32_16 : i32
    %39 = arith.index_cast %38 : i32 to index
    %c4 = arith.constant 4 : index
    %40 = memref.load %arg1[%39, %c4] : memref<2x8xf32, #tpu.memory_space<smem>>
    %41 = vector.broadcast %40 : f32 to vector<8x128xf32>
    %42 = arith.mulf %41, %5 : vector<8x128xf32>
    %43 = arith.addf %36, %42 : vector<8x128xf32>
    %c2_i32_17 = arith.constant 2 : i32
    %44 = arith.muli %arg0, %c2_i32_17 : i32
    %c0_i32_18 = arith.constant 0 : i32
    %45 = arith.addi %44, %c0_i32_18 : i32
    %46 = arith.index_cast %45 : i32 to index
    %c5 = arith.constant 5 : index
    %47 = memref.load %arg1[%46, %c5] : memref<2x8xf32, #tpu.memory_space<smem>>
    %48 = vector.broadcast %47 : f32 to vector<8x128xf32>
    %49 = arith.mulf %48, %6 : vector<8x128xf32>
    %50 = arith.addf %43, %49 : vector<8x128xf32>
    %c2_i32_19 = arith.constant 2 : i32
    %51 = arith.muli %arg0, %c2_i32_19 : i32
    %c0_i32_20 = arith.constant 0 : i32
    %52 = arith.addi %51, %c0_i32_20 : i32
    %53 = arith.index_cast %52 : i32 to index
    %c6 = arith.constant 6 : index
    %54 = memref.load %arg1[%53, %c6] : memref<2x8xf32, #tpu.memory_space<smem>>
    %55 = vector.broadcast %54 : f32 to vector<8x128xf32>
    %56 = arith.mulf %55, %7 : vector<8x128xf32>
    %57 = arith.addf %50, %56 : vector<8x128xf32>
    %c2_i32_21 = arith.constant 2 : i32
    %58 = arith.muli %arg0, %c2_i32_21 : i32
    %c0_i32_22 = arith.constant 0 : i32
    %59 = arith.addi %58, %c0_i32_22 : i32
    %60 = arith.index_cast %59 : i32 to index
    %c7 = arith.constant 7 : index
    %61 = memref.load %arg1[%60, %c7] : memref<2x8xf32, #tpu.memory_space<smem>>
    %62 = vector.broadcast %61 : f32 to vector<8x128xf32>
    %63 = arith.mulf %62, %8 : vector<8x128xf32>
    %64 = arith.addf %57, %63 : vector<8x128xf32>
    %c2_i32_23 = arith.constant 2 : i32
    %65 = arith.muli %arg0, %c2_i32_23 : i32
    %c1_i32 = arith.constant 1 : i32
    %66 = arith.addi %65, %c1_i32 : i32
    %67 = arith.index_cast %66 : i32 to index
    %c0_24 = arith.constant 0 : index
    %68 = memref.load %arg1[%67, %c0_24] : memref<2x8xf32, #tpu.memory_space<smem>>
    %69 = vector.broadcast %68 : f32 to vector<8x128xf32>
    %70 = arith.mulf %69, %1 : vector<8x128xf32>
    %71 = arith.addf %0, %70 : vector<8x128xf32>
    %c2_i32_25 = arith.constant 2 : i32
    %72 = arith.muli %arg0, %c2_i32_25 : i32
    %c1_i32_26 = arith.constant 1 : i32
    %73 = arith.addi %72, %c1_i32_26 : i32
    %74 = arith.index_cast %73 : i32 to index
    %c1_27 = arith.constant 1 : index
    %75 = memref.load %arg1[%74, %c1_27] : memref<2x8xf32, #tpu.memory_space<smem>>
    %76 = vector.broadcast %75 : f32 to vector<8x128xf32>
    %77 = arith.mulf %76, %2 : vector<8x128xf32>
    %78 = arith.addf %71, %77 : vector<8x128xf32>
    %c2_i32_28 = arith.constant 2 : i32
    %79 = arith.muli %arg0, %c2_i32_28 : i32
    %c1_i32_29 = arith.constant 1 : i32
    %80 = arith.addi %79, %c1_i32_29 : i32
    %81 = arith.index_cast %80 : i32 to index
    %c2_30 = arith.constant 2 : index
    %82 = memref.load %arg1[%81, %c2_30] : memref<2x8xf32, #tpu.memory_space<smem>>
    %83 = vector.broadcast %82 : f32 to vector<8x128xf32>
    %84 = arith.mulf %83, %3 : vector<8x128xf32>
    %85 = arith.addf %78, %84 : vector<8x128xf32>
    %c2_i32_31 = arith.constant 2 : i32
    %86 = arith.muli %arg0, %c2_i32_31 : i32
    %c1_i32_32 = arith.constant 1 : i32
    %87 = arith.addi %86, %c1_i32_32 : i32
    %88 = arith.index_cast %87 : i32 to index
    %c3_33 = arith.constant 3 : index
    %89 = memref.load %arg1[%88, %c3_33] : memref<2x8xf32, #tpu.memory_space<smem>>
    %90 = vector.broadcast %89 : f32 to vector<8x128xf32>
    %91 = arith.mulf %90, %4 : vector<8x128xf32>
    %92 = arith.addf %85, %91 : vector<8x128xf32>
    %c2_i32_34 = arith.constant 2 : i32
    %93 = arith.muli %arg0, %c2_i32_34 : i32
    %c1_i32_35 = arith.constant 1 : i32
    %94 = arith.addi %93, %c1_i32_35 : i32
    %95 = arith.index_cast %94 : i32 to index
    %c4_36 = arith.constant 4 : index
    %96 = memref.load %arg1[%95, %c4_36] : memref<2x8xf32, #tpu.memory_space<smem>>
    %97 = vector.broadcast %96 : f32 to vector<8x128xf32>
    %98 = arith.mulf %97, %5 : vector<8x128xf32>
    %99 = arith.addf %92, %98 : vector<8x128xf32>
    %c2_i32_37 = arith.constant 2 : i32
    %100 = arith.muli %arg0, %c2_i32_37 : i32
    %c1_i32_38 = arith.constant 1 : i32
    %101 = arith.addi %100, %c1_i32_38 : i32
    %102 = arith.index_cast %101 : i32 to index
    %c5_39 = arith.constant 5 : index
    %103 = memref.load %arg1[%102, %c5_39] : memref<2x8xf32, #tpu.memory_space<smem>>
    %104 = vector.broadcast %103 : f32 to vector<8x128xf32>
    %105 = arith.mulf %104, %6 : vector<8x128xf32>
    %106 = arith.addf %99, %105 : vector<8x128xf32>
    %c2_i32_40 = arith.constant 2 : i32
    %107 = arith.muli %arg0, %c2_i32_40 : i32
    %c1_i32_41 = arith.constant 1 : i32
    %108 = arith.addi %107, %c1_i32_41 : i32
    %109 = arith.index_cast %108 : i32 to index
    %c6_42 = arith.constant 6 : index
    %110 = memref.load %arg1[%109, %c6_42] : memref<2x8xf32, #tpu.memory_space<smem>>
    %111 = vector.broadcast %110 : f32 to vector<8x128xf32>
    %112 = arith.mulf %111, %7 : vector<8x128xf32>
    %113 = arith.addf %106, %112 : vector<8x128xf32>
    %c2_i32_43 = arith.constant 2 : i32
    %114 = arith.muli %arg0, %c2_i32_43 : i32
    %c1_i32_44 = arith.constant 1 : i32
    %115 = arith.addi %114, %c1_i32_44 : i32
    %116 = arith.index_cast %115 : i32 to index
    %c7_45 = arith.constant 7 : index
    %117 = memref.load %arg1[%116, %c7_45] : memref<2x8xf32, #tpu.memory_space<smem>>
    %118 = vector.broadcast %117 : f32 to vector<8x128xf32>
    %119 = arith.mulf %118, %8 : vector<8x128xf32>
    %120 = arith.addf %113, %119 : vector<8x128xf32>
    %121 = tpu.concatenate %64, %120 in 0 : vector<8x128xf32>, vector<8x128xf32> -> vector<16x128xf32>
    %cst = arith.constant 5.000000e-01 : f32
    %122 = vector.broadcast %cst : f32 to vector<16x128xf32>
    %123 = arith.mulf %122, %121 : vector<16x128xf32>
    %124 = arith.mulf %121, %121 : vector<16x128xf32>
    %125 = arith.mulf %124, %121 : vector<16x128xf32>
    %cst_46 = arith.constant 4.471500e-02 : f32
    %126 = vector.broadcast %cst_46 : f32 to vector<16x128xf32>
    %127 = arith.mulf %126, %125 : vector<16x128xf32>
    %128 = arith.addf %121, %127 : vector<16x128xf32>
    %cst_47 = arith.constant 0.797884583 : f32
    %129 = vector.broadcast %cst_47 : f32 to vector<16x128xf32>
    %130 = arith.mulf %129, %128 : vector<16x128xf32>
    %131 = math.tanh %130 : vector<16x128xf32>
    %cst_48 = arith.constant 1.000000e+00 : f32
    %132 = vector.broadcast %cst_48 : f32 to vector<16x128xf32>
    %133 = arith.addf %132, %131 : vector<16x128xf32>
    %134 = arith.mulf %123, %133 : vector<16x128xf32>
    %c0_49 = arith.constant 0 : index
    %c0_50 = arith.constant 0 : index
    %135 = vector.load %arg3[%c0_49, %c0_50] : memref<992x768xbf16, #tpu.memory_space<vmem>>, vector<32x16xbf16>
    %c88 = arith.constant 88 : index
    %c0_51 = arith.constant 0 : index
    %136 = vector.load %arg2[%c88, %c0_51] : memref<312x768xf32, #tpu.memory_space<vmem>>, vector<32x128xf32>
    %137 = arith.truncf %134 : vector<16x128xf32> to vector<16x128xbf16>
    %cst_52 = arith.constant dense<0.000000e+00> : vector<32x128xf32>
    %138 = tpu.matmul %135, %137, %cst_52 {dimension_numbers = #tpu.dot_dimension_numbers<[1], [0], [0], [1], [0, 0, 1, 1], [], []>} : vector<32x16xbf16>, vector<16x128xbf16>, vector<32x128xf32> -> vector<32x128xf32>
    %139 = arith.addf %138, %136 : vector<32x128xf32>
    %cst_53 = arith.constant 5.000000e-01 : f32
    %140 = vector.broadcast %cst_53 : f32 to vector<32x128xf32>
    %141 = arith.mulf %140, %139 : vector<32x128xf32>
    %142 = arith.mulf %139, %139 : vector<32x128xf32>
    %143 = arith.mulf %142, %139 : vector<32x128xf32>
    %cst_54 = arith.constant 4.471500e-02 : f32
    %144 = vector.broadcast %cst_54 : f32 to vector<32x128xf32>
    %145 = arith.mulf %144, %143 : vector<32x128xf32>
    %146 = arith.addf %139, %145 : vector<32x128xf32>
    %cst_55 = arith.constant 0.797884583 : f32
    %147 = vector.broadcast %cst_55 : f32 to vector<32x128xf32>
    %148 = arith.mulf %147, %146 : vector<32x128xf32>
    %149 = math.tanh %148 : vector<32x128xf32>
    %cst_56 = arith.constant 1.000000e+00 : f32
    %150 = vector.broadcast %cst_56 : f32 to vector<32x128xf32>
    %151 = arith.addf %150, %149 : vector<32x128xf32>
    %152 = arith.mulf %141, %151 : vector<32x128xf32>
    %c224 = arith.constant 224 : index
    %c0_57 = arith.constant 0 : index
    %153 = vector.load %arg3[%c224, %c0_57] : memref<992x768xbf16, #tpu.memory_space<vmem>>, vector<128x256xbf16>
    %c4_58 = arith.constant 4 : index
    %c0_59 = arith.constant 0 : index
    %154 = vector.load %arg2[%c4_58, %c0_59] : memref<312x768xf32, #tpu.memory_space<vmem>>, vector<1x256xf32>
    %155 = arith.truncf %152 : vector<32x128xf32> to vector<32x128xbf16>
    %cst_60 = arith.constant dense<0.000000e+00> : vector<32x256xf32>
    %156 = tpu.matmul %155, %153, %cst_60 {dimension_numbers = #tpu.dot_dimension_numbers<[1], [0], [0], [1], [0, 0, 1, 1], [], []>} : vector<32x128xbf16>, vector<128x256xbf16>, vector<32x256xf32> -> vector<32x256xf32>
    %157 = vector.broadcast %154 : vector<1x256xf32> to vector<32x256xf32>
    %158 = arith.addf %156, %157 : vector<32x256xf32>
    %cst_61 = arith.constant 5.000000e-01 : f32
    %159 = vector.broadcast %cst_61 : f32 to vector<32x256xf32>
    %160 = arith.mulf %159, %158 : vector<32x256xf32>
    %161 = arith.mulf %158, %158 : vector<32x256xf32>
    %162 = arith.mulf %161, %158 : vector<32x256xf32>
    %cst_62 = arith.constant 4.471500e-02 : f32
    %163 = vector.broadcast %cst_62 : f32 to vector<32x256xf32>
    %164 = arith.mulf %163, %162 : vector<32x256xf32>
    %165 = arith.addf %158, %164 : vector<32x256xf32>
    %cst_63 = arith.constant 0.797884583 : f32
    %166 = vector.broadcast %cst_63 : f32 to vector<32x256xf32>
    %167 = arith.mulf %166, %165 : vector<32x256xf32>
    %168 = math.tanh %167 : vector<32x256xf32>
    %cst_64 = arith.constant 1.000000e+00 : f32
    %169 = vector.broadcast %cst_64 : f32 to vector<32x256xf32>
    %170 = arith.addf %169, %168 : vector<32x256xf32>
    %171 = arith.mulf %160, %170 : vector<32x256xf32>
    %c32_65 = arith.constant 32 : index
    %c0_66 = arith.constant 0 : index
    %172 = vector.load %arg3[%c32_65, %c0_66] : memref<992x768xbf16, #tpu.memory_space<vmem>>, vector<64x32xbf16>
    %c120 = arith.constant 120 : index
    %c0_67 = arith.constant 0 : index
    %173 = vector.load %arg2[%c120, %c0_67] : memref<312x768xf32, #tpu.memory_space<vmem>>, vector<64x256xf32>
    %174 = arith.truncf %171 : vector<32x256xf32> to vector<32x256xbf16>
    %cst_68 = arith.constant dense<0.000000e+00> : vector<64x256xf32>
    %175 = tpu.matmul %172, %174, %cst_68 {dimension_numbers = #tpu.dot_dimension_numbers<[1], [0], [0], [1], [0, 0, 1, 1], [], []>} : vector<64x32xbf16>, vector<32x256xbf16>, vector<64x256xf32> -> vector<64x256xf32>
    %176 = arith.addf %175, %173 : vector<64x256xf32>
    %cst_69 = arith.constant 5.000000e-01 : f32
    %177 = vector.broadcast %cst_69 : f32 to vector<64x256xf32>
    %178 = arith.mulf %177, %176 : vector<64x256xf32>
    %179 = arith.mulf %176, %176 : vector<64x256xf32>
    %180 = arith.mulf %179, %176 : vector<64x256xf32>
    %cst_70 = arith.constant 4.471500e-02 : f32
    %181 = vector.broadcast %cst_70 : f32 to vector<64x256xf32>
    %182 = arith.mulf %181, %180 : vector<64x256xf32>
    %183 = arith.addf %176, %182 : vector<64x256xf32>
    %cst_71 = arith.constant 0.797884583 : f32
    %184 = vector.broadcast %cst_71 : f32 to vector<64x256xf32>
    %185 = arith.mulf %184, %183 : vector<64x256xf32>
    %186 = math.tanh %185 : vector<64x256xf32>
    %cst_72 = arith.constant 1.000000e+00 : f32
    %187 = vector.broadcast %cst_72 : f32 to vector<64x256xf32>
    %188 = arith.addf %187, %186 : vector<64x256xf32>
    %189 = arith.mulf %178, %188 : vector<64x256xf32>
    %c352 = arith.constant 352 : index
    %c0_73 = arith.constant 0 : index
    %190 = vector.load %arg3[%c352, %c0_73] : memref<992x768xbf16, #tpu.memory_space<vmem>>, vector<256x384xbf16>
    %c3_74 = arith.constant 3 : index
    %c0_75 = arith.constant 0 : index
    %191 = vector.load %arg2[%c3_74, %c0_75] : memref<312x768xf32, #tpu.memory_space<vmem>>, vector<1x384xf32>
    %192 = arith.truncf %189 : vector<64x256xf32> to vector<64x256xbf16>
    %cst_76 = arith.constant dense<0.000000e+00> : vector<64x384xf32>
    %193 = tpu.matmul %192, %190, %cst_76 {dimension_numbers = #tpu.dot_dimension_numbers<[1], [0], [0], [1], [0, 0, 1, 1], [], []>} : vector<64x256xbf16>, vector<256x384xbf16>, vector<64x384xf32> -> vector<64x384xf32>
    %194 = vector.broadcast %191 : vector<1x384xf32> to vector<64x384xf32>
    %195 = arith.addf %193, %194 : vector<64x384xf32>
    %cst_77 = arith.constant 5.000000e-01 : f32
    %196 = vector.broadcast %cst_77 : f32 to vector<64x384xf32>
    %197 = arith.mulf %196, %195 : vector<64x384xf32>
    %198 = arith.mulf %195, %195 : vector<64x384xf32>
    %199 = arith.mulf %198, %195 : vector<64x384xf32>
    %cst_78 = arith.constant 4.471500e-02 : f32
    %200 = vector.broadcast %cst_78 : f32 to vector<64x384xf32>
    %201 = arith.mulf %200, %199 : vector<64x384xf32>
    %202 = arith.addf %195, %201 : vector<64x384xf32>
    %cst_79 = arith.constant 0.797884583 : f32
    %203 = vector.broadcast %cst_79 : f32 to vector<64x384xf32>
    %204 = arith.mulf %203, %202 : vector<64x384xf32>
    %205 = math.tanh %204 : vector<64x384xf32>
    %cst_80 = arith.constant 1.000000e+00 : f32
    %206 = vector.broadcast %cst_80 : f32 to vector<64x384xf32>
    %207 = arith.addf %206, %205 : vector<64x384xf32>
    %208 = arith.mulf %197, %207 : vector<64x384xf32>
    %c96 = arith.constant 96 : index
    %c0_81 = arith.constant 0 : index
    %209 = vector.load %arg3[%c96, %c0_81] : memref<992x768xbf16, #tpu.memory_space<vmem>>, vector<128x64xbf16>
    %c184 = arith.constant 184 : index
    %c0_82 = arith.constant 0 : index
    %210 = vector.load %arg2[%c184, %c0_82] : memref<312x768xf32, #tpu.memory_space<vmem>>, vector<128x384xf32>
    %211 = arith.truncf %208 : vector<64x384xf32> to vector<64x384xbf16>
    %cst_83 = arith.constant dense<0.000000e+00> : vector<128x384xf32>
    %212 = tpu.matmul %209, %211, %cst_83 {dimension_numbers = #tpu.dot_dimension_numbers<[1], [0], [0], [1], [0, 0, 1, 1], [], []>} : vector<128x64xbf16>, vector<64x384xbf16>, vector<128x384xf32> -> vector<128x384xf32>
    %213 = arith.addf %212, %210 : vector<128x384xf32>
    %cst_84 = arith.constant 5.000000e-01 : f32
    %214 = vector.broadcast %cst_84 : f32 to vector<128x384xf32>
    %215 = arith.mulf %214, %213 : vector<128x384xf32>
    %216 = arith.mulf %213, %213 : vector<128x384xf32>
    %217 = arith.mulf %216, %213 : vector<128x384xf32>
    %cst_85 = arith.constant 4.471500e-02 : f32
    %218 = vector.broadcast %cst_85 : f32 to vector<128x384xf32>
    %219 = arith.mulf %218, %217 : vector<128x384xf32>
    %220 = arith.addf %213, %219 : vector<128x384xf32>
    %cst_86 = arith.constant 0.797884583 : f32
    %221 = vector.broadcast %cst_86 : f32 to vector<128x384xf32>
    %222 = arith.mulf %221, %220 : vector<128x384xf32>
    %223 = math.tanh %222 : vector<128x384xf32>
    %cst_87 = arith.constant 1.000000e+00 : f32
    %224 = vector.broadcast %cst_87 : f32 to vector<128x384xf32>
    %225 = arith.addf %224, %223 : vector<128x384xf32>
    %226 = arith.mulf %215, %225 : vector<128x384xf32>
    %c608 = arith.constant 608 : index
    %c0_88 = arith.constant 0 : index
    %227 = vector.load %arg3[%c608, %c0_88] : memref<992x768xbf16, #tpu.memory_space<vmem>>, vector<384x768xbf16>
    %c2_89 = arith.constant 2 : index
    %c0_90 = arith.constant 0 : index
    %228 = vector.load %arg2[%c2_89, %c0_90] : memref<312x768xf32, #tpu.memory_space<vmem>>, vector<1x768xf32>
    %229 = arith.truncf %226 : vector<128x384xf32> to vector<128x384xbf16>
    %cst_91 = arith.constant dense<0.000000e+00> : vector<128x768xf32>
    %230 = tpu.matmul %229, %227, %cst_91 {dimension_numbers = #tpu.dot_dimension_numbers<[1], [0], [0], [1], [0, 0, 1, 1], [], []>} : vector<128x384xbf16>, vector<384x768xbf16>, vector<128x768xf32> -> vector<128x768xf32>
    %231 = vector.broadcast %228 : vector<1x768xf32> to vector<128x768xf32>
    %232 = arith.addf %230, %231 : vector<128x768xf32>
    %cst_92 = arith.constant 5.000000e-01 : f32
    %233 = vector.broadcast %cst_92 : f32 to vector<128x768xf32>
    %234 = arith.mulf %233, %232 : vector<128x768xf32>
    %235 = arith.mulf %232, %232 : vector<128x768xf32>
    %236 = arith.mulf %235, %232 : vector<128x768xf32>
    %cst_93 = arith.constant 4.471500e-02 : f32
    %237 = vector.broadcast %cst_93 : f32 to vector<128x768xf32>
    %238 = arith.mulf %237, %236 : vector<128x768xf32>
    %239 = arith.addf %232, %238 : vector<128x768xf32>
    %cst_94 = arith.constant 0.797884583 : f32
    %240 = vector.broadcast %cst_94 : f32 to vector<128x768xf32>
    %241 = arith.mulf %240, %239 : vector<128x768xf32>
    %242 = math.tanh %241 : vector<128x768xf32>
    %cst_95 = arith.constant 1.000000e+00 : f32
    %243 = vector.broadcast %cst_95 : f32 to vector<128x768xf32>
    %244 = arith.addf %243, %242 : vector<128x768xf32>
    %245 = arith.mulf %234, %244 : vector<128x768xf32>
    %c0_96 = arith.constant 0 : index
    %c0_97 = arith.constant 0 : index
    %246 = vector.load %arg2[%c0_96, %c0_97] : memref<312x768xf32, #tpu.memory_space<vmem>>, vector<1x768xf32>
    %c1_98 = arith.constant 1 : index
    %c0_99 = arith.constant 0 : index
    %247 = vector.load %arg2[%c1_98, %c0_99] : memref<312x768xf32, #tpu.memory_space<vmem>>, vector<1x768xf32>
    %cst_100 = arith.constant dense<0.000000e+00> : vector<128xf32>
    %248 = vector.multi_reduction <add>, %245, %cst_100 [1] : vector<128x768xf32> to vector<128xf32>
    %249 = vector.shape_cast %248 : vector<128xf32> to vector<128x1xf32>
    %cst_101 = arith.constant 7.680000e+02 : f32
    %250 = vector.broadcast %cst_101 : f32 to vector<128x1xf32>
    %251 = arith.divf %249, %250 : vector<128x1xf32>
    %252 = vector.broadcast %251 : vector<128x1xf32> to vector<128x768xf32>
    %253 = arith.subf %245, %252 : vector<128x768xf32>
    %254 = arith.mulf %253, %253 : vector<128x768xf32>
    %cst_102 = arith.constant dense<0.000000e+00> : vector<128xf32>
    %255 = vector.multi_reduction <add>, %254, %cst_102 [1] : vector<128x768xf32> to vector<128xf32>
    %256 = vector.shape_cast %255 : vector<128xf32> to vector<128x1xf32>
    %cst_103 = arith.constant 7.680000e+02 : f32
    %257 = vector.broadcast %cst_103 : f32 to vector<128x1xf32>
    %258 = arith.divf %256, %257 : vector<128x1xf32>
    %259 = vector.broadcast %251 : vector<128x1xf32> to vector<128x768xf32>
    %260 = arith.subf %245, %259 : vector<128x768xf32>
    %cst_104 = arith.constant 9.99999974E-6 : f32
    %261 = vector.broadcast %cst_104 : f32 to vector<128x1xf32>
    %262 = arith.addf %258, %261 : vector<128x1xf32>
    %263 = math.rsqrt %262 : vector<128x1xf32>
    %264 = vector.broadcast %263 : vector<128x1xf32> to vector<128x768xf32>
    %265 = arith.mulf %260, %264 : vector<128x768xf32>
    %266 = vector.broadcast %246 : vector<1x768xf32> to vector<128x768xf32>
    %267 = arith.mulf %265, %266 : vector<128x768xf32>
    %268 = vector.broadcast %247 : vector<1x768xf32> to vector<128x768xf32>
    %269 = arith.addf %267, %268 : vector<128x768xf32>
    %270 = vector.extract_strided_slice %269 {offsets = [0, 0], sizes = [64, 768], strides = [1, 1]} : vector<128x768xf32> to vector<64x768xf32>
    %cst_105 = arith.constant dense<0.000000e+00> : vector<768xf32>
    %271 = vector.multi_reduction <add>, %270, %cst_105 [0] : vector<64x768xf32> to vector<768xf32>
    %272 = vector.shape_cast %271 : vector<768xf32> to vector<1x768xf32>
    %cst_106 = arith.constant 6.400000e+01 : f32
    %273 = vector.broadcast %cst_106 : f32 to vector<1x768xf32>
    %274 = arith.divf %272, %273 : vector<1x768xf32>
    %275 = vector.extract_strided_slice %269 {offsets = [64, 0], sizes = [64, 768], strides = [1, 1]} : vector<128x768xf32> to vector<64x768xf32>
    %cst_107 = arith.constant dense<0.000000e+00> : vector<768xf32>
    %276 = vector.multi_reduction <add>, %275, %cst_107 [0] : vector<64x768xf32> to vector<768xf32>
    %277 = vector.shape_cast %276 : vector<768xf32> to vector<1x768xf32>
    %cst_108 = arith.constant 6.400000e+01 : f32
    %278 = vector.broadcast %cst_108 : f32 to vector<1x768xf32>
    %279 = arith.divf %277, %278 : vector<1x768xf32>
    %280 = tpu.concatenate %274, %279 in 0 : vector<1x768xf32>, vector<1x768xf32> -> vector<2x768xf32>
    %c16 = arith.constant 16 : index
    %c0_109 = arith.constant 0 : index
    %281 = vector.load %arg2[%c16, %c0_109] : memref<312x768xf32, #tpu.memory_space<vmem>>, vector<4x768xf32>
    %c5_110 = arith.constant 5 : index
    %c0_111 = arith.constant 0 : index
    %282 = vector.load %arg2[%c5_110, %c0_111] : memref<312x768xf32, #tpu.memory_space<vmem>>, vector<1x768xf32>
    %283 = vector.extract_strided_slice %282 {offsets = [0, 0], sizes = [1, 4], strides = [1, 1]} : vector<1x768xf32> to vector<1x4xf32>
    %284 = vector.extract_strided_slice %281 {offsets = [0, 0], sizes = [1, 768], strides = [1, 1]} : vector<4x768xf32> to vector<1x768xf32>
    %285 = vector.broadcast %284 : vector<1x768xf32> to vector<2x768xf32>
    %286 = arith.mulf %280, %285 : vector<2x768xf32>
    %cst_112 = arith.constant dense<0.000000e+00> : vector<2xf32>
    %287 = vector.multi_reduction <add>, %286, %cst_112 [1] : vector<2x768xf32> to vector<2xf32>
    %288 = vector.shape_cast %287 : vector<2xf32> to vector<2x1xf32>
    %289 = vector.extract_strided_slice %281 {offsets = [1, 0], sizes = [1, 768], strides = [1, 1]} : vector<4x768xf32> to vector<1x768xf32>
    %290 = vector.broadcast %289 : vector<1x768xf32> to vector<2x768xf32>
    %291 = arith.mulf %280, %290 : vector<2x768xf32>
    %cst_113 = arith.constant dense<0.000000e+00> : vector<2xf32>
    %292 = vector.multi_reduction <add>, %291, %cst_113 [1] : vector<2x768xf32> to vector<2xf32>
    %293 = vector.shape_cast %292 : vector<2xf32> to vector<2x1xf32>
    %294 = vector.extract_strided_slice %281 {offsets = [2, 0], sizes = [1, 768], strides = [1, 1]} : vector<4x768xf32> to vector<1x768xf32>
    %295 = vector.broadcast %294 : vector<1x768xf32> to vector<2x768xf32>
    %296 = arith.mulf %280, %295 : vector<2x768xf32>
    %cst_114 = arith.constant dense<0.000000e+00> : vector<2xf32>
    %297 = vector.multi_reduction <add>, %296, %cst_114 [1] : vector<2x768xf32> to vector<2xf32>
    %298 = vector.shape_cast %297 : vector<2xf32> to vector<2x1xf32>
    %299 = vector.extract_strided_slice %281 {offsets = [3, 0], sizes = [1, 768], strides = [1, 1]} : vector<4x768xf32> to vector<1x768xf32>
    %300 = vector.broadcast %299 : vector<1x768xf32> to vector<2x768xf32>
    %301 = arith.mulf %280, %300 : vector<2x768xf32>
    %cst_115 = arith.constant dense<0.000000e+00> : vector<2xf32>
    %302 = vector.multi_reduction <add>, %301, %cst_115 [1] : vector<2x768xf32> to vector<2xf32>
    %303 = vector.shape_cast %302 : vector<2xf32> to vector<2x1xf32>
    %304 = tpu.concatenate %288, %293, %298, %303 in 1 : vector<2x1xf32>, vector<2x1xf32>, vector<2x1xf32>, vector<2x1xf32> -> vector<2x4xf32>
    %305 = vector.broadcast %283 : vector<1x4xf32> to vector<2x4xf32>
    %306 = arith.addf %304, %305 : vector<2x4xf32>
    %cst_116 = arith.constant dense<0xFF800000> : vector<2xf32>
    %307 = vector.multi_reduction <maximumf>, %306, %cst_116 [1] : vector<2x4xf32> to vector<2xf32>
    %308 = vector.shape_cast %307 : vector<2xf32> to vector<2x1xf32>
    %309 = vector.broadcast %308 : vector<2x1xf32> to vector<2x4xf32>
    %310 = arith.subf %306, %309 : vector<2x4xf32>
    %311 = math.exp %310 : vector<2x4xf32>
    %cst_117 = arith.constant dense<0.000000e+00> : vector<2xf32>
    %312 = vector.multi_reduction <add>, %311, %cst_117 [1] : vector<2x4xf32> to vector<2xf32>
    %313 = vector.shape_cast %312 : vector<2xf32> to vector<2x1xf32>
    %314 = math.log %313 : vector<2x1xf32>
    %315 = vector.broadcast %308 : vector<2x1xf32> to vector<2x4xf32>
    %316 = arith.subf %306, %315 : vector<2x4xf32>
    %317 = vector.broadcast %314 : vector<2x1xf32> to vector<2x4xf32>
    %318 = arith.subf %316, %317 : vector<2x4xf32>
    %c0_118 = arith.constant 0 : index
    %c0_119 = arith.constant 0 : index
    %c0_120 = arith.constant 0 : index
    %319 = vector.load %arg4[%c0_118, %c0_119, %c0_120] : memref<1x2x4xf32, #tpu.memory_space<vmem>>, vector<1x2x4xf32>
    %320 = vector.shape_cast %319 : vector<1x2x4xf32> to vector<2x4xf32>
    %321 = vector.shape_cast %318 : vector<2x4xf32> to vector<1x2x4xf32>
    tpu.vector_store %arg4[%c0_118, %c0_119, %c0_120], %321 {strides = array<i32>} : memref<1x2x4xf32, #tpu.memory_space<vmem>>, vector<1x2x4xf32>,
    return
  }
  func.func @transform_0(%arg0: i32) -> (i32, i32) {
    %c0_i32 = arith.constant 0 : i32
    %c0_i32_0 = arith.constant 0 : i32
    %c0_i32_1 = arith.constant 0 : i32
    return %c0_i32, %c0_i32_0 : i32, i32
  }
  func.func @transform_1(%arg0: i32) -> (i32, i32) {
    %c0_i32 = arith.constant 0 : i32
    %c0_i32_0 = arith.constant 0 : i32
    %c0_i32_1 = arith.constant 0 : i32
    return %c0_i32, %c0_i32_0 : i32, i32
  }
  func.func @transform_2(%arg0: i32) -> (i32, i32) {
    %c0_i32 = arith.constant 0 : i32
    %c0_i32_0 = arith.constant 0 : i32
    %c0_i32_1 = arith.constant 0 : i32
    return %c0_i32, %c0_i32_0 : i32, i32
  }
  func.func @transform_3(%arg0: i32) -> (i32, i32, i32) {
    %c0_i32 = arith.constant 0 : i32
    %c0_i32_0 = arith.constant 0 : i32
    %c0_i32_1 = arith.constant 0 : i32
    return %arg0, %c0_i32, %c0_i32_0 : i32, i32, i32
  }
}

</mosaic_0001>

<llo_original>
// kernel: forward.1
$region0: #{forward.1}
  #allocation0 [shape = 'u32[]', space=smem, size = 0x4, offset = 0x4, fixed_abs, tag = 'smem constant byte address 0x4 - core index']
  #allocation1 [shape = 'u32[144,128]{1,0:T(1,128)}', space=vmem, size = 0x12000, scoped, tag = 'internal scratch']
  %s0 = inlined_call_operand.hbm [shape: f32[2,8], index: 0, kind: input, shape index: {}]
  %s1 = inlined_call_operand.hbm [shape: f32[312,768], index: 1, kind: input, shape index: {}]
  %s2 = inlined_call_operand.hbm [shape: bf16[992,768], index: 2, kind: input, shape index: {}]
  %s3 = inlined_call_operand.hbm [shape: f32[1,2,4], index: 3, kind: output, shape index: {}]
  %s4 = sld [smem:[#allocation0]]
  $region34: #{forward.1} parent=0
    _
  %s6 = ssub.s32 1, %s4
  %s7 = scalar_select 0, %s6, %s4
  $region1: #{forward.1} parent=0
    #allocation2 [shape = 'u8[1024]{0}', space=smem, size = 0x400, scoped, tag = 'input window, operand 0, single buffered']
    #allocation3 [shape = 's32[1]{0}', space=sflag, size = 0x4, scoped, tag = 'scoped memory for forward.1']
    #allocation4 [shape = 's32[1]{0}', space=sflag, size = 0x4, scoped, tag = 'scoped memory for forward.1']
    #allocation5 [shape = 's32[1]{0}', space=sflag, size = 0x4, scoped, tag = 'scoped memory for forward.1']
    #allocation6 [shape = 'u8[958464]{0}', space=vmem, size = 0xea000, scoped, tag = 'input window, operand 1, single buffered']
    #allocation7 [shape = 'u8[1523712]{0}', space=vmem, size = 0x174000, scoped, tag = 'input window, operand 2, single buffered']
    #allocation8 [shape = 's32[1]{0}', space=sflag, size = 0x4, scoped, tag = 'scoped memory for forward.1']
    #allocation9 [shape = 'u8[1024]{0}', space=vmem, size = 0x400, scoped, tag = 'output window, operand 0, single buffered']
    %8 = vsyncpa [#allocation5], 0
    %9 = vsyncpa [#allocation3], 0
    %10 = vsyncpa [#allocation8], 0
    %11 = vsyncpa [#allocation4], 0
    // Predicated region
    $region2: #{forward.1} parent=1 // pred_check
      _
    $region3: #{forward.1} parent=1 // pred_check_branch
      %13 = sbr.rel (0) target = $region5
    $region4: #{forward.1} parent=1 // pred_region
      %s15 = ssub.s32 32, 32
      %16 = vsyncadd [#allocation5], %s15
      %19 = dma.hbm_to_smem %s0, 32, [#allocation2], [#allocation5]
    $region5: #{forward.1} parent=1 // pred_fallthru
      _
    // Predicated region
    $region6: #{forward.1} parent=1 // pred_check
      _
    $region7: #{forward.1} parent=1 // pred_check_branch
      %21 = sbr.rel (0) target = $region9
    $region8: #{forward.1} parent=1 // pred_region
      %s23 = ssub.s32 29952, 29952
      %24 = vsyncadd [#allocation3], %s23
      %s25 = sshll.u32 [#allocation6], 4
      %s26 = int_to_ptr.vmem [resolvable:$true] %s25
      %31 = dma.hbm_to_vmem [thread:$0]  %s1, 29952, %s26, [#allocation3], 768, 768, 48
    $region9: #{forward.1} parent=1 // pred_fallthru
      _
    // Predicated region
    $region10: #{forward.1} parent=1 // pred_check
      _
    $region11: #{forward.1} parent=1 // pred_check_branch
      %33 = sbr.rel (0) target = $region13
    $region12: #{forward.1} parent=1 // pred_region
      %s35 = ssub.s32 47616, 47616
      %36 = vsyncadd [#allocation8], %s35
      %s37 = sshll.u32 [#allocation7], 4
      %s38 = int_to_ptr.vmem [resolvable:$true] %s37
      %43 = dma.hbm_to_vmem [thread:$0]  %s2, 47616, %s38, [#allocation8], 384, 384, 24
    $region13: #{forward.1} parent=1 // pred_fallthru
      _
    // Predicated region
    $region14: #{forward.1} parent=1 // pred_check
      _
    $region15: #{forward.1} parent=1 // pred_check_branch
      %45 = sbr.rel (0) target = $region17
    $region16: #{forward.1} parent=1 // pred_region
      %46 = dma.done [#allocation5], 32
    $region17: #{forward.1} parent=1 // pred_fallthru
      _
    // Predicated region
    $region18: #{forward.1} parent=1 // pred_check
      _
    $region19: #{forward.1} parent=1 // pred_check_branch
      %48 = sbr.rel (0) target = $region21
    $region20: #{forward.1} parent=1 // pred_region
      %49 = dma.done [#allocation3], 29952
    $region21: #{forward.1} parent=1 // pred_fallthru
      _
    // Predicated region
    $region22: #{forward.1} parent=1 // pred_check
      _
    $region23: #{forward.1} parent=1 // pred_check_branch
      %51 = sbr.rel (0) target = $region25
    $region24: #{forward.1} parent=1 // pred_region
      %52 = dma.done [#allocation8], 47616
    $region25: #{forward.1} parent=1 // pred_fallthru
      _
    %53 = sfence
    %v55 = vld [vmem:[#allocation6 + $0x30] sm:$0xff]
    %v56 = vld [vmem:[#allocation6 + $0x90] sm:$0xff]
    %v57 = vld [vmem:[#allocation6 + $0xc0] sm:$0xff]
    %v58 = vld [vmem:[#allocation6 + $0xf0] sm:$0xff]
    %v59 = vld [vmem:[#allocation6 + $0x120] sm:$0xff]
    %v60 = vld [vmem:[#allocation6 + $0x150] sm:$0xff]
    %v61 = vld [vmem:[#allocation6 + $0x180] sm:$0xff]
    %v62 = vld [vmem:[#allocation6 + $0x1b0] sm:$0xff]
    %v63 = vld [vmem:[#allocation6 + $0x1e0] sm:$0xff]
    %s64 = smul.u32 0, 2
    %s65 = smul.u32 %s64, 128
    %s66 = sld [smem:[#allocation2 + %s65]]
    %v67 = vstv %s66
    %v68 = vmul.f32 %v67, %v56
    %v69 = vadd.f32 %v55, %v68
    %s70 = sadd.s32 %s65, 1
    %s71 = sld [smem:[#allocation2 + %s70]]
    %v72 = vstv %s71
    %v73 = vmul.f32 %v72, %v57
    %v74 = vadd.f32 %v69, %v73
    %s75 = sadd.s32 %s65, 2
    %s76 = sld [smem:[#allocation2 + %s75]]
    %v77 = vstv %s76
    %v78 = vmul.f32 %v77, %v58
    %v79 = vadd.f32 %v74, %v78
    %s80 = sadd.s32 %s65, 3
    %s81 = sld [smem:[#allocation2 + %s80]]
    %v82 = vstv %s81
    %v83 = vmul.f32 %v82, %v59
    %v84 = vadd.f32 %v79, %v83
    %s85 = sadd.s32 %s65, 4
    %s86 = sld [smem:[#allocation2 + %s85]]
    %v87 = vstv %s86
    %v88 = vmul.f32 %v87, %v60
    %v89 = vadd.f32 %v84, %v88
    %s90 = sadd.s32 %s65, 5
    %s91 = sld [smem:[#allocation2 + %s90]]
    %v92 = vstv %s91
    %v93 = vmul.f32 %v92, %v61
    %v94 = vadd.f32 %v89, %v93
    %s95 = sadd.s32 %s65, 6
    %s96 = sld [smem:[#allocation2 + %s95]]
    %v97 = vstv %s96
    %v98 = vmul.f32 %v97, %v62
    %v99 = vadd.f32 %v94, %v98
    %s100 = sadd.s32 %s65, 7
    %s101 = sld [smem:[#allocation2 + %s100]]
    %v102 = vstv %s101
    %v103 = vmul.f32 %v102, %v63
    %v104 = vadd.f32 %v99, %v103
    %s105 = sadd.s32 %s64, 1
    %s106 = smul.u32 %s105, 128
    %s107 = sld [smem:[#allocation2 + %s106]]
    %v108 = vstv %s107
    %v109 = vmul.f32 %v108, %v56
    %v110 = vadd.f32 %v55, %v109
    %s111 = sadd.s32 %s106, 1
    %s112 = sld [smem:[#allocation2 + %s111]]
    %v113 = vstv %s112
    %v114 = vmul.f32 %v113, %v57
    %v115 = vadd.f32 %v110, %v114
    %s116 = sadd.s32 %s106, 2
    %s117 = sld [smem:[#allocation2 + %s116]]
    %v118 = vstv %s117
    %v119 = vmul.f32 %v118, %v58
    %v120 = vadd.f32 %v115, %v119
    %s121 = sadd.s32 %s106, 3
    %s122 = sld [smem:[#allocation2 + %s121]]
    %v123 = vstv %s122
    %v124 = vmul.f32 %v123, %v59
    %v125 = vadd.f32 %v120, %v124
    %s126 = sadd.s32 %s106, 4
    %s127 = sld [smem:[#allocation2 + %s126]]
    %v128 = vstv %s127
    %v129 = vmul.f32 %v128, %v60
    %v130 = vadd.f32 %v125, %v129
    %s131 = sadd.s32 %s106, 5
    %s132 = sld [smem:[#allocation2 + %s131]]
    %v133 = vstv %s132
    %v134 = vmul.f32 %v133, %v61
    %v135 = vadd.f32 %v130, %v134
    %s136 = sadd.s32 %s106, 6
    %s137 = sld [smem:[#allocation2 + %s136]]
    %v138 = vstv %s137
    %v139 = vmul.f32 %v138, %v62
    %v140 = vadd.f32 %v135, %v139
    %s141 = sadd.s32 %s106, 7
    %s142 = sld [smem:[#allocation2 + %s141]]
    %v143 = vstv %s142
    %v144 = vmul.f32 %v143, %v63
    %v145 = vadd.f32 %v140, %v144
    %v146 = vmul.f32 %v104, 0.5
    %v147 = vmul.f32 %v145, 0.5
    %v148 = vmul.f32 %v104, %v104
    %v149 = vmul.f32 %v145, %v145
    %v150 = vmul.f32 %v148, %v104
    %v151 = vmul.f32 %v149, %v145
    %v152 = vmul.f32 %v150, 0.044715
    %v153 = vmul.f32 %v151, 0.044715
    %v154 = vadd.f32 %v104, %v152
    %v155 = vadd.f32 %v145, %v153
    %v156 = vmul.f32 %v154, 0.7978846
    %v157 = vmul.f32 %v155, 0.7978846
    %v158 = vtanh.pop %v156
    %v159 = vtanh.pop %v157
    %v160 = vadd.f32 %v158, 1.0
    %v161 = vadd.f32 %v159, 1.0
    %v162 = vmul.f32 %v146, %v160
    %v163 = vmul.f32 %v147, %v161
    %v164 = vld [vmem:[#allocation7] sm:$0xf]
    %v165 = vld [vmem:[#allocation7 + $0x18] sm:$0xf]
    %v166 = vld [vmem:[#allocation7 + $0x30] sm:$0xf]
    %v167 = vld [vmem:[#allocation7 + $0x48] sm:$0xf]
    %v168 = vld [vmem:[#allocation6 + $0x210] sm:$0xff]
    %v169 = vld [vmem:[#allocation6 + $0x240] sm:$0xff]
    %v170 = vld [vmem:[#allocation6 + $0x270] sm:$0xff]
    %v171 = vld [vmem:[#allocation6 + $0x2a0] sm:$0xff]
    %v172 = vpack.c.bf16 %v163, %v162
    %v177 = vunpack.c.l.b16 %v164
    %v178 = vunpack.c.l.b16 %v165
    %v179 = vunpack.c.l.b16 %v166
    %v180 = vunpack.c.l.b16 %v167
    %v181 = vpack.c.b16 %v178, %v177
    %v182 = vpack.c.b16 %v180, %v179
    %vm183 = vcmask 130048
    %v185 = vsel %vm183, %v181, 0
    %v188 = vsel %vm183, %v182, 0
    %190 = vmatprep.subr.bf16.mxu0 0
    %191 = vmatpush1.bf16.msra.mxu0 %v172
    %192 = vmatprep.subr.bf16.mxu0 0
    %193 = vmatpush1.bf16.msra.mxu0 0
    %194 = vmatprep.subr.bf16.mxu0 0
    %195 = vmatpush1.bf16.msra.mxu0 0
    %196 = vmatprep.subr.bf16.mxu0 0
    %197 = vmatpush1.bf16.msra.mxu0 0
    %198 = vmatprep.subr.bf16.mxu0 0
    %199 = vmatpush1.bf16.msra.mxu0 0
    %200 = vmatprep.subr.bf16.mxu0 0
    %201 = vmatpush1.bf16.msra.mxu0 0
    %202 = vmatprep.subr.bf16.mxu0 0
    %203 = vmatpush1.bf16.msra.mxu0 0
    %204 = vmatprep.subr.bf16.mxu0 0
    %205 = vmatpush1.bf16.msra.mxu0 0
    %206 = vmatprep.subr.bf16.mxu0 0
    %207 = vmatpush1.bf16.msra.mxu0 0
    %208 = vmatprep.subr.bf16.mxu0 0
    %209 = vmatpush1.bf16.msra.mxu0 0
    %210 = vmatprep.subr.bf16.mxu0 0
    %211 = vmatpush1.bf16.msra.mxu0 0
    %212 = vmatprep.subr.bf16.mxu0 0
    %213 = vmatpush1.bf16.msra.mxu0 0
    %214 = vmatprep.subr.bf16.mxu0 0
    %215 = vmatpush1.bf16.msra.mxu0 0
    %216 = vmatprep.subr.bf16.mxu0 0
    %217 = vmatpush1.bf16.msra.mxu0 0
    %218 = vmatprep.subr.bf16.mxu0 0
    %219 = vmatpush1.bf16.msra.mxu0 0
    %220 = vmatprep.subr.bf16.mxu0 0
    %221 = vmatpush1.bf16.msra.mxu0 0
    %222 = vmatprep.mubr.bf16.mxu0 0
    %223 = vmatmul.mubr.bf16.gmra.mrb[0].mxu0 %v185
    %v224 = vpop.f32.mrb[0].mxu0
    %v225 = vadd.f32 %v168, %v224
    %v226 = vpop.f32.mrb[0].mxu0
    %v227 = vpop.f32.mrb[0].mxu0
    %v228 = vadd.f32 %v169, %v227
    %v229 = vpop.f32.mrb[0].mxu0
    %230 = vmatprep.mubr.bf16.mxu0 0
    %231 = vmatmul.mubr.bf16.gmra.mrb[0].mxu0 %v188
    %v232 = vpop.f32.mrb[0].mxu0
    %v233 = vadd.f32 %v170, %v232
    %v234 = vpop.f32.mrb[0].mxu0
    %v235 = vpop.f32.mrb[0].mxu0
    %v236 = vadd.f32 %v171, %v235
    %v237 = vpop.f32.mrb[0].mxu0
    %238 = vdwg.mxu0
    %v239 = vmul.f32 %v225, 0.5
    %v240 = vmul.f32 %v228, 0.5
    %v241 = vmul.f32 %v233, 0.5
    %v242 = vmul.f32 %v236, 0.5
    %v243 = vmul.f32 %v225, %v225
    %v244 = vmul.f32 %v228, %v228
    %v245 = vmul.f32 %v233, %v233
    %v246 = vmul.f32 %v236, %v236
    %v247 = vmul.f32 %v243, %v225
    %v248 = vmul.f32 %v244, %v228
    %v249 = vmul.f32 %v245, %v233
    %v250 = vmul.f32 %v246, %v236
    %v251 = vmul.f32 %v247, 0.044715
    %v252 = vmul.f32 %v248, 0.044715
    %v253 = vmul.f32 %v249, 0.044715
    %v254 = vmul.f32 %v250, 0.044715
    %v255 = vadd.f32 %v225, %v251
    %v256 = vadd.f32 %v228, %v252
    %v257 = vadd.f32 %v233, %v253
    %v258 = vadd.f32 %v236, %v254
    %v259 = vmul.f32 %v255, 0.7978846
    %v260 = vmul.f32 %v256, 0.7978846
    %v261 = vmul.f32 %v257, 0.7978846
    %v262 = vmul.f32 %v258, 0.7978846
    %v263 = vtanh.pop %v259
    %v264 = vtanh.pop %v260
    %v265 = vtanh.pop %v261
    %v266 = vtanh.pop %v262
    %v267 = vadd.f32 %v263, 1.0
    %v268 = vadd.f32 %v264, 1.0
    %v269 = vadd.f32 %v265, 1.0
    %v270 = vadd.f32 %v266, 1.0
    %v271 = vmul.f32 %v239, %v267
    %v272 = vmul.f32 %v240, %v268
    %v273 = vmul.f32 %v241, %v269
    %v274 = vmul.f32 %v242, %v270
    %v275 = vld [vmem:[#allocation7 + $0x2a0] sm:$0xff]
    %v276 = vld [vmem:[#allocation7 + $0x2b8] sm:$0xff]
    %v277 = vld [vmem:[#allocation7 + $0x2d0] sm:$0xff]
    %v278 = vld [vmem:[#allocation7 + $0x2e8] sm:$0xff]
    %v279 = vld [vmem:[#allocation7 + $0x300] sm:$0xff]
    %v280 = vld [vmem:[#allocation7 + $0x318] sm:$0xff]
    %v281 = vld [vmem:[#allocation7 + $0x330] sm:$0xff]
    %v282 = vld [vmem:[#allocation7 + $0x348] sm:$0xff]
    %v283 = vld [vmem:[#allocation7 + $0x360] sm:$0xff]
    %v284 = vld [vmem:[#allocation7 + $0x378] sm:$0xff]
    %v285 = vld [vmem:[#allocation7 + $0x390] sm:$0xff]
    %v286 = vld [vmem:[#allocation7 + $0x3a8] sm:$0xff]
    %v287 = vld [vmem:[#allocation7 + $0x3c0] sm:$0xff]
    %v288 = vld [vmem:[#allocation7 + $0x3d8] sm:$0xff]
    %v289 = vld [vmem:[#allocation7 + $0x3f0] sm:$0xff]
    %v290 = vld [vmem:[#allocation7 + $0x408] sm:$0xff]
    %s291 = scalar_lea.vmem [#allocation6], 4
    %v292 = vld [vmem:[%s291] ss:$8 sm:$0x3]
    %v293 = vpack.c.bf16 %v272, %v271
    %v294 = vpack.c.bf16 %v274, %v273
    %v296 = vlaneseq
    %v297 = vshrl.u32 %v296, 7
    %v298 = vsub.s32 0, %v297
    %v299 = vrot.slane %v292, %v298
    %v300 = vlaneseq
    %v301 = vshrl.u32 %v300, 7
    %v302 = vsub.s32 1, %v301
    %v303 = vrot.slane %v292, %v302
    %v322 = vunpack.c.l.b16 %v275
    %v323 = vunpack.c.h.b16 %v275
    %v324 = vunpack.c.l.b16 %v276
    %v325 = vunpack.c.h.b16 %v276
    %v326 = vunpack.c.l.b16 %v277
    %v327 = vunpack.c.h.b16 %v277
    %v328 = vunpack.c.l.b16 %v278
    %v329 = vunpack.c.h.b16 %v278
    %v330 = vunpack.c.l.b16 %v279
    %v331 = vunpack.c.h.b16 %v279
    %v332 = vunpack.c.l.b16 %v280
    %v333 = vunpack.c.h.b16 %v280
    %v334 = vunpack.c.l.b16 %v281
    %v335 = vunpack.c.h.b16 %v281
    %v336 = vunpack.c.l.b16 %v282
    %v337 = vunpack.c.h.b16 %v282
    %v338 = vunpack.c.l.b16 %v283
    %v339 = vunpack.c.h.b16 %v283
    %v340 = vunpack.c.l.b16 %v284
    %v341 = vunpack.c.h.b16 %v284
    %v342 = vunpack.c.l.b16 %v285
    %v343 = vunpack.c.h.b16 %v285
    %v344 = vunpack.c.l.b16 %v286
    %v345 = vunpack.c.h.b16 %v286
    %v346 = vunpack.c.l.b16 %v287
    %v347 = vunpack.c.h.b16 %v287
    %v348 = vunpack.c.l.b16 %v288
    %v349 = vunpack.c.h.b16 %v288
    %v350 = vunpack.c.l.b16 %v289
    %v351 = vunpack.c.h.b16 %v289
    %v352 = vunpack.c.l.b16 %v290
    %v353 = vunpack.c.h.b16 %v290
    %v354 = vpack.c.b16 %v324, %v322
    %v355 = vpack.c.b16 %v325, %v323
    %v356 = vpack.c.b16 %v328, %v326
    %v357 = vpack.c.b16 %v329, %v327
    %v358 = vpack.c.b16 %v332, %v330
    %v359 = vpack.c.b16 %v333, %v331
    %v360 = vpack.c.b16 %v336, %v334
    %v361 = vpack.c.b16 %v337, %v335
    %v362 = vpack.c.b16 %v340, %v338
    %v363 = vpack.c.b16 %v341, %v339
    %v364 = vpack.c.b16 %v344, %v342
    %v365 = vpack.c.b16 %v345, %v343
    %v366 = vpack.c.b16 %v348, %v346
    %v367 = vpack.c.b16 %v349, %v347
    %v368 = vpack.c.b16 %v352, %v350
    %v369 = vpack.c.b16 %v353, %v351
    %386 = vmatprep.subr.bf16.mxu0 %v355
    %387 = vmatpush1.bf16.msra.mxu0 %v354
    %388 = vmatprep.subr.bf16.mxu0 %v357
    %389 = vmatpush1.bf16.msra.mxu0 %v356
    %390 = vmatprep.subr.bf16.mxu0 %v359
    %391 = vmatpush1.bf16.msra.mxu0 %v358
    %392 = vmatprep.subr.bf16.mxu0 %v361
    %393 = vmatpush1.bf16.msra.mxu0 %v360
    %394 = vmatprep.subr.bf16.mxu0 %v363
    %395 = vmatpush1.bf16.msra.mxu0 %v362
    %396 = vmatprep.subr.bf16.mxu0 %v365
    %397 = vmatpush1.bf16.msra.mxu0 %v364
    %398 = vmatprep.subr.bf16.mxu0 %v367
    %399 = vmatpush1.bf16.msra.mxu0 %v366
    %400 = vmatprep.subr.bf16.mxu0 %v369
    %401 = vmatpush1.bf16.msra.mxu0 %v368
    %402 = vmatprep.subr.bf16.mxu0 0
    %403 = vmatpush1.bf16.msra.mxu0 0
    %404 = vmatprep.subr.bf16.mxu0 0
    %405 = vmatpush1.bf16.msra.mxu0 0
    %406 = vmatprep.subr.bf16.mxu0 0
    %407 = vmatpush1.bf16.msra.mxu0 0
    %408 = vmatprep.subr.bf16.mxu0 0
    %409 = vmatpush1.bf16.msra.mxu0 0
    %410 = vmatprep.subr.bf16.mxu0 0
    %411 = vmatpush1.bf16.msra.mxu0 0
    %412 = vmatprep.subr.bf16.mxu0 0
    %413 = vmatpush1.bf16.msra.mxu0 0
    %414 = vmatprep.subr.bf16.mxu0 0
    %415 = vmatpush1.bf16.msra.mxu0 0
    %416 = vmatprep.subr.bf16.mxu0 0
    %417 = vmatpush1.bf16.msra.mxu0 0
    %418 = vmatprep.mubr.bf16.mxu0 0
    %419 = vmatmul.mubr.bf16.gmra.mrb[0].mxu0 %v293
    %v420 = vpop.f32.mrb[0].mxu0
    %v421 = vadd.f32 %v299, %v420
    %v422 = vpop.f32.mrb[0].mxu0
    %v423 = vadd.f32 %v303, %v422
    %v424 = vpop.f32.mrb[0].mxu0
    %v425 = vadd.f32 %v299, %v424
    %v426 = vpop.f32.mrb[0].mxu0
    %v427 = vadd.f32 %v303, %v426
    %428 = vmatprep.mubr.bf16.mxu0 0
    %429 = vmatmul.mubr.bf16.gmra.mrb[0].mxu0 %v294
    %v430 = vpop.f32.mrb[0].mxu0
    %v431 = vadd.f32 %v299, %v430
    %v432 = vpop.f32.mrb[0].mxu0
    %v433 = vadd.f32 %v303, %v432
    %v434 = vpop.f32.mrb[0].mxu0
    %v435 = vadd.f32 %v299, %v434
    %v436 = vpop.f32.mrb[0].mxu0
    %v437 = vadd.f32 %v303, %v436
    %438 = vdwg.mxu0
    %v439 = vmul.f32 %v421, 0.5
    %v440 = vmul.f32 %v423, 0.5
    %v441 = vmul.f32 %v425, 0.5
    %v442 = vmul.f32 %v427, 0.5
    %v443 = vmul.f32 %v431, 0.5
    %v444 = vmul.f32 %v433, 0.5
    %v445 = vmul.f32 %v435, 0.5
    %v446 = vmul.f32 %v437, 0.5
    %v447 = vmul.f32 %v421, %v421
    %v448 = vmul.f32 %v423, %v423
    %v449 = vmul.f32 %v425, %v425
    %v450 = vmul.f32 %v427, %v427
    %v451 = vmul.f32 %v431, %v431
    %v452 = vmul.f32 %v433, %v433
    %v453 = vmul.f32 %v435, %v435
    %v454 = vmul.f32 %v437, %v437
    %v455 = vmul.f32 %v447, %v421
    %v456 = vmul.f32 %v448, %v423
    %v457 = vmul.f32 %v449, %v425
    %v458 = vmul.f32 %v450, %v427
    %v459 = vmul.f32 %v451, %v431
    %v460 = vmul.f32 %v452, %v433
    %v461 = vmul.f32 %v453, %v435
    %v462 = vmul.f32 %v454, %v437
    %v463 = vmul.f32 %v455, 0.044715
    %v464 = vmul.f32 %v456, 0.044715
    %v465 = vmul.f32 %v457, 0.044715
    %v466 = vmul.f32 %v458, 0.044715
    %v467 = vmul.f32 %v459, 0.044715
    %v468 = vmul.f32 %v460, 0.044715
    %v469 = vmul.f32 %v461, 0.044715
    %v470 = vmul.f32 %v462, 0.044715
    %v471 = vadd.f32 %v421, %v463
    %v472 = vadd.f32 %v423, %v464
    %v473 = vadd.f32 %v425, %v465
    %v474 = vadd.f32 %v427, %v466
    %v475 = vadd.f32 %v431, %v467
    %v476 = vadd.f32 %v433, %v468
    %v477 = vadd.f32 %v435, %v469
    %v478 = vadd.f32 %v437, %v470
    %v479 = vmul.f32 %v471, 0.7978846
    %v480 = vmul.f32 %v472, 0.7978846
    %v481 = vmul.f32 %v473, 0.7978846
    %v482 = vmul.f32 %v474, 0.7978846
    %v483 = vmul.f32 %v475, 0.7978846
    %v484 = vmul.f32 %v476, 0.7978846
    %v485 = vmul.f32 %v477, 0.7978846
    %v486 = vmul.f32 %v478, 0.7978846
    %v487 = vtanh.pop %v479
    %v488 = vtanh.pop %v480
    %v489 = vtanh.pop %v481
    %v490 = vtanh.pop %v482
    %v491 = vtanh.pop %v483
    %v492 = vtanh.pop %v484
    %v493 = vtanh.pop %v485
    %v494 = vtanh.pop %v486
    %v495 = vadd.f32 %v487, 1.0
    %v496 = vadd.f32 %v488, 1.0
    %v497 = vadd.f32 %v489, 1.0
    %v498 = vadd.f32 %v490, 1.0
    %v499 = vadd.f32 %v491, 1.0
    %v500 = vadd.f32 %v492, 1.0
    %v501 = vadd.f32 %v493, 1.0
    %v502 = vadd.f32 %v494, 1.0
    %v503 = vmul.f32 %v439, %v495
    %v504 = vmul.f32 %v440, %v496
    %v505 = vmul.f32 %v441, %v497
    %v506 = vmul.f32 %v442, %v498
    %v507 = vmul.f32 %v443, %v499
    %v508 = vmul.f32 %v444, %v500
    %v509 = vmul.f32 %v445, %v501
    %v510 = vmul.f32 %v446, %v502
    %v511 = vld [vmem:[#allocation7 + $0x60] sm:$0xf]
    %v512 = vld [vmem:[#allocation7 + $0x78] sm:$0xf]
    %v513 = vld [vmem:[#allocation7 + $0x90] sm:$0xf]
    %v514 = vld [vmem:[#allocation7 + $0xa8] sm:$0xf]
    %v515 = vld [vmem:[#allocation7 + $0xc0] sm:$0xf]
    %v516 = vld [vmem:[#allocation7 + $0xd8] sm:$0xf]
    %v517 = vld [vmem:[#allocation7 + $0xf0] sm:$0xf]
    %v518 = vld [vmem:[#allocation7 + $0x108] sm:$0xf]
    %v519 = vld [vmem:[#allocation6 + $0x2d0] sm:$0xff]
    %v520 = vld [vmem:[#allocation6 + $0x2d8] sm:$0xff]
    %v521 = vld [vmem:[#allocation6 + $0x300] sm:$0xff]
    %v522 = vld [vmem:[#allocation6 + $0x308] sm:$0xff]
    %v523 = vld [vmem:[#allocation6 + $0x330] sm:$0xff]
    %v524 = vld [vmem:[#allocation6 + $0x338] sm:$0xff]
    %v525 = vld [vmem:[#allocation6 + $0x360] sm:$0xff]
    %v526 = vld [vmem:[#allocation6 + $0x368] sm:$0xff]
    %v527 = vld [vmem:[#allocation6 + $0x390] sm:$0xff]
    %v528 = vld [vmem:[#allocation6 + $0x398] sm:$0xff]
    %v529 = vld [vmem:[#allocation6 + $0x3c0] sm:$0xff]
    %v530 = vld [vmem:[#allocation6 + $0x3c8] sm:$0xff]
    %v531 = vld [vmem:[#allocation6 + $0x3f0] sm:$0xff]
    %v532 = vld [vmem:[#allocation6 + $0x3f8] sm:$0xff]
    %v533 = vld [vmem:[#allocation6 + $0x420] sm:$0xff]
    %v534 = vld [vmem:[#allocation6 + $0x428] sm:$0xff]
    %v535 = vpack.c.bf16 %v505, %v503
    %v536 = vpack.c.bf16 %v506, %v504
    %v537 = vpack.c.bf16 %v509, %v507
    %v538 = vpack.c.bf16 %v510, %v508
    %v547 = vunpack.c.l.b16 %v511
    %v548 = vunpack.c.l.b16 %v512
    %v549 = vunpack.c.l.b16 %v513
    %v550 = vunpack.c.l.b16 %v514
    %v551 = vunpack.c.l.b16 %v515
    %v552 = vunpack.c.l.b16 %v516
    %v553 = vunpack.c.l.b16 %v517
    %v554 = vunpack.c.l.b16 %v518
    %v555 = vpack.c.b16 %v548, %v547
    %v556 = vpack.c.b16 %v550, %v549
    %v557 = vpack.c.b16 %v552, %v551
    %v558 = vpack.c.b16 %v554, %v553
    %vm559 = vcmask 261120
    %v561 = vsel %vm559, %v555, 0
    %v564 = vsel %vm559, %v556, 0
    %v567 = vsel %vm559, %v557, 0
    %v570 = vsel %vm559, %v558, 0
    %572 = vmatprep.subr.bf16.mxu0 %v536
    %573 = vmatpush1.bf16.msra.mxu0 %v535
    %574 = vmatprep.subr.bf16.mxu0 %v538
    %575 = vmatpush1.bf16.msra.mxu0 %v537
    %576 = vmatprep.subr.bf16.mxu0 0
    %577 = vmatpush1.bf16.msra.mxu0 0
    %578 = vmatprep.subr.bf16.mxu0 0
    %579 = vmatpush1.bf16.msra.mxu0 0
    %580 = vmatprep.subr.bf16.mxu0 0
    %581 = vmatpush1.bf16.msra.mxu0 0
    %582 = vmatprep.subr.bf16.mxu0 0
    %583 = vmatpush1.bf16.msra.mxu0 0
    %584 = vmatprep.subr.bf16.mxu0 0
    %585 = vmatpush1.bf16.msra.mxu0 0
    %586 = vmatprep.subr.bf16.mxu0 0
    %587 = vmatpush1.bf16.msra.mxu0 0
    %588 = vmatprep.subr.bf16.mxu0 0
    %589 = vmatpush1.bf16.msra.mxu0 0
    %590 = vmatprep.subr.bf16.mxu0 0
    %591 = vmatpush1.bf16.msra.mxu0 0
    %592 = vmatprep.subr.bf16.mxu0 0
    %593 = vmatpush1.bf16.msra.mxu0 0
    %594 = vmatprep.subr.bf16.mxu0 0
    %595 = vmatpush1.bf16.msra.mxu0 0
    %596 = vmatprep.subr.bf16.mxu0 0
    %597 = vmatpush1.bf16.msra.mxu0 0
    %598 = vmatprep.subr.bf16.mxu0 0
    %599 = vmatpush1.bf16.msra.mxu0 0
    %600 = vmatprep.subr.bf16.mxu0 0
    %601 = vmatpush1.bf16.msra.mxu0 0
    %602 = vmatprep.subr.bf16.mxu0 0
    %603 = vmatpush1.bf16.msra.mxu0 0
    %604 = vmatprep.mubr.bf16.mxu0 0
    %605 = vmatmul.mubr.bf16.gmra.mrb[0].mxu0 %v561
    %v606 = vpop.f32.mrb[0].mxu0
    %v607 = vadd.f32 %v519, %v606
    %v608 = vpop.f32.mrb[0].mxu0
    %v609 = vadd.f32 %v520, %v608
    %v610 = vpop.f32.mrb[0].mxu0
    %v611 = vadd.f32 %v521, %v610
    %v612 = vpop.f32.mrb[0].mxu0
    %v613 = vadd.f32 %v522, %v612
    %614 = vmatprep.mubr.bf16.mxu0 0
    %615 = vmatmul.mubr.bf16.gmra.mrb[0].mxu0 %v564
    %v616 = vpop.f32.mrb[0].mxu0
    %v617 = vadd.f32 %v523, %v616
    %v618 = vpop.f32.mrb[0].mxu0
    %v619 = vadd.f32 %v524, %v618
    %v620 = vpop.f32.mrb[0].mxu0
    %v621 = vadd.f32 %v525, %v620
    %v622 = vpop.f32.mrb[0].mxu0
    %v623 = vadd.f32 %v526, %v622
    %624 = vmatprep.mubr.bf16.mxu0 0
    %625 = vmatmul.mubr.bf16.gmra.mrb[0].mxu0 %v567
    %v626 = vpop.f32.mrb[0].mxu0
    %v627 = vadd.f32 %v527, %v626
    %v628 = vpop.f32.mrb[0].mxu0
    %v629 = vadd.f32 %v528, %v628
    %v630 = vpop.f32.mrb[0].mxu0
    %v631 = vadd.f32 %v529, %v630
    %v632 = vpop.f32.mrb[0].mxu0
    %v633 = vadd.f32 %v530, %v632
    %634 = vmatprep.mubr.bf16.mxu0 0
    %635 = vmatmul.mubr.bf16.gmra.mrb[0].mxu0 %v570
    %v636 = vpop.f32.mrb[0].mxu0
    %v637 = vadd.f32 %v531, %v636
    %v638 = vpop.f32.mrb[0].mxu0
    %v639 = vadd.f32 %v532, %v638
    %v640 = vpop.f32.mrb[0].mxu0
    %v641 = vadd.f32 %v533, %v640
    %v642 = vpop.f32.mrb[0].mxu0
    %v643 = vadd.f32 %v534, %v642
    %644 = vdwg.mxu0
    %v645 = vmul.f32 %v607, 0.5
    %v646 = vmul.f32 %v609, 0.5
    %v647 = vmul.f32 %v611, 0.5
    %v648 = vmul.f32 %v613, 0.5
    %v649 = vmul.f32 %v617, 0.5
    %v650 = vmul.f32 %v619, 0.5
    %v651 = vmul.f32 %v621, 0.5
    %v652 = vmul.f32 %v623, 0.5
    %v653 = vmul.f32 %v627, 0.5
    %v654 = vmul.f32 %v629, 0.5
    %v655 = vmul.f32 %v631, 0.5
    %v656 = vmul.f32 %v633, 0.5
    %v657 = vmul.f32 %v637, 0.5
    %v658 = vmul.f32 %v639, 0.5
    %v659 = vmul.f32 %v641, 0.5
    %v660 = vmul.f32 %v643, 0.5
    %v661 = vmul.f32 %v607, %v607
    %v662 = vmul.f32 %v609, %v609
    %v663 = vmul.f32 %v611, %v611
    %v664 = vmul.f32 %v613, %v613
    %v665 = vmul.f32 %v617, %v617
    %v666 = vmul.f32 %v619, %v619
    %v667 = vmul.f32 %v621, %v621
    %v668 = vmul.f32 %v623, %v623
    %v669 = vmul.f32 %v627, %v627
    %v670 = vmul.f32 %v629, %v629
    %v671 = vmul.f32 %v631, %v631
    %v672 = vmul.f32 %v633, %v633
    %v673 = vmul.f32 %v637, %v637
    %v674 = vmul.f32 %v639, %v639
    %v675 = vmul.f32 %v641, %v641
    %v676 = vmul.f32 %v643, %v643
    %v677 = vmul.f32 %v661, %v607
    %v678 = vmul.f32 %v662, %v609
    %v679 = vmul.f32 %v663, %v611
    %v680 = vmul.f32 %v664, %v613
    %v681 = vmul.f32 %v665, %v617
    %v682 = vmul.f32 %v666, %v619
    %v683 = vmul.f32 %v667, %v621
    %v684 = vmul.f32 %v668, %v623
    %v685 = vmul.f32 %v669, %v627
    %v686 = vmul.f32 %v670, %v629
    %v687 = vmul.f32 %v671, %v631
    %v688 = vmul.f32 %v672, %v633
    %v689 = vmul.f32 %v673, %v637
    %v690 = vmul.f32 %v674, %v639
    %v691 = vmul.f32 %v675, %v641
    %v692 = vmul.f32 %v676, %v643
    %v693 = vmul.f32 %v677, 0.044715
    %v694 = vmul.f32 %v678, 0.044715
    %v695 = vmul.f32 %v679, 0.044715
    %v696 = vmul.f32 %v680, 0.044715
    %v697 = vmul.f32 %v681, 0.044715
    %v698 = vmul.f32 %v682, 0.044715
    %v699 = vmul.f32 %v683, 0.044715
    %v700 = vmul.f32 %v684, 0.044715
    %v701 = vmul.f32 %v685, 0.044715
    %v702 = vmul.f32 %v686, 0.044715
    %v703 = vmul.f32 %v687, 0.044715
    %v704 = vmul.f32 %v688, 0.044715
    %v705 = vmul.f32 %v689, 0.044715
    %v706 = vmul.f32 %v690, 0.044715
    %v707 = vmul.f32 %v691, 0.044715
    %v708 = vmul.f32 %v692, 0.044715
    %v709 = vadd.f32 %v607, %v693
    %v710 = vadd.f32 %v609, %v694
    %v711 = vadd.f32 %v611, %v695
    %v712 = vadd.f32 %v613, %v696
    %v713 = vadd.f32 %v617, %v697
    %v714 = vadd.f32 %v619, %v698
    %v715 = vadd.f32 %v621, %v699
    %v716 = vadd.f32 %v623, %v700
    %v717 = vadd.f32 %v627, %v701
    %v718 = vadd.f32 %v629, %v702
    %v719 = vadd.f32 %v631, %v703
    %v720 = vadd.f32 %v633, %v704
    %v721 = vadd.f32 %v637, %v705
    %v722 = vadd.f32 %v639, %v706
    %v723 = vadd.f32 %v641, %v707
    %v724 = vadd.f32 %v643, %v708
    %v725 = vmul.f32 %v709, 0.7978846
    %v726 = vmul.f32 %v710, 0.7978846
    %v727 = vmul.f32 %v711, 0.7978846
    %v728 = vmul.f32 %v712, 0.7978846
    %v729 = vmul.f32 %v713, 0.7978846
    %v730 = vmul.f32 %v714, 0.7978846
    %v731 = vmul.f32 %v715, 0.7978846
    %v732 = vmul.f32 %v716, 0.7978846
    %v733 = vmul.f32 %v717, 0.7978846
    %v734 = vmul.f32 %v718, 0.7978846
    %v735 = vmul.f32 %v719, 0.7978846
    %v736 = vmul.f32 %v720, 0.7978846
    %v737 = vmul.f32 %v721, 0.7978846
    %v738 = vmul.f32 %v722, 0.7978846
    %v739 = vmul.f32 %v723, 0.7978846
    %v740 = vmul.f32 %v724, 0.7978846
    %v741 = vtanh.pop %v725
    %v742 = vtanh.pop %v726
    %v743 = vtanh.pop %v727
    %v744 = vtanh.pop %v728
    %v745 = vtanh.pop %v729
    %v746 = vtanh.pop %v730
    %v747 = vtanh.pop %v731
    %v748 = vtanh.pop %v732
    %v749 = vtanh.pop %v733
    %v750 = vtanh.pop %v734
    %v751 = vtanh.pop %v735
    %v752 = vtanh.pop %v736
    %v753 = vtanh.pop %v737
    %v754 = vtanh.pop %v738
    %v755 = vtanh.pop %v739
    %v756 = vtanh.pop %v740
    %v757 = vadd.f32 %v741, 1.0
    %v758 = vadd.f32 %v742, 1.0
    %v759 = vadd.f32 %v743, 1.0
    %v760 = vadd.f32 %v744, 1.0
    %v761 = vadd.f32 %v745, 1.0
    %v762 = vadd.f32 %v746, 1.0
    %v763 = vadd.f32 %v747, 1.0
    %v764 = vadd.f32 %v748, 1.0
    %v765 = vadd.f32 %v749, 1.0
    %v766 = vadd.f32 %v750, 1.0
    %v767 = vadd.f32 %v751, 1.0
    %v768 = vadd.f32 %v752, 1.0
    %v769 = vadd.f32 %v753, 1.0
    %v770 = vadd.f32 %v754, 1.0
    %v771 = vadd.f32 %v755, 1.0
    %v772 = vadd.f32 %v756, 1.0
    %v773 = vmul.f32 %v645, %v757
    %v774 = vmul.f32 %v646, %v758
    %v775 = vmul.f32 %v647, %v759
    %v776 = vmul.f32 %v648, %v760
    %v777 = vmul.f32 %v649, %v761
    %v778 = vmul.f32 %v650, %v762
    %v779 = vmul.f32 %v651, %v763
    %v780 = vmul.f32 %v652, %v764
    %v781 = vmul.f32 %v653, %v765
    %v782 = vmul.f32 %v654, %v766
    %v783 = vmul.f32 %v655, %v767
    %v784 = vmul.f32 %v656, %v768
    %v785 = vmul.f32 %v657, %v769
    %v786 = vmul.f32 %v658, %v770
    %v787 = vmul.f32 %v659, %v771
    %v788 = vmul.f32 %v660, %v772
    %v789 = vld [vmem:[#allocation7 + $0x420] sm:$0xff]
    %v790 = vld [vmem:[#allocation7 + $0x428] sm:$0xf]
    %v791 = vld [vmem:[#allocation7 + $0x438] sm:$0xff]
    %v792 = vld [vmem:[#allocation7 + $0x440] sm:$0xf]
    %v793 = vld [vmem:[#allocation7 + $0x450] sm:$0xff]
    %v794 = vld [vmem:[#allocation7 + $0x458] sm:$0xf]
    %v795 = vld [vmem:[#allocation7 + $0x468] sm:$0xff]
    %v796 = vld [vmem:[#allocation7 + $0x470] sm:$0xf]
    %v797 = vld [vmem:[#allocation7 + $0x480] sm:$0xff]
    %v798 = vld [vmem:[#allocation7 + $0x488] sm:$0xf]
    %v799 = vld [vmem:[#allocation7 + $0x498] sm:$0xff]
    %v800 = vld [vmem:[#allocation7 + $0x4a0] sm:$0xf]
    %v801 = vld [vmem:[#allocation7 + $0x4b0] sm:$0xff]
    %v802 = vld [vmem:[#allocation7 + $0x4b8] sm:$0xf]
    %v803 = vld [vmem:[#allocation7 + $0x4c8] sm:$0xff]
    %v804 = vld [vmem:[#allocation7 + $0x4d0] sm:$0xf]
    %v805 = vld [vmem:[#allocation7 + $0x4e0] sm:$0xff]
    %v806 = vld [vmem:[#allocation7 + $0x4e8] sm:$0xf]
    %v807 = vld [vmem:[#allocation7 + $0x4f8] sm:$0xff]
    %v808 = vld [vmem:[#allocation7 + $0x500] sm:$0xf]
    %v809 = vld [vmem:[#allocation7 + $0x510] sm:$0xff]
    %v810 = vld [vmem:[#allocation7 + $0x518] sm:$0xf]
    %v811 = vld [vmem:[#allocation7 + $0x528] sm:$0xff]
    %v812 = vld [vmem:[#allocation7 + $0x530] sm:$0xf]
    %v813 = vld [vmem:[#allocation7 + $0x540] sm:$0xff]
    %v814 = vld [vmem:[#allocation7 + $0x548] sm:$0xf]
    %v815 = vld [vmem:[#allocation7 + $0x558] sm:$0xff]
    %v816 = vld [vmem:[#allocation7 + $0x560] sm:$0xf]
    %v817 = vld [vmem:[#allocation7 + $0x570] sm:$0xff]
    %v818 = vld [vmem:[#allocation7 + $0x578] sm:$0xf]
    %v819 = vld [vmem:[#allocation7 + $0x588] sm:$0xff]
    %v820 = vld [vmem:[#allocation7 + $0x590] sm:$0xf]
    %v821 = vld [vmem:[#allocation7 + $0x5a0] sm:$0xff]
    %v822 = vld [vmem:[#allocation7 + $0x5a8] sm:$0xf]
    %v823 = vld [vmem:[#allocation7 + $0x5b8] sm:$0xff]
    %v824 = vld [vmem:[#allocation7 + $0x5c0] sm:$0xf]
    %v825 = vld [vmem:[#allocation7 + $0x5d0] sm:$0xff]
    %v826 = vld [vmem:[#allocation7 + $0x5d8] sm:$0xf]
    %v827 = vld [vmem:[#allocation7 + $0x5e8] sm:$0xff]
    %v828 = vld [vmem:[#allocation7 + $0x5f0] sm:$0xf]
    %v829 = vld [vmem:[#allocation7 + $0x600] sm:$0xff]
    %v830 = vld [vmem:[#allocation7 + $0x608] sm:$0xf]
    %v831 = vld [vmem:[#allocation7 + $0x618] sm:$0xff]
    %v832 = vld [vmem:[#allocation7 + $0x620] sm:$0xf]
    %v833 = vld [vmem:[#allocation7 + $0x630] sm:$0xff]
    %v834 = vld [vmem:[#allocation7 + $0x638] sm:$0xf]
    %v835 = vld [vmem:[#allocation7 + $0x648] sm:$0xff]
    %v836 = vld [vmem:[#allocation7 + $0x650] sm:$0xf]
    %v837 = vld [vmem:[#allocation7 + $0x660] sm:$0xff]
    %v838 = vld [vmem:[#allocation7 + $0x668] sm:$0xf]
    %v839 = vld [vmem:[#allocation7 + $0x678] sm:$0xff]
    %v840 = vld [vmem:[#allocation7 + $0x680] sm:$0xf]
    %v841 = vld [vmem:[#allocation7 + $0x690] sm:$0xff]
    %v842 = vld [vmem:[#allocation7 + $0x698] sm:$0xf]
    %v843 = vld [vmem:[#allocation7 + $0x6a8] sm:$0xff]
    %v844 = vld [vmem:[#allocation7 + $0x6b0] sm:$0xf]
    %v845 = vld [vmem:[#allocation7 + $0x6c0] sm:$0xff]
    %v846 = vld [vmem:[#allocation7 + $0x6c8] sm:$0xf]
    %v847 = vld [vmem:[#allocation7 + $0x6d8] sm:$0xff]
    %v848 = vld [vmem:[#allocation7 + $0x6e0] sm:$0xf]
    %v849 = vld [vmem:[#allocation7 + $0x6f0] sm:$0xff]
    %v850 = vld [vmem:[#allocation7 + $0x6f8] sm:$0xf]
    %v851 = vld [vmem:[#allocation7 + $0x708] sm:$0xff]
    %v852 = vld [vmem:[#allocation7 + $0x710] sm:$0xf]
    %s853 = scalar_lea.vmem [#allocation6], 3
    %v854 = vld [vmem:[%s853] ss:$8 sm:$0x7]
    %v855 = vpack.c.bf16 %v775, %v773
    %v856 = vpack.c.bf16 %v776, %v774
    %v857 = vpack.c.bf16 %v779, %v777
    %v858 = vpack.c.bf16 %v780, %v778
    %v859 = vpack.c.bf16 %v783, %v781
    %v860 = vpack.c.bf16 %v784, %v782
    %v861 = vpack.c.bf16 %v787, %v785
    %v862 = vpack.c.bf16 %v788, %v786
    %v864 = vlaneseq
    %v865 = vshrl.u32 %v864, 7
    %v866 = vsub.s32 0, %v865
    %v867 = vrot.slane %v854, %v866
    %v868 = vlaneseq
    %v869 = vshrl.u32 %v868, 7
    %v870 = vsub.s32 1, %v869
    %v871 = vrot.slane %v854, %v870
    %v872 = vlaneseq
    %v873 = vshrl.u32 %v872, 7
    %v874 = vsub.s32 2, %v873
    %v875 = vrot.slane %v854, %v874
    %v943 = vunpack.c.l.b16 %v789
    %v944 = vunpack.c.h.b16 %v789
    %v945 = vunpack.c.l.b16 %v790
    %v946 = vunpack.c.l.b16 %v791
    %v947 = vunpack.c.h.b16 %v791
    %v948 = vunpack.c.l.b16 %v792
    %v949 = vunpack.c.l.b16 %v793
    %v950 = vunpack.c.h.b16 %v793
    %v951 = vunpack.c.l.b16 %v794
    %v952 = vunpack.c.l.b16 %v795
    %v953 = vunpack.c.h.b16 %v795
    %v954 = vunpack.c.l.b16 %v796
    %v955 = vunpack.c.l.b16 %v797
    %v956 = vunpack.c.h.b16 %v797
    %v957 = vunpack.c.l.b16 %v798
    %v958 = vunpack.c.l.b16 %v799
    %v959 = vunpack.c.h.b16 %v799
    %v960 = vunpack.c.l.b16 %v800
    %v961 = vunpack.c.l.b16 %v801
    %v962 = vunpack.c.h.b16 %v801
    %v963 = vunpack.c.l.b16 %v802
    %v964 = vunpack.c.l.b16 %v803
    %v965 = vunpack.c.h.b16 %v803
    %v966 = vunpack.c.l.b16 %v804
    %v967 = vunpack.c.l.b16 %v805
    %v968 = vunpack.c.h.b16 %v805
    %v969 = vunpack.c.l.b16 %v806
    %v970 = vunpack.c.l.b16 %v807
    %v971 = vunpack.c.h.b16 %v807
    %v972 = vunpack.c.l.b16 %v808
    %v973 = vunpack.c.l.b16 %v809
    %v974 = vunpack.c.h.b16 %v809
    %v975 = vunpack.c.l.b16 %v810
    %v976 = vunpack.c.l.b16 %v811
    %v977 = vunpack.c.h.b16 %v811
    %v978 = vunpack.c.l.b16 %v812
    %v979 = vunpack.c.l.b16 %v813
    %v980 = vunpack.c.h.b16 %v813
    %v981 = vunpack.c.l.b16 %v814
    %v982 = vunpack.c.l.b16 %v815
    %v983 = vunpack.c.h.b16 %v815
    %v984 = vunpack.c.l.b16 %v816
    %v985 = vunpack.c.l.b16 %v817
    %v986 = vunpack.c.h.b16 %v817
    %v987 = vunpack.c.l.b16 %v818
    %v988 = vunpack.c.l.b16 %v819
    %v989 = vunpack.c.h.b16 %v819
    %v990 = vunpack.c.l.b16 %v820
    %v991 = vunpack.c.l.b16 %v821
    %v992 = vunpack.c.h.b16 %v821
    %v993 = vunpack.c.l.b16 %v822
    %v994 = vunpack.c.l.b16 %v823
    %v995 = vunpack.c.h.b16 %v823
    %v996 = vunpack.c.l.b16 %v824
    %v997 = vunpack.c.l.b16 %v825
    %v998 = vunpack.c.h.b16 %v825
    %v999 = vunpack.c.l.b16 %v826
    %v1000 = vunpack.c.l.b16 %v827
    %v1001 = vunpack.c.h.b16 %v827
    %v1002 = vunpack.c.l.b16 %v828
    %v1003 = vunpack.c.l.b16 %v829
    %v1004 = vunpack.c.h.b16 %v829
    %v1005 = vunpack.c.l.b16 %v830
    %v1006 = vunpack.c.l.b16 %v831
    %v1007 = vunpack.c.h.b16 %v831
    %v1008 = vunpack.c.l.b16 %v832
    %v1009 = vunpack.c.l.b16 %v833
    %v1010 = vunpack.c.h.b16 %v833
    %v1011 = vunpack.c.l.b16 %v834
    %v1012 = vunpack.c.l.b16 %v835
    %v1013 = vunpack.c.h.b16 %v835
    %v1014 = vunpack.c.l.b16 %v836
    %v1015 = vunpack.c.l.b16 %v837
    %v1016 = vunpack.c.h.b16 %v837
    %v1017 = vunpack.c.l.b16 %v838
    %v1018 = vunpack.c.l.b16 %v839
    %v1019 = vunpack.c.h.b16 %v839
    %v1020 = vunpack.c.l.b16 %v840
    %v1021 = vunpack.c.l.b16 %v841
    %v1022 = vunpack.c.h.b16 %v841
    %v1023 = vunpack.c.l.b16 %v842
    %v1024 = vunpack.c.l.b16 %v843
    %v1025 = vunpack.c.h.b16 %v843
    %v1026 = vunpack.c.l.b16 %v844
    %v1027 = vunpack.c.l.b16 %v845
    %v1028 = vunpack.c.h.b16 %v845
    %v1029 = vunpack.c.l.b16 %v846
    %v1030 = vunpack.c.l.b16 %v847
    %v1031 = vunpack.c.h.b16 %v847
    %v1032 = vunpack.c.l.b16 %v848
    %v1033 = vunpack.c.l.b16 %v849
    %v1034 = vunpack.c.h.b16 %v849
    %v1035 = vunpack.c.l.b16 %v850
    %v1036 = vunpack.c.l.b16 %v851
    %v1037 = vunpack.c.h.b16 %v851
    %v1038 = vunpack.c.l.b16 %v852
    %v1039 = vpack.c.b16 %v946, %v943
    %v1040 = vpack.c.b16 %v947, %v944
    %v1041 = vpack.c.b16 %v948, %v945
    %v1042 = vpack.c.b16 %v952, %v949
    %v1043 = vpack.c.b16 %v953, %v950
    %v1044 = vpack.c.b16 %v954, %v951
    %v1045 = vpack.c.b16 %v958, %v955
    %v1046 = vpack.c.b16 %v959, %v956
    %v1047 = vpack.c.b16 %v960, %v957
    %v1048 = vpack.c.b16 %v964, %v961
    %v1049 = vpack.c.b16 %v965, %v962
    %v1050 = vpack.c.b16 %v966, %v963
    %v1051 = vpack.c.b16 %v970, %v967
    %v1052 = vpack.c.b16 %v971, %v968
    %v1053 = vpack.c.b16 %v972, %v969
    %v1054 = vpack.c.b16 %v976, %v973
    %v1055 = vpack.c.b16 %v977, %v974
    %v1056 = vpack.c.b16 %v978, %v975
    %v1057 = vpack.c.b16 %v982, %v979
    %v1058 = vpack.c.b16 %v983, %v980
    %v1059 = vpack.c.b16 %v984, %v981
    %v1060 = vpack.c.b16 %v988, %v985
    %v1061 = vpack.c.b16 %v989, %v986
    %v1062 = vpack.c.b16 %v990, %v987
    %v1063 = vpack.c.b16 %v994, %v991
    %v1064 = vpack.c.b16 %v995, %v992
    %v1065 = vpack.c.b16 %v996, %v993
    %v1066 = vpack.c.b16 %v1000, %v997
    %v1067 = vpack.c.b16 %v1001, %v998
    %v1068 = vpack.c.b16 %v1002, %v999
    %v1069 = vpack.c.b16 %v1006, %v1003
    %v1070 = vpack.c.b16 %v1007, %v1004
    %v1071 = vpack.c.b16 %v1008, %v1005
    %v1072 = vpack.c.b16 %v1012, %v1009
    %v1073 = vpack.c.b16 %v1013, %v1010
    %v1074 = vpack.c.b16 %v1014, %v1011
    %v1075 = vpack.c.b16 %v1018, %v1015
    %v1076 = vpack.c.b16 %v1019, %v1016
    %v1077 = vpack.c.b16 %v1020, %v1017
    %v1078 = vpack.c.b16 %v1024, %v1021
    %v1079 = vpack.c.b16 %v1025, %v1022
    %v1080 = vpack.c.b16 %v1026, %v1023
    %v1081 = vpack.c.b16 %v1030, %v1027
    %v1082 = vpack.c.b16 %v1031, %v1028
    %v1083 = vpack.c.b16 %v1032, %v1029
    %v1084 = vpack.c.b16 %v1036, %v1033
    %v1085 = vpack.c.b16 %v1037, %v1034
    %v1086 = vpack.c.b16 %v1038, %v1035
    %1135 = vmatprep.subr.bf16.mxu0 %v1040
    %1136 = vmatpush1.bf16.msra.mxu0 %v1039
    %1137 = vmatprep.subr.bf16.mxu0 %v1043
    %1138 = vmatpush1.bf16.msra.mxu0 %v1042
    %1139 = vmatprep.subr.bf16.mxu0 %v1046
    %1140 = vmatpush1.bf16.msra.mxu0 %v1045
    %1141 = vmatprep.subr.bf16.mxu0 %v1049
    %1142 = vmatpush1.bf16.msra.mxu0 %v1048
    %1143 = vmatprep.subr.bf16.mxu0 %v1052
    %1144 = vmatpush1.bf16.msra.mxu0 %v1051
    %1145 = vmatprep.subr.bf16.mxu0 %v1055
    %1146 = vmatpush1.bf16.msra.mxu0 %v1054
    %1147 = vmatprep.subr.bf16.mxu0 %v1058
    %1148 = vmatpush1.bf16.msra.mxu0 %v1057
    %1149 = vmatprep.subr.bf16.mxu0 %v1061
    %1150 = vmatpush1.bf16.msra.mxu0 %v1060
    %1151 = vmatprep.subr.bf16.mxu0 %v1064
    %1152 = vmatpush1.bf16.msra.mxu0 %v1063
    %1153 = vmatprep.subr.bf16.mxu0 %v1067
    %1154 = vmatpush1.bf16.msra.mxu0 %v1066
    %1155 = vmatprep.subr.bf16.mxu0 %v1070
    %1156 = vmatpush1.bf16.msra.mxu0 %v1069
    %1157 = vmatprep.subr.bf16.mxu0 %v1073
    %1158 = vmatpush1.bf16.msra.mxu0 %v1072
    %1159 = vmatprep.subr.bf16.mxu0 %v1076
    %1160 = vmatpush1.bf16.msra.mxu0 %v1075
    %1161 = vmatprep.subr.bf16.mxu0 %v1079
    %1162 = vmatpush1.bf16.msra.mxu0 %v1078
    %1163 = vmatprep.subr.bf16.mxu0 %v1082
    %1164 = vmatpush1.bf16.msra.mxu0 %v1081
    %1165 = vmatprep.subr.bf16.mxu0 %v1085
    %1166 = vmatpush1.bf16.msra.mxu0 %v1084
    %1167 = vmatprep.mubr.bf16.mxu0 %v856
    %1168 = vmatmul.mubr.bf16.gmra.mrb[0].mxu0 %v855
    %v1169 = vpop.f32.mrb[0].mxu0
    %v1170 = vadd.f32 %v867, %v1169
    %v1171 = vpop.f32.mrb[0].mxu0
    %v1172 = vadd.f32 %v871, %v1171
    %v1173 = vpop.f32.mrb[0].mxu0
    %v1174 = vadd.f32 %v867, %v1173
    %v1175 = vpop.f32.mrb[0].mxu0
    %v1176 = vadd.f32 %v871, %v1175
    %1177 = vmatprep.mubr.bf16.mxu0 %v858
    %1178 = vmatmul.mubr.bf16.gmra.mrb[0].mxu0 %v857
    %v1179 = vpop.f32.mrb[0].mxu0
    %v1180 = vadd.f32 %v867, %v1179
    %v1181 = vpop.f32.mrb[0].mxu0
    %v1182 = vadd.f32 %v871, %v1181
    %v1183 = vpop.f32.mrb[0].mxu0
    %v1184 = vadd.f32 %v867, %v1183
    %v1185 = vpop.f32.mrb[0].mxu0
    %v1186 = vadd.f32 %v871, %v1185
    %1187 = vmatprep.mubr.bf16.mxu0 %v860
    %1188 = vmatmul.mubr.bf16.gmra.mrb[0].mxu0 %v859
    %v1189 = vpop.f32.mrb[0].mxu0
    %v1190 = vadd.f32 %v867, %v1189
    %v1191 = vpop.f32.mrb[0].mxu0
    %v1192 = vadd.f32 %v871, %v1191
    %v1193 = vpop.f32.mrb[0].mxu0
    %v1194 = vadd.f32 %v867, %v1193
    %v1195 = vpop.f32.mrb[0].mxu0
    %v1196 = vadd.f32 %v871, %v1195
    %1197 = vmatprep.mubr.bf16.mxu0 %v862
    %1198 = vmatmul.mubr.bf16.gmra.mrb[0].mxu0 %v861
    %v1199 = vpop.f32.mrb[0].mxu0
    %v1200 = vadd.f32 %v867, %v1199
    %v1201 = vpop.f32.mrb[0].mxu0
    %v1202 = vadd.f32 %v871, %v1201
    %v1203 = vpop.f32.mrb[0].mxu0
    %v1204 = vadd.f32 %v867, %v1203
    %v1205 = vpop.f32.mrb[0].mxu0
    %v1206 = vadd.f32 %v871, %v1205
    %1207 = vdwg.mxu0
    %1208 = vmatprep.subr.bf16.mxu0 0
    %1209 = vmatpush1.bf16.msra.mxu0 %v1041
    %1210 = vmatprep.subr.bf16.mxu0 0
    %1211 = vmatpush1.bf16.msra.mxu0 %v1044
    %1212 = vmatprep.subr.bf16.mxu0 0
    %1213 = vmatpush1.bf16.msra.mxu0 %v1047
    %1214 = vmatprep.subr.bf16.mxu0 0
    %1215 = vmatpush1.bf16.msra.mxu0 %v1050
    %1216 = vmatprep.subr.bf16.mxu0 0
    %1217 = vmatpush1.bf16.msra.mxu0 %v1053
    %1218 = vmatprep.subr.bf16.mxu0 0
    %1219 = vmatpush1.bf16.msra.mxu0 %v1056
    %1220 = vmatprep.subr.bf16.mxu0 0
    %1221 = vmatpush1.bf16.msra.mxu0 %v1059
    %1222 = vmatprep.subr.bf16.mxu0 0
    %1223 = vmatpush1.bf16.msra.mxu0 %v1062
    %1224 = vmatprep.subr.bf16.mxu0 0
    %1225 = vmatpush1.bf16.msra.mxu0 %v1065
    %1226 = vmatprep.subr.bf16.mxu0 0
    %1227 = vmatpush1.bf16.msra.mxu0 %v1068
    %1228 = vmatprep.subr.bf16.mxu0 0
    %1229 = vmatpush1.bf16.msra.mxu0 %v1071
    %1230 = vmatprep.subr.bf16.mxu0 0
    %1231 = vmatpush1.bf16.msra.mxu0 %v1074
    %1232 = vmatprep.subr.bf16.mxu0 0
    %1233 = vmatpush1.bf16.msra.mxu0 %v1077
    %1234 = vmatprep.subr.bf16.mxu0 0
    %1235 = vmatpush1.bf16.msra.mxu0 %v1080
    %1236 = vmatprep.subr.bf16.mxu0 0
    %1237 = vmatpush1.bf16.msra.mxu0 %v1083
    %1238 = vmatprep.subr.bf16.mxu0 0
    %1239 = vmatpush1.bf16.msra.mxu0 %v1086
    %1240 = vmatprep.mubr.bf16.mxu0 %v856
    %1241 = vmatmul.mubr.bf16.gmra.mrb[0].mxu0 %v855
    %v1242 = vpop.f32.mrb[0].mxu0
    %v1243 = vadd.f32 %v875, %v1242
    %v1244 = vpop.f32.mrb[0].mxu0
    %v1245 = vpop.f32.mrb[0].mxu0
    %v1246 = vadd.f32 %v875, %v1245
    %v1247 = vpop.f32.mrb[0].mxu0
    %1248 = vmatprep.mubr.bf16.mxu0 %v858
    %1249 = vmatmul.mubr.bf16.gmra.mrb[0].mxu0 %v857
    %v1250 = vpop.f32.mrb[0].mxu0
    %v1251 = vadd.f32 %v875, %v1250
    %v1252 = vpop.f32.mrb[0].mxu0
    %v1253 = vpop.f32.mrb[0].mxu0
    %v1254 = vadd.f32 %v875, %v1253
    %v1255 = vpop.f32.mrb[0].mxu0
    %1256 = vmatprep.mubr.bf16.mxu0 %v860
    %1257 = vmatmul.mubr.bf16.gmra.mrb[0].mxu0 %v859
    %v1258 = vpop.f32.mrb[0].mxu0
    %v1259 = vadd.f32 %v875, %v1258
    %v1260 = vpop.f32.mrb[0].mxu0
    %v1261 = vpop.f32.mrb[0].mxu0
    %v1262 = vadd.f32 %v875, %v1261
    %v1263 = vpop.f32.mrb[0].mxu0
    %1264 = vmatprep.mubr.bf16.mxu0 %v862
    %1265 = vmatmul.mubr.bf16.gmra.mrb[0].mxu0 %v861
    %v1266 = vpop.f32.mrb[0].mxu0
    %v1267 = vadd.f32 %v875, %v1266
    %v1268 = vpop.f32.mrb[0].mxu0
    %v1269 = vpop.f32.mrb[0].mxu0
    %v1270 = vadd.f32 %v875, %v1269
    %v1271 = vpop.f32.mrb[0].mxu0
    %1272 = vdwg.mxu0
    %v1273 = vmul.f32 %v1170, 0.5
    %v1274 = vmul.f32 %v1172, 0.5
    %v1275 = vmul.f32 %v1243, 0.5
    %v1276 = vmul.f32 %v1174, 0.5
    %v1277 = vmul.f32 %v1176, 0.5
    %v1278 = vmul.f32 %v1246, 0.5
    %v1279 = vmul.f32 %v1180, 0.5
    %v1280 = vmul.f32 %v1182, 0.5
    %v1281 = vmul.f32 %v1251, 0.5
    %v1282 = vmul.f32 %v1184, 0.5
    %v1283 = vmul.f32 %v1186, 0.5
    %v1284 = vmul.f32 %v1254, 0.5
    %v1285 = vmul.f32 %v1190, 0.5
    %v1286 = vmul.f32 %v1192, 0.5
    %v1287 = vmul.f32 %v1259, 0.5
    %v1288 = vmul.f32 %v1194, 0.5
    %v1289 = vmul.f32 %v1196, 0.5
    %v1290 = vmul.f32 %v1262, 0.5
    %v1291 = vmul.f32 %v1200, 0.5
    %v1292 = vmul.f32 %v1202, 0.5
    %v1293 = vmul.f32 %v1267, 0.5
    %v1294 = vmul.f32 %v1204, 0.5
    %v1295 = vmul.f32 %v1206, 0.5
    %v1296 = vmul.f32 %v1270, 0.5
    %v1297 = vmul.f32 %v1170, %v1170
    %v1298 = vmul.f32 %v1172, %v1172
    %v1299 = vmul.f32 %v1243, %v1243
    %v1300 = vmul.f32 %v1174, %v1174
    %v1301 = vmul.f32 %v1176, %v1176
    %v1302 = vmul.f32 %v1246, %v1246
    %v1303 = vmul.f32 %v1180, %v1180
    %v1304 = vmul.f32 %v1182, %v1182
    %v1305 = vmul.f32 %v1251, %v1251
    %v1306 = vmul.f32 %v1184, %v1184
    %v1307 = vmul.f32 %v1186, %v1186
    %v1308 = vmul.f32 %v1254, %v1254
    %v1309 = vmul.f32 %v1190, %v1190
    %v1310 = vmul.f32 %v1192, %v1192
    %v1311 = vmul.f32 %v1259, %v1259
    %v1312 = vmul.f32 %v1194, %v1194
    %v1313 = vmul.f32 %v1196, %v1196
    %v1314 = vmul.f32 %v1262, %v1262
    %v1315 = vmul.f32 %v1200, %v1200
    %v1316 = vmul.f32 %v1202, %v1202
    %v1317 = vmul.f32 %v1267, %v1267
    %v1318 = vmul.f32 %v1204, %v1204
    %v1319 = vmul.f32 %v1206, %v1206
    %v1320 = vmul.f32 %v1270, %v1270
    %v1321 = vmul.f32 %v1297, %v1170
    %v1322 = vmul.f32 %v1298, %v1172
    %v1323 = vmul.f32 %v1299, %v1243
    %v1324 = vmul.f32 %v1300, %v1174
    %v1325 = vmul.f32 %v1301, %v1176
    %v1326 = vmul.f32 %v1302, %v1246
    %v1327 = vmul.f32 %v1303, %v1180
    %v1328 = vmul.f32 %v1304, %v1182
    %v1329 = vmul.f32 %v1305, %v1251
    %v1330 = vmul.f32 %v1306, %v1184
    %v1331 = vmul.f32 %v1307, %v1186
    %v1332 = vmul.f32 %v1308, %v1254
    %v1333 = vmul.f32 %v1309, %v1190
    %v1334 = vmul.f32 %v1310, %v1192
    %v1335 = vmul.f32 %v1311, %v1259
    %v1336 = vmul.f32 %v1312, %v1194
    %v1337 = vmul.f32 %v1313, %v1196
    %v1338 = vmul.f32 %v1314, %v1262
    %v1339 = vmul.f32 %v1315, %v1200
    %v1340 = vmul.f32 %v1316, %v1202
    %v1341 = vmul.f32 %v1317, %v1267
    %v1342 = vmul.f32 %v1318, %v1204
    %v1343 = vmul.f32 %v1319, %v1206
    %v1344 = vmul.f32 %v1320, %v1270
    %v1345 = vmul.f32 %v1321, 0.044715
    %v1346 = vmul.f32 %v1322, 0.044715
    %v1347 = vmul.f32 %v1323, 0.044715
    %v1348 = vmul.f32 %v1324, 0.044715
    %v1349 = vmul.f32 %v1325, 0.044715
    %v1350 = vmul.f32 %v1326, 0.044715
    %v1351 = vmul.f32 %v1327, 0.044715
    %v1352 = vmul.f32 %v1328, 0.044715
    %v1353 = vmul.f32 %v1329, 0.044715
    %v1354 = vmul.f32 %v1330, 0.044715
    %v1355 = vmul.f32 %v1331, 0.044715
    %v1356 = vmul.f32 %v1332, 0.044715
    %v1357 = vmul.f32 %v1333, 0.044715
    %v1358 = vmul.f32 %v1334, 0.044715
    %v1359 = vmul.f32 %v1335, 0.044715
    %v1360 = vmul.f32 %v1336, 0.044715
    %v1361 = vmul.f32 %v1337, 0.044715
    %v1362 = vmul.f32 %v1338, 0.044715
    %v1363 = vmul.f32 %v1339, 0.044715
    %v1364 = vmul.f32 %v1340, 0.044715
    %v1365 = vmul.f32 %v1341, 0.044715
    %v1366 = vmul.f32 %v1342, 0.044715
    %v1367 = vmul.f32 %v1343, 0.044715
    %v1368 = vmul.f32 %v1344, 0.044715
    %v1369 = vadd.f32 %v1170, %v1345
    %v1370 = vadd.f32 %v1172, %v1346
    %v1371 = vadd.f32 %v1243, %v1347
    %v1372 = vadd.f32 %v1174, %v1348
    %v1373 = vadd.f32 %v1176, %v1349
    %v1374 = vadd.f32 %v1246, %v1350
    %v1375 = vadd.f32 %v1180, %v1351
    %v1376 = vadd.f32 %v1182, %v1352
    %v1377 = vadd.f32 %v1251, %v1353
    %v1378 = vadd.f32 %v1184, %v1354
    %v1379 = vadd.f32 %v1186, %v1355
    %v1380 = vadd.f32 %v1254, %v1356
    %v1381 = vadd.f32 %v1190, %v1357
    %v1382 = vadd.f32 %v1192, %v1358
    %v1383 = vadd.f32 %v1259, %v1359
    %v1384 = vadd.f32 %v1194, %v1360
    %v1385 = vadd.f32 %v1196, %v1361
    %v1386 = vadd.f32 %v1262, %v1362
    %v1387 = vadd.f32 %v1200, %v1363
    %v1388 = vadd.f32 %v1202, %v1364
    %v1389 = vadd.f32 %v1267, %v1365
    %v1390 = vadd.f32 %v1204, %v1366
    %v1391 = vadd.f32 %v1206, %v1367
    %v1392 = vadd.f32 %v1270, %v1368
    %v1393 = vmul.f32 %v1369, 0.7978846
    %v1394 = vmul.f32 %v1370, 0.7978846
    %v1395 = vmul.f32 %v1371, 0.7978846
    %v1396 = vmul.f32 %v1372, 0.7978846
    %v1397 = vmul.f32 %v1373, 0.7978846
    %v1398 = vmul.f32 %v1374, 0.7978846
    %v1399 = vmul.f32 %v1375, 0.7978846
    %v1400 = vmul.f32 %v1376, 0.7978846
    %v1401 = vmul.f32 %v1377, 0.7978846
    %v1402 = vmul.f32 %v1378, 0.7978846
    %v1403 = vmul.f32 %v1379, 0.7978846
    %v1404 = vmul.f32 %v1380, 0.7978846
    %v1405 = vmul.f32 %v1381, 0.7978846
    %v1406 = vmul.f32 %v1382, 0.7978846
    %v1407 = vmul.f32 %v1383, 0.7978846
    %v1408 = vmul.f32 %v1384, 0.7978846
    %v1409 = vmul.f32 %v1385, 0.7978846
    %v1410 = vmul.f32 %v1386, 0.7978846
    %v1411 = vmul.f32 %v1387, 0.7978846
    %v1412 = vmul.f32 %v1388, 0.7978846
    %v1413 = vmul.f32 %v1389, 0.7978846
    %v1414 = vmul.f32 %v1390, 0.7978846
    %v1415 = vmul.f32 %v1391, 0.7978846
    %v1416 = vmul.f32 %v1392, 0.7978846
    %v1417 = vtanh.pop %v1393
    %v1418 = vtanh.pop %v1394
    %v1419 = vtanh.pop %v1395
    %v1420 = vtanh.pop %v1396
    %v1421 = vtanh.pop %v1397
    %v1422 = vtanh.pop %v1398
    %v1423 = vtanh.pop %v1399
    %v1424 = vtanh.pop %v1400
    %v1425 = vtanh.pop %v1401
    %v1426 = vtanh.pop %v1402
    %v1427 = vtanh.pop %v1403
    %v1428 = vtanh.pop %v1404
    %v1429 = vtanh.pop %v1405
    %v1430 = vtanh.pop %v1406
    %v1431 = vtanh.pop %v1407
    %v1432 = vtanh.pop %v1408
    %v1433 = vtanh.pop %v1409
    %v1434 = vtanh.pop %v1410
    %v1435 = vtanh.pop %v1411
    %v1436 = vtanh.pop %v1412
    %v1437 = vtanh.pop %v1413
    %v1438 = vtanh.pop %v1414
    %v1439 = vtanh.pop %v1415
    %v1440 = vtanh.pop %v1416
    %v1441 = vadd.f32 %v1417, 1.0
    %v1442 = vadd.f32 %v1418, 1.0
    %v1443 = vadd.f32 %v1419, 1.0
    %v1444 = vadd.f32 %v1420, 1.0
    %v1445 = vadd.f32 %v1421, 1.0
    %v1446 = vadd.f32 %v1422, 1.0
    %v1447 = vadd.f32 %v1423, 1.0
    %v1448 = vadd.f32 %v1424, 1.0
    %v1449 = vadd.f32 %v1425, 1.0
    %v1450 = vadd.f32 %v1426, 1.0
    %v1451 = vadd.f32 %v1427, 1.0
    %v1452 = vadd.f32 %v1428, 1.0
    %v1453 = vadd.f32 %v1429, 1.0
    %v1454 = vadd.f32 %v1430, 1.0
    %v1455 = vadd.f32 %v1431, 1.0
    %v1456 = vadd.f32 %v1432, 1.0
    %v1457 = vadd.f32 %v1433, 1.0
    %v1458 = vadd.f32 %v1434, 1.0
    %v1459 = vadd.f32 %v1435, 1.0
    %v1460 = vadd.f32 %v1436, 1.0
    %v1461 = vadd.f32 %v1437, 1.0
    %v1462 = vadd.f32 %v1438, 1.0
    %v1463 = vadd.f32 %v1439, 1.0
    %v1464 = vadd.f32 %v1440, 1.0
    %v1465 = vmul.f32 %v1273, %v1441
    %v1466 = vmul.f32 %v1274, %v1442
    %v1467 = vmul.f32 %v1275, %v1443
    %v1468 = vmul.f32 %v1276, %v1444
    %v1469 = vmul.f32 %v1277, %v1445
    %v1470 = vmul.f32 %v1278, %v1446
    %v1471 = vmul.f32 %v1279, %v1447
    %v1472 = vmul.f32 %v1280, %v1448
    %v1473 = vmul.f32 %v1281, %v1449
    %v1474 = vmul.f32 %v1282, %v1450
    %v1475 = vmul.f32 %v1283, %v1451
    %v1476 = vmul.f32 %v1284, %v1452
    %v1477 = vmul.f32 %v1285, %v1453
    %v1478 = vmul.f32 %v1286, %v1454
    %v1479 = vmul.f32 %v1287, %v1455
    %v1480 = vmul.f32 %v1288, %v1456
    %v1481 = vmul.f32 %v1289, %v1457
    %v1482 = vmul.f32 %v1290, %v1458
    %v1483 = vmul.f32 %v1291, %v1459
    %v1484 = vmul.f32 %v1292, %v1460
    %v1485 = vmul.f32 %v1293, %v1461
    %v1486 = vmul.f32 %v1294, %v1462
    %v1487 = vmul.f32 %v1295, %v1463
    %v1488 = vmul.f32 %v1296, %v1464
    %v1489 = vld [vmem:[#allocation7 + $0x120] sm:$0xf]
    %v1490 = vld [vmem:[#allocation7 + $0x138] sm:$0xf]
    %v1491 = vld [vmem:[#allocation7 + $0x150] sm:$0xf]
    %v1492 = vld [vmem:[#allocation7 + $0x168] sm:$0xf]
    %v1493 = vld [vmem:[#allocation7 + $0x180] sm:$0xf]
    %v1494 = vld [vmem:[#allocation7 + $0x198] sm:$0xf]
    %v1495 = vld [vmem:[#allocation7 + $0x1b0] sm:$0xf]
    %v1496 = vld [vmem:[#allocation7 + $0x1c8] sm:$0xf]
    %v1497 = vld [vmem:[#allocation7 + $0x1e0] sm:$0xf]
    %v1498 = vld [vmem:[#allocation7 + $0x1f8] sm:$0xf]
    %v1499 = vld [vmem:[#allocation7 + $0x210] sm:$0xf]
    %v1500 = vld [vmem:[#allocation7 + $0x228] sm:$0xf]
    %v1501 = vld [vmem:[#allocation7 + $0x240] sm:$0xf]
    %v1502 = vld [vmem:[#allocation7 + $0x258] sm:$0xf]
    %v1503 = vld [vmem:[#allocation7 + $0x270] sm:$0xf]
    %v1504 = vld [vmem:[#allocation7 + $0x288] sm:$0xf]
    %v1505 = vld [vmem:[#allocation6 + $0x450] sm:$0xff]
    %v1506 = vld [vmem:[#allocation6 + $0x458] sm:$0xff]
    %v1507 = vld [vmem:[#allocation6 + $0x460] sm:$0xff]
    %v1508 = vld [vmem:[#allocation6 + $0x480] sm:$0xff]
    %v1509 = vld [vmem:[#allocation6 + $0x488] sm:$0xff]
    %v1510 = vld [vmem:[#allocation6 + $0x490] sm:$0xff]
    %v1511 = vld [vmem:[#allocation6 + $0x4b0] sm:$0xff]
    %v1512 = vld [vmem:[#allocation6 + $0x4b8] sm:$0xff]
    %v1513 = vld [vmem:[#allocation6 + $0x4c0] sm:$0xff]
    %v1514 = vld [vmem:[#allocation6 + $0x4e0] sm:$0xff]
    %v1515 = vld [vmem:[#allocation6 + $0x4e8] sm:$0xff]
    %v1516 = vld [vmem:[#allocation6 + $0x4f0] sm:$0xff]
    %v1517 = vld [vmem:[#allocation6 + $0x510] sm:$0xff]
    %v1518 = vld [vmem:[#allocation6 + $0x518] sm:$0xff]
    %v1519 = vld [vmem:[#allocation6 + $0x520] sm:$0xff]
    %v1520 = vld [vmem:[#allocation6 + $0x540] sm:$0xff]
    %v1521 = vld [vmem:[#allocation6 + $0x548] sm:$0xff]
    %v1522 = vld [vmem:[#allocation6 + $0x550] sm:$0xff]
    %v1523 = vld [vmem:[#allocation6 + $0x570] sm:$0xff]
    %v1524 = vld [vmem:[#allocation6 + $0x578] sm:$0xff]
    %v1525 = vld [vmem:[#allocation6 + $0x580] sm:$0xff]
    %v1526 = vld [vmem:[#allocation6 + $0x5a0] sm:$0xff]
    %v1527 = vld [vmem:[#allocation6 + $0x5a8] sm:$0xff]
    %v1528 = vld [vmem:[#allocation6 + $0x5b0] sm:$0xff]
    %v1529 = vld [vmem:[#allocation6 + $0x5d0] sm:$0xff]
    %v1530 = vld [vmem:[#allocation6 + $0x5d8] sm:$0xff]
    %v1531 = vld [vmem:[#allocation6 + $0x5e0] sm:$0xff]
    %v1532 = vld [vmem:[#allocation6 + $0x600] sm:$0xff]
    %v1533 = vld [vmem:[#allocation6 + $0x608] sm:$0xff]
    %v1534 = vld [vmem:[#allocation6 + $0x610] sm:$0xff]
    %v1535 = vld [vmem:[#allocation6 + $0x630] sm:$0xff]
    %v1536 = vld [vmem:[#allocation6 + $0x638] sm:$0xff]
    %v1537 = vld [vmem:[#allocation6 + $0x640] sm:$0xff]
    %v1538 = vld [vmem:[#allocation6 + $0x660] sm:$0xff]
    %v1539 = vld [vmem:[#allocation6 + $0x668] sm:$0xff]
    %v1540 = vld [vmem:[#allocation6 + $0x670] sm:$0xff]
    %v1541 = vld [vmem:[#allocation6 + $0x690] sm:$0xff]
    %v1542 = vld [vmem:[#allocation6 + $0x698] sm:$0xff]
    %v1543 = vld [vmem:[#allocation6 + $0x6a0] sm:$0xff]
    %v1544 = vld [vmem:[#allocation6 + $0x6c0] sm:$0xff]
    %v1545 = vld [vmem:[#allocation6 + $0x6c8] sm:$0xff]
    %v1546 = vld [vmem:[#allocation6 + $0x6d0] sm:$0xff]
    %v1547 = vld [vmem:[#allocation6 + $0x6f0] sm:$0xff]
    %v1548 = vld [vmem:[#allocation6 + $0x6f8] sm:$0xff]
    %v1549 = vld [vmem:[#allocation6 + $0x700] sm:$0xff]
    %v1550 = vld [vmem:[#allocation6 + $0x720] sm:$0xff]
    %v1551 = vld [vmem:[#allocation6 + $0x728] sm:$0xff]
    %v1552 = vld [vmem:[#allocation6 + $0x730] sm:$0xff]
    %v1553 = vpack.c.bf16 %v1468, %v1465
    %v1554 = vpack.c.bf16 %v1469, %v1466
    %v1555 = vpack.c.bf16 %v1470, %v1467
    %v1556 = vpack.c.bf16 %v1474, %v1471
    %v1557 = vpack.c.bf16 %v1475, %v1472
    %v1558 = vpack.c.bf16 %v1476, %v1473
    %v1559 = vpack.c.bf16 %v1480, %v1477
    %v1560 = vpack.c.bf16 %v1481, %v1478
    %v1561 = vpack.c.bf16 %v1482, %v1479
    %v1562 = vpack.c.bf16 %v1486, %v1483
    %v1563 = vpack.c.bf16 %v1487, %v1484
    %v1564 = vpack.c.bf16 %v1488, %v1485
    %v1581 = vunpack.c.l.b16 %v1489
    %v1582 = vunpack.c.l.b16 %v1490
    %v1583 = vunpack.c.l.b16 %v1491
    %v1584 = vunpack.c.l.b16 %v1492
    %v1585 = vunpack.c.l.b16 %v1493
    %v1586 = vunpack.c.l.b16 %v1494
    %v1587 = vunpack.c.l.b16 %v1495
    %v1588 = vunpack.c.l.b16 %v1496
    %v1589 = vunpack.c.l.b16 %v1497
    %v1590 = vunpack.c.l.b16 %v1498
    %v1591 = vunpack.c.l.b16 %v1499
    %v1592 = vunpack.c.l.b16 %v1500
    %v1593 = vunpack.c.l.b16 %v1501
    %v1594 = vunpack.c.l.b16 %v1502
    %v1595 = vunpack.c.l.b16 %v1503
    %v1596 = vunpack.c.l.b16 %v1504
    %v1597 = vpack.c.b16 %v1582, %v1581
    %v1598 = vpack.c.b16 %v1584, %v1583
    %v1599 = vpack.c.b16 %v1586, %v1585
    %v1600 = vpack.c.b16 %v1588, %v1587
    %v1601 = vpack.c.b16 %v1590, %v1589
    %v1602 = vpack.c.b16 %v1592, %v1591
    %v1603 = vpack.c.b16 %v1594, %v1593
    %v1604 = vpack.c.b16 %v1596, %v1595
    %vm1605 = vcmask 523264
    %v1607 = vsel %vm1605, %v1597, 0
    %v1610 = vsel %vm1605, %v1598, 0
    %v1613 = vsel %vm1605, %v1599, 0
    %v1616 = vsel %vm1605, %v1600, 0
    %v1619 = vsel %vm1605, %v1601, 0
    %v1622 = vsel %vm1605, %v1602, 0
    %v1625 = vsel %vm1605, %v1603, 0
    %v1628 = vsel %vm1605, %v1604, 0
    %1630 = vmatprep.subr.bf16.mxu0 %v1554
    %1631 = vmatpush1.bf16.msra.mxu0 %v1553
    %1632 = vmatprep.subr.bf16.mxu0 %v1557
    %1633 = vmatpush1.bf16.msra.mxu0 %v1556
    %1634 = vmatprep.subr.bf16.mxu0 %v1560
    %1635 = vmatpush1.bf16.msra.mxu0 %v1559
    %1636 = vmatprep.subr.bf16.mxu0 %v1563
    %1637 = vmatpush1.bf16.msra.mxu0 %v1562
    %1638 = vmatprep.subr.bf16.mxu0 0
    %1639 = vmatpush1.bf16.msra.mxu0 0
    %1640 = vmatprep.subr.bf16.mxu0 0
    %1641 = vmatpush1.bf16.msra.mxu0 0
    %1642 = vmatprep.subr.bf16.mxu0 0
    %1643 = vmatpush1.bf16.msra.mxu0 0
    %1644 = vmatprep.subr.bf16.mxu0 0
    %1645 = vmatpush1.bf16.msra.mxu0 0
    %1646 = vmatprep.subr.bf16.mxu0 0
    %1647 = vmatpush1.bf16.msra.mxu0 0
    %1648 = vmatprep.subr.bf16.mxu0 0
    %1649 = vmatpush1.bf16.msra.mxu0 0
    %1650 = vmatprep.subr.bf16.mxu0 0
    %1651 = vmatpush1.bf16.msra.mxu0 0
    %1652 = vmatprep.subr.bf16.mxu0 0
    %1653 = vmatpush1.bf16.msra.mxu0 0
    %1654 = vmatprep.subr.bf16.mxu0 0
    %1655 = vmatpush1.bf16.msra.mxu0 0
    %1656 = vmatprep.subr.bf16.mxu0 0
    %1657 = vmatpush1.bf16.msra.mxu0 0
    %1658 = vmatprep.subr.bf16.mxu0 0
    %1659 = vmatpush1.bf16.msra.mxu0 0
    %1660 = vmatprep.subr.bf16.mxu0 0
    %1661 = vmatpush1.bf16.msra.mxu0 0
    %1662 = vmatprep.mubr.bf16.mxu0 0
    %1663 = vmatmul.mubr.bf16.gmra.mrb[0].mxu0 %v1607
    %v1664 = vpop.f32.mrb[0].mxu0
    %v1665 = vadd.f32 %v1505, %v1664
    %v1666 = vpop.f32.mrb[0].mxu0
    %v1667 = vadd.f32 %v1506, %v1666
    %v1668 = vpop.f32.mrb[0].mxu0
    %v1669 = vadd.f32 %v1508, %v1668
    %v1670 = vpop.f32.mrb[0].mxu0
    %v1671 = vadd.f32 %v1509, %v1670
    %1672 = vmatprep.mubr.bf16.mxu0 0
    %1673 = vmatmul.mubr.bf16.gmra.mrb[0].mxu0 %v1610
    %v1674 = vpop.f32.mrb[0].mxu0
    %v1675 = vadd.f32 %v1511, %v1674
    %v1676 = vpop.f32.mrb[0].mxu0
    %v1677 = vadd.f32 %v1512, %v1676
    %v1678 = vpop.f32.mrb[0].mxu0
    %v1679 = vadd.f32 %v1514, %v1678
    %v1680 = vpop.f32.mrb[0].mxu0
    %v1681 = vadd.f32 %v1515, %v1680
    %1682 = vmatprep.mubr.bf16.mxu0 0
    %1683 = vmatmul.mubr.bf16.gmra.mrb[0].mxu0 %v1613
    %v1684 = vpop.f32.mrb[0].mxu0
    %v1685 = vadd.f32 %v1517, %v1684
    %v1686 = vpop.f32.mrb[0].mxu0
    %v1687 = vadd.f32 %v1518, %v1686
    %v1688 = vpop.f32.mrb[0].mxu0
    %v1689 = vadd.f32 %v1520, %v1688
    %v1690 = vpop.f32.mrb[0].mxu0
    %v1691 = vadd.f32 %v1521, %v1690
    %1692 = vmatprep.mubr.bf16.mxu0 0
    %1693 = vmatmul.mubr.bf16.gmra.mrb[0].mxu0 %v1616
    %v1694 = vpop.f32.mrb[0].mxu0
    %v1695 = vadd.f32 %v1523, %v1694
    %v1696 = vpop.f32.mrb[0].mxu0
    %v1697 = vadd.f32 %v1524, %v1696
    %v1698 = vpop.f32.mrb[0].mxu0
    %v1699 = vadd.f32 %v1526, %v1698
    %v1700 = vpop.f32.mrb[0].mxu0
    %v1701 = vadd.f32 %v1527, %v1700
    %1702 = vmatprep.mubr.bf16.mxu0 0
    %1703 = vmatmul.mubr.bf16.gmra.mrb[0].mxu0 %v1619
    %v1704 = vpop.f32.mrb[0].mxu0
    %v1705 = vadd.f32 %v1529, %v1704
    %v1706 = vpop.f32.mrb[0].mxu0
    %v1707 = vadd.f32 %v1530, %v1706
    %v1708 = vpop.f32.mrb[0].mxu0
    %v1709 = vadd.f32 %v1532, %v1708
    %v1710 = vpop.f32.mrb[0].mxu0
    %v1711 = vadd.f32 %v1533, %v1710
    %1712 = vmatprep.mubr.bf16.mxu0 0
    %1713 = vmatmul.mubr.bf16.gmra.mrb[0].mxu0 %v1622
    %v1714 = vpop.f32.mrb[0].mxu0
    %v1715 = vadd.f32 %v1535, %v1714
    %v1716 = vpop.f32.mrb[0].mxu0
    %v1717 = vadd.f32 %v1536, %v1716
    %v1718 = vpop.f32.mrb[0].mxu0
    %v1719 = vadd.f32 %v1538, %v1718
    %v1720 = vpop.f32.mrb[0].mxu0
    %v1721 = vadd.f32 %v1539, %v1720
    %1722 = vmatprep.mubr.bf16.mxu0 0
    %1723 = vmatmul.mubr.bf16.gmra.mrb[0].mxu0 %v1625
    %v1724 = vpop.f32.mrb[0].mxu0
    %v1725 = vadd.f32 %v1541, %v1724
    %v1726 = vpop.f32.mrb[0].mxu0
    %v1727 = vadd.f32 %v1542, %v1726
    %v1728 = vpop.f32.mrb[0].mxu0
    %v1729 = vadd.f32 %v1544, %v1728
    %v1730 = vpop.f32.mrb[0].mxu0
    %v1731 = vadd.f32 %v1545, %v1730
    %1732 = vmatprep.mubr.bf16.mxu0 0
    %1733 = vmatmul.mubr.bf16.gmra.mrb[0].mxu0 %v1628
    %v1734 = vpop.f32.mrb[0].mxu0
    %v1735 = vadd.f32 %v1547, %v1734
    %v1736 = vpop.f32.mrb[0].mxu0
    %v1737 = vadd.f32 %v1548, %v1736
    %v1738 = vpop.f32.mrb[0].mxu0
    %v1739 = vadd.f32 %v1550, %v1738
    %v1740 = vpop.f32.mrb[0].mxu0
    %v1741 = vadd.f32 %v1551, %v1740
    %1742 = vdwg.mxu0
    %1743 = vmatprep.subr.bf16.mxu0 0
    %1744 = vmatpush1.bf16.msra.mxu0 %v1555
    %1745 = vmatprep.subr.bf16.mxu0 0
    %1746 = vmatpush1.bf16.msra.mxu0 %v1558
    %1747 = vmatprep.subr.bf16.mxu0 0
    %1748 = vmatpush1.bf16.msra.mxu0 %v1561
    %1749 = vmatprep.subr.bf16.mxu0 0
    %1750 = vmatpush1.bf16.msra.mxu0 %v1564
    %1751 = vmatprep.subr.bf16.mxu0 0
    %1752 = vmatpush1.bf16.msra.mxu0 0
    %1753 = vmatprep.subr.bf16.mxu0 0
    %1754 = vmatpush1.bf16.msra.mxu0 0
    %1755 = vmatprep.subr.bf16.mxu0 0
    %1756 = vmatpush1.bf16.msra.mxu0 0
    %1757 = vmatprep.subr.bf16.mxu0 0
    %1758 = vmatpush1.bf16.msra.mxu0 0
    %1759 = vmatprep.subr.bf16.mxu0 0
    %1760 = vmatpush1.bf16.msra.mxu0 0
    %1761 = vmatprep.subr.bf16.mxu0 0
    %1762 = vmatpush1.bf16.msra.mxu0 0
    %1763 = vmatprep.subr.bf16.mxu0 0
    %1764 = vmatpush1.bf16.msra.mxu0 0
    %1765 = vmatprep.subr.bf16.mxu0 0
    %1766 = vmatpush1.bf16.msra.mxu0 0
    %1767 = vmatprep.subr.bf16.mxu0 0
    %1768 = vmatpush1.bf16.msra.mxu0 0
    %1769 = vmatprep.subr.bf16.mxu0 0
    %1770 = vmatpush1.bf16.msra.mxu0 0
    %1771 = vmatprep.subr.bf16.mxu0 0
    %1772 = vmatpush1.bf16.msra.mxu0 0
    %1773 = vmatprep.subr.bf16.mxu0 0
    %1774 = vmatpush1.bf16.msra.mxu0 0
    %1775 = vmatprep.mubr.bf16.mxu0 0
    %1776 = vmatmul.mubr.bf16.gmra.mrb[0].mxu0 %v1607
    %v1777 = vpop.f32.mrb[0].mxu0
    %v1778 = vadd.f32 %v1507, %v1777
    %v1779 = vpop.f32.mrb[0].mxu0
    %v1780 = vpop.f32.mrb[0].mxu0
    %v1781 = vadd.f32 %v1510, %v1780
    %v1782 = vpop.f32.mrb[0].mxu0
    %1783 = vmatprep.mubr.bf16.mxu0 0
    %1784 = vmatmul.mubr.bf16.gmra.mrb[0].mxu0 %v1610
    %v1785 = vpop.f32.mrb[0].mxu0
    %v1786 = vadd.f32 %v1513, %v1785
    %v1787 = vpop.f32.mrb[0].mxu0
    %v1788 = vpop.f32.mrb[0].mxu0
    %v1789 = vadd.f32 %v1516, %v1788
    %v1790 = vpop.f32.mrb[0].mxu0
    %1791 = vmatprep.mubr.bf16.mxu0 0
    %1792 = vmatmul.mubr.bf16.gmra.mrb[0].mxu0 %v1613
    %v1793 = vpop.f32.mrb[0].mxu0
    %v1794 = vadd.f32 %v1519, %v1793
    %v1795 = vpop.f32.mrb[0].mxu0
    %v1796 = vpop.f32.mrb[0].mxu0
    %v1797 = vadd.f32 %v1522, %v1796
    %v1798 = vpop.f32.mrb[0].mxu0
    %1799 = vmatprep.mubr.bf16.mxu0 0
    %1800 = vmatmul.mubr.bf16.gmra.mrb[0].mxu0 %v1616
    %v1801 = vpop.f32.mrb[0].mxu0
    %v1802 = vadd.f32 %v1525, %v1801
    %v1803 = vpop.f32.mrb[0].mxu0
    %v1804 = vpop.f32.mrb[0].mxu0
    %v1805 = vadd.f32 %v1528, %v1804
    %v1806 = vpop.f32.mrb[0].mxu0
    %1807 = vmatprep.mubr.bf16.mxu0 0
    %1808 = vmatmul.mubr.bf16.gmra.mrb[0].mxu0 %v1619
    %v1809 = vpop.f32.mrb[0].mxu0
    %v1810 = vadd.f32 %v1531, %v1809
    %v1811 = vpop.f32.mrb[0].mxu0
    %v1812 = vpop.f32.mrb[0].mxu0
    %v1813 = vadd.f32 %v1534, %v1812
    %v1814 = vpop.f32.mrb[0].mxu0
    %1815 = vmatprep.mubr.bf16.mxu0 0
    %1816 = vmatmul.mubr.bf16.gmra.mrb[0].mxu0 %v1622
    %v1817 = vpop.f32.mrb[0].mxu0
    %v1818 = vadd.f32 %v1537, %v1817
    %v1819 = vpop.f32.mrb[0].mxu0
    %v1820 = vpop.f32.mrb[0].mxu0
    %v1821 = vadd.f32 %v1540, %v1820
    %v1822 = vpop.f32.mrb[0].mxu0
    %1823 = vmatprep.mubr.bf16.mxu0 0
    %1824 = vmatmul.mubr.bf16.gmra.mrb[0].mxu0 %v1625
    %v1825 = vpop.f32.mrb[0].mxu0
    %v1826 = vadd.f32 %v1543, %v1825
    %v1827 = vpop.f32.mrb[0].mxu0
    %v1828 = vpop.f32.mrb[0].mxu0
    %v1829 = vadd.f32 %v1546, %v1828
    %v1830 = vpop.f32.mrb[0].mxu0
    %1831 = vmatprep.mubr.bf16.mxu0 0
    %1832 = vmatmul.mubr.bf16.gmra.mrb[0].mxu0 %v1628
    %v1833 = vpop.f32.mrb[0].mxu0
    %v1834 = vadd.f32 %v1549, %v1833
    %v1835 = vpop.f32.mrb[0].mxu0
    %v1836 = vpop.f32.mrb[0].mxu0
    %v1837 = vadd.f32 %v1552, %v1836
    %v1838 = vpop.f32.mrb[0].mxu0
    %1839 = vdwg.mxu0
    %v1840 = vmul.f32 %v1665, 0.5
    %v1841 = vmul.f32 %v1667, 0.5
    %v1842 = vmul.f32 %v1778, 0.5
    %v1843 = vmul.f32 %v1669, 0.5
    %v1844 = vmul.f32 %v1671, 0.5
    %v1845 = vmul.f32 %v1781, 0.5
    %v1846 = vmul.f32 %v1675, 0.5
    %v1847 = vmul.f32 %v1677, 0.5
    %v1848 = vmul.f32 %v1786, 0.5
    %v1849 = vmul.f32 %v1679, 0.5
    %v1850 = vmul.f32 %v1681, 0.5
    %v1851 = vmul.f32 %v1789, 0.5
    %v1852 = vmul.f32 %v1685, 0.5
    %v1853 = vmul.f32 %v1687, 0.5
    %v1854 = vmul.f32 %v1794, 0.5
    %v1855 = vmul.f32 %v1689, 0.5
    %v1856 = vmul.f32 %v1691, 0.5
    %v1857 = vmul.f32 %v1797, 0.5
    %v1858 = vmul.f32 %v1695, 0.5
    %v1859 = vmul.f32 %v1697, 0.5
    %v1860 = vmul.f32 %v1802, 0.5
    %v1861 = vmul.f32 %v1699, 0.5
    %v1862 = vmul.f32 %v1701, 0.5
    %v1863 = vmul.f32 %v1805, 0.5
    %v1864 = vmul.f32 %v1705, 0.5
    %v1865 = vmul.f32 %v1707, 0.5
    %v1866 = vmul.f32 %v1810, 0.5
    %v1867 = vmul.f32 %v1709, 0.5
    %v1868 = vmul.f32 %v1711, 0.5
    %v1869 = vmul.f32 %v1813, 0.5
    %v1870 = vmul.f32 %v1715, 0.5
    %v1871 = vmul.f32 %v1717, 0.5
    %v1872 = vmul.f32 %v1818, 0.5
    %v1873 = vmul.f32 %v1719, 0.5
    %v1874 = vmul.f32 %v1721, 0.5
    %v1875 = vmul.f32 %v1821, 0.5
    %v1876 = vmul.f32 %v1725, 0.5
    %v1877 = vmul.f32 %v1727, 0.5
    %v1878 = vmul.f32 %v1826, 0.5
    %v1879 = vmul.f32 %v1729, 0.5
    %v1880 = vmul.f32 %v1731, 0.5
    %v1881 = vmul.f32 %v1829, 0.5
    %v1882 = vmul.f32 %v1735, 0.5
    %v1883 = vmul.f32 %v1737, 0.5
    %v1884 = vmul.f32 %v1834, 0.5
    %v1885 = vmul.f32 %v1739, 0.5
    %v1886 = vmul.f32 %v1741, 0.5
    %v1887 = vmul.f32 %v1837, 0.5
    %v1888 = vmul.f32 %v1665, %v1665
    %v1889 = vmul.f32 %v1667, %v1667
    %v1890 = vmul.f32 %v1778, %v1778
    %v1891 = vmul.f32 %v1669, %v1669
    %v1892 = vmul.f32 %v1671, %v1671
    %v1893 = vmul.f32 %v1781, %v1781
    %v1894 = vmul.f32 %v1675, %v1675
    %v1895 = vmul.f32 %v1677, %v1677
    %v1896 = vmul.f32 %v1786, %v1786
    %v1897 = vmul.f32 %v1679, %v1679
    %v1898 = vmul.f32 %v1681, %v1681
    %v1899 = vmul.f32 %v1789, %v1789
    %v1900 = vmul.f32 %v1685, %v1685
    %v1901 = vmul.f32 %v1687, %v1687
    %v1902 = vmul.f32 %v1794, %v1794
    %v1903 = vmul.f32 %v1689, %v1689
    %v1904 = vmul.f32 %v1691, %v1691
    %v1905 = vmul.f32 %v1797, %v1797
    %v1906 = vmul.f32 %v1695, %v1695
    %v1907 = vmul.f32 %v1697, %v1697
    %v1908 = vmul.f32 %v1802, %v1802
    %v1909 = vmul.f32 %v1699, %v1699
    %v1910 = vmul.f32 %v1701, %v1701
    %v1911 = vmul.f32 %v1805, %v1805
    %v1912 = vmul.f32 %v1705, %v1705
    %v1913 = vmul.f32 %v1707, %v1707
    %v1914 = vmul.f32 %v1810, %v1810
    %v1915 = vmul.f32 %v1709, %v1709
    %v1916 = vmul.f32 %v1711, %v1711
    %v1917 = vmul.f32 %v1813, %v1813
    %v1918 = vmul.f32 %v1715, %v1715
    %v1919 = vmul.f32 %v1717, %v1717
    %v1920 = vmul.f32 %v1818, %v1818
    %v1921 = vmul.f32 %v1719, %v1719
    %v1922 = vmul.f32 %v1721, %v1721
    %v1923 = vmul.f32 %v1821, %v1821
    %v1924 = vmul.f32 %v1725, %v1725
    %v1925 = vmul.f32 %v1727, %v1727
    %v1926 = vmul.f32 %v1826, %v1826
    %v1927 = vmul.f32 %v1729, %v1729
    %v1928 = vmul.f32 %v1731, %v1731
    %v1929 = vmul.f32 %v1829, %v1829
    %v1930 = vmul.f32 %v1735, %v1735
    %v1931 = vmul.f32 %v1737, %v1737
    %v1932 = vmul.f32 %v1834, %v1834
    %v1933 = vmul.f32 %v1739, %v1739
    %v1934 = vmul.f32 %v1741, %v1741
    %v1935 = vmul.f32 %v1837, %v1837
    %v1936 = vmul.f32 %v1888, %v1665
    %v1937 = vmul.f32 %v1889, %v1667
    %v1938 = vmul.f32 %v1890, %v1778
    %v1939 = vmul.f32 %v1891, %v1669
    %v1940 = vmul.f32 %v1892, %v1671
    %v1941 = vmul.f32 %v1893, %v1781
    %v1942 = vmul.f32 %v1894, %v1675
    %v1943 = vmul.f32 %v1895, %v1677
    %v1944 = vmul.f32 %v1896, %v1786
    %v1945 = vmul.f32 %v1897, %v1679
    %v1946 = vmul.f32 %v1898, %v1681
    %v1947 = vmul.f32 %v1899, %v1789
    %v1948 = vmul.f32 %v1900, %v1685
    %v1949 = vmul.f32 %v1901, %v1687
    %v1950 = vmul.f32 %v1902, %v1794
    %v1951 = vmul.f32 %v1903, %v1689
    %v1952 = vmul.f32 %v1904, %v1691
    %v1953 = vmul.f32 %v1905, %v1797
    %v1954 = vmul.f32 %v1906, %v1695
    %v1955 = vmul.f32 %v1907, %v1697
    %v1956 = vmul.f32 %v1908, %v1802
    %v1957 = vmul.f32 %v1909, %v1699
    %v1958 = vmul.f32 %v1910, %v1701
    %v1959 = vmul.f32 %v1911, %v1805
    %v1960 = vmul.f32 %v1912, %v1705
    %v1961 = vmul.f32 %v1913, %v1707
    %v1962 = vmul.f32 %v1914, %v1810
    %v1963 = vmul.f32 %v1915, %v1709
    %v1964 = vmul.f32 %v1916, %v1711
    %v1965 = vmul.f32 %v1917, %v1813
    %v1966 = vmul.f32 %v1918, %v1715
    %v1967 = vmul.f32 %v1919, %v1717
    %v1968 = vmul.f32 %v1920, %v1818
    %v1969 = vmul.f32 %v1921, %v1719
    %v1970 = vmul.f32 %v1922, %v1721
    %v1971 = vmul.f32 %v1923, %v1821
    %v1972 = vmul.f32 %v1924, %v1725
    %v1973 = vmul.f32 %v1925, %v1727
    %v1974 = vmul.f32 %v1926, %v1826
    %v1975 = vmul.f32 %v1927, %v1729
    %v1976 = vmul.f32 %v1928, %v1731
    %v1977 = vmul.f32 %v1929, %v1829
    %v1978 = vmul.f32 %v1930, %v1735
    %v1979 = vmul.f32 %v1931, %v1737
    %v1980 = vmul.f32 %v1932, %v1834
    %v1981 = vmul.f32 %v1933, %v1739
    %v1982 = vmul.f32 %v1934, %v1741
    %v1983 = vmul.f32 %v1935, %v1837
    %v1984 = vmul.f32 %v1936, 0.044715
    %v1985 = vmul.f32 %v1937, 0.044715
    %v1986 = vmul.f32 %v1938, 0.044715
    %v1987 = vmul.f32 %v1939, 0.044715
    %v1988 = vmul.f32 %v1940, 0.044715
    %v1989 = vmul.f32 %v1941, 0.044715
    %v1990 = vmul.f32 %v1942, 0.044715
    %v1991 = vmul.f32 %v1943, 0.044715
    %v1992 = vmul.f32 %v1944, 0.044715
    %v1993 = vmul.f32 %v1945, 0.044715
    %v1994 = vmul.f32 %v1946, 0.044715
    %v1995 = vmul.f32 %v1947, 0.044715
    %v1996 = vmul.f32 %v1948, 0.044715
    %v1997 = vmul.f32 %v1949, 0.044715
    %v1998 = vmul.f32 %v1950, 0.044715
    %v1999 = vmul.f32 %v1951, 0.044715
    %v2000 = vmul.f32 %v1952, 0.044715
    %v2001 = vmul.f32 %v1953, 0.044715
    %v2002 = vmul.f32 %v1954, 0.044715
    %v2003 = vmul.f32 %v1955, 0.044715
    %v2004 = vmul.f32 %v1956, 0.044715
    %v2005 = vmul.f32 %v1957, 0.044715
    %v2006 = vmul.f32 %v1958, 0.044715
    %v2007 = vmul.f32 %v1959, 0.044715
    %v2008 = vmul.f32 %v1960, 0.044715
    %v2009 = vmul.f32 %v1961, 0.044715
    %v2010 = vmul.f32 %v1962, 0.044715
    %v2011 = vmul.f32 %v1963, 0.044715
    %v2012 = vmul.f32 %v1964, 0.044715
    %v2013 = vmul.f32 %v1965, 0.044715
    %v2014 = vmul.f32 %v1966, 0.044715
    %v2015 = vmul.f32 %v1967, 0.044715
    %v2016 = vmul.f32 %v1968, 0.044715
    %v2017 = vmul.f32 %v1969, 0.044715
    %v2018 = vmul.f32 %v1970, 0.044715
    %v2019 = vmul.f32 %v1971, 0.044715
    %v2020 = vmul.f32 %v1972, 0.044715
    %v2021 = vmul.f32 %v1973, 0.044715
    %v2022 = vmul.f32 %v1974, 0.044715
    %v2023 = vmul.f32 %v1975, 0.044715
    %v2024 = vmul.f32 %v1976, 0.044715
    %v2025 = vmul.f32 %v1977, 0.044715
    %v2026 = vmul.f32 %v1978, 0.044715
    %v2027 = vmul.f32 %v1979, 0.044715
    %v2028 = vmul.f32 %v1980, 0.044715
    %v2029 = vmul.f32 %v1981, 0.044715
    %v2030 = vmul.f32 %v1982, 0.044715
    %v2031 = vmul.f32 %v1983, 0.044715
    %v2032 = vadd.f32 %v1665, %v1984
    %v2033 = vadd.f32 %v1667, %v1985
    %v2034 = vadd.f32 %v1778, %v1986
    %v2035 = vadd.f32 %v1669, %v1987
    %v2036 = vadd.f32 %v1671, %v1988
    %v2037 = vadd.f32 %v1781, %v1989
    %v2038 = vadd.f32 %v1675, %v1990
    %v2039 = vadd.f32 %v1677, %v1991
    %v2040 = vadd.f32 %v1786, %v1992
    %v2041 = vadd.f32 %v1679, %v1993
    %v2042 = vadd.f32 %v1681, %v1994
    %v2043 = vadd.f32 %v1789, %v1995
    %v2044 = vadd.f32 %v1685, %v1996
    %v2045 = vadd.f32 %v1687, %v1997
    %v2046 = vadd.f32 %v1794, %v1998
    %v2047 = vadd.f32 %v1689, %v1999
    %v2048 = vadd.f32 %v1691, %v2000
    %v2049 = vadd.f32 %v1797, %v2001
    %v2050 = vadd.f32 %v1695, %v2002
    %v2051 = vadd.f32 %v1697, %v2003
    %v2052 = vadd.f32 %v1802, %v2004
    %v2053 = vadd.f32 %v1699, %v2005
    %v2054 = vadd.f32 %v1701, %v2006
    %v2055 = vadd.f32 %v1805, %v2007
    %v2056 = vadd.f32 %v1705, %v2008
    %v2057 = vadd.f32 %v1707, %v2009
    %v2058 = vadd.f32 %v1810, %v2010
    %v2059 = vadd.f32 %v1709, %v2011
    %v2060 = vadd.f32 %v1711, %v2012
    %v2061 = vadd.f32 %v1813, %v2013
    %v2062 = vadd.f32 %v1715, %v2014
    %v2063 = vadd.f32 %v1717, %v2015
    %v2064 = vadd.f32 %v1818, %v2016
    %v2065 = vadd.f32 %v1719, %v2017
    %v2066 = vadd.f32 %v1721, %v2018
    %v2067 = vadd.f32 %v1821, %v2019
    %v2068 = vadd.f32 %v1725, %v2020
    %v2069 = vadd.f32 %v1727, %v2021
    %v2070 = vadd.f32 %v1826, %v2022
    %v2071 = vadd.f32 %v1729, %v2023
    %v2072 = vadd.f32 %v1731, %v2024
    %v2073 = vadd.f32 %v1829, %v2025
    %v2074 = vadd.f32 %v1735, %v2026
    %v2075 = vadd.f32 %v1737, %v2027
    %v2076 = vadd.f32 %v1834, %v2028
    %v2077 = vadd.f32 %v1739, %v2029
    %v2078 = vadd.f32 %v1741, %v2030
    %v2079 = vadd.f32 %v1837, %v2031
    %v2080 = vmul.f32 %v2032, 0.7978846
    %v2081 = vmul.f32 %v2033, 0.7978846
    %v2082 = vmul.f32 %v2034, 0.7978846
    %v2083 = vmul.f32 %v2035, 0.7978846
    %v2084 = vmul.f32 %v2036, 0.7978846
    %v2085 = vmul.f32 %v2037, 0.7978846
    %v2086 = vmul.f32 %v2038, 0.7978846
    %v2087 = vmul.f32 %v2039, 0.7978846
    %v2088 = vmul.f32 %v2040, 0.7978846
    %v2089 = vmul.f32 %v2041, 0.7978846
    %v2090 = vmul.f32 %v2042, 0.7978846
    %v2091 = vmul.f32 %v2043, 0.7978846
    %v2092 = vmul.f32 %v2044, 0.7978846
    %v2093 = vmul.f32 %v2045, 0.7978846
    %v2094 = vmul.f32 %v2046, 0.7978846
    %v2095 = vmul.f32 %v2047, 0.7978846
    %v2096 = vmul.f32 %v2048, 0.7978846
    %v2097 = vmul.f32 %v2049, 0.7978846
    %v2098 = vmul.f32 %v2050, 0.7978846
    %v2099 = vmul.f32 %v2051, 0.7978846
    %v2100 = vmul.f32 %v2052, 0.7978846
    %v2101 = vmul.f32 %v2053, 0.7978846
    %v2102 = vmul.f32 %v2054, 0.7978846
    %v2103 = vmul.f32 %v2055, 0.7978846
    %v2104 = vmul.f32 %v2056, 0.7978846
    %v2105 = vmul.f32 %v2057, 0.7978846
    %v2106 = vmul.f32 %v2058, 0.7978846
    %v2107 = vmul.f32 %v2059, 0.7978846
    %v2108 = vmul.f32 %v2060, 0.7978846
    %v2109 = vmul.f32 %v2061, 0.7978846
    %v2110 = vmul.f32 %v2062, 0.7978846
    %v2111 = vmul.f32 %v2063, 0.7978846
    %v2112 = vmul.f32 %v2064, 0.7978846
    %v2113 = vmul.f32 %v2065, 0.7978846
    %v2114 = vmul.f32 %v2066, 0.7978846
    %v2115 = vmul.f32 %v2067, 0.7978846
    %v2116 = vmul.f32 %v2068, 0.7978846
    %v2117 = vmul.f32 %v2069, 0.7978846
    %v2118 = vmul.f32 %v2070, 0.7978846
    %v2119 = vmul.f32 %v2071, 0.7978846
    %v2120 = vmul.f32 %v2072, 0.7978846
    %v2121 = vmul.f32 %v2073, 0.7978846
    %v2122 = vmul.f32 %v2074, 0.7978846
    %v2123 = vmul.f32 %v2075, 0.7978846
    %v2124 = vmul.f32 %v2076, 0.7978846
    %v2125 = vmul.f32 %v2077, 0.7978846
    %v2126 = vmul.f32 %v2078, 0.7978846
    %v2127 = vmul.f32 %v2079, 0.7978846
    %v2128 = vtanh.pop %v2080
    %v2129 = vtanh.pop %v2081
    %v2130 = vtanh.pop %v2082
    %v2131 = vtanh.pop %v2083
    %v2132 = vtanh.pop %v2084
    %v2133 = vtanh.pop %v2085
    %v2134 = vtanh.pop %v2086
    %v2135 = vtanh.pop %v2087
    %v2136 = vtanh.pop %v2088
    %v2137 = vtanh.pop %v2089
    %v2138 = vtanh.pop %v2090
    %v2139 = vtanh.pop %v2091
    %v2140 = vtanh.pop %v2092
    %v2141 = vtanh.pop %v2093
    %v2142 = vtanh.pop %v2094
    %v2143 = vtanh.pop %v2095
    %v2144 = vtanh.pop %v2096
    %v2145 = vtanh.pop %v2097
    %v2146 = vtanh.pop %v2098
    %v2147 = vtanh.pop %v2099
    %v2148 = vtanh.pop %v2100
    %v2149 = vtanh.pop %v2101
    %v2150 = vtanh.pop %v2102
    %v2151 = vtanh.pop %v2103
    %v2152 = vtanh.pop %v2104
    %v2153 = vtanh.pop %v2105
    %v2154 = vtanh.pop %v2106
    %v2155 = vtanh.pop %v2107
    %v2156 = vtanh.pop %v2108
    %v2157 = vtanh.pop %v2109
    %v2158 = vtanh.pop %v2110
    %v2159 = vtanh.pop %v2111
    %v2160 = vtanh.pop %v2112
    %v2161 = vtanh.pop %v2113
    %v2162 = vtanh.pop %v2114
    %v2163 = vtanh.pop %v2115
    %v2164 = vtanh.pop %v2116
    %v2165 = vtanh.pop %v2117
    %v2166 = vtanh.pop %v2118
    %v2167 = vtanh.pop %v2119
    %v2168 = vtanh.pop %v2120
    %v2169 = vtanh.pop %v2121
    %v2170 = vtanh.pop %v2122
    %v2171 = vtanh.pop %v2123
    %v2172 = vtanh.pop %v2124
    %v2173 = vtanh.pop %v2125
    %v2174 = vtanh.pop %v2126
    %v2175 = vtanh.pop %v2127
    %v2176 = vadd.f32 %v2128, 1.0
    %v2177 = vadd.f32 %v2129, 1.0
    %v2178 = vadd.f32 %v2130, 1.0
    %v2179 = vadd.f32 %v2131, 1.0
    %v2180 = vadd.f32 %v2132, 1.0
    %v2181 = vadd.f32 %v2133, 1.0
    %v2182 = vadd.f32 %v2134, 1.0
    %v2183 = vadd.f32 %v2135, 1.0
    %v2184 = vadd.f32 %v2136, 1.0
    %v2185 = vadd.f32 %v2137, 1.0
    %v2186 = vadd.f32 %v2138, 1.0
    %v2187 = vadd.f32 %v2139, 1.0
    %v2188 = vadd.f32 %v2140, 1.0
    %v2189 = vadd.f32 %v2141, 1.0
    %v2190 = vadd.f32 %v2142, 1.0
    %v2191 = vadd.f32 %v2143, 1.0
    %v2192 = vadd.f32 %v2144, 1.0
    %v2193 = vadd.f32 %v2145, 1.0
    %v2194 = vadd.f32 %v2146, 1.0
    %v2195 = vadd.f32 %v2147, 1.0
    %v2196 = vadd.f32 %v2148, 1.0
    %v2197 = vadd.f32 %v2149, 1.0
    %v2198 = vadd.f32 %v2150, 1.0
    %v2199 = vadd.f32 %v2151, 1.0
    %v2200 = vadd.f32 %v2152, 1.0
    %v2201 = vadd.f32 %v2153, 1.0
    %v2202 = vadd.f32 %v2154, 1.0
    %v2203 = vadd.f32 %v2155, 1.0
    %v2204 = vadd.f32 %v2156, 1.0
    %v2205 = vadd.f32 %v2157, 1.0
    %v2206 = vadd.f32 %v2158, 1.0
    %v2207 = vadd.f32 %v2159, 1.0
    %v2208 = vadd.f32 %v2160, 1.0
    %v2209 = vadd.f32 %v2161, 1.0
    %v2210 = vadd.f32 %v2162, 1.0
    %v2211 = vadd.f32 %v2163, 1.0
    %v2212 = vadd.f32 %v2164, 1.0
    %v2213 = vadd.f32 %v2165, 1.0
    %v2214 = vadd.f32 %v2166, 1.0
    %v2215 = vadd.f32 %v2167, 1.0
    %v2216 = vadd.f32 %v2168, 1.0
    %v2217 = vadd.f32 %v2169, 1.0
    %v2218 = vadd.f32 %v2170, 1.0
    %v2219 = vadd.f32 %v2171, 1.0
    %v2220 = vadd.f32 %v2172, 1.0
    %v2221 = vadd.f32 %v2173, 1.0
    %v2222 = vadd.f32 %v2174, 1.0
    %v2223 = vadd.f32 %v2175, 1.0
    %v2224 = vmul.f32 %v1840, %v2176
    %v2225 = vmul.f32 %v1841, %v2177
    %v2226 = vmul.f32 %v1842, %v2178
    %v2227 = vmul.f32 %v1843, %v2179
    %v2228 = vmul.f32 %v1844, %v2180
    %v2229 = vmul.f32 %v1845, %v2181
    %v2230 = vmul.f32 %v1846, %v2182
    %v2231 = vmul.f32 %v1847, %v2183
    %v2232 = vmul.f32 %v1848, %v2184
    %v2233 = vmul.f32 %v1849, %v2185
    %v2234 = vmul.f32 %v1850, %v2186
    %v2235 = vmul.f32 %v1851, %v2187
    %v2236 = vmul.f32 %v1852, %v2188
    %v2237 = vmul.f32 %v1853, %v2189
    %v2238 = vmul.f32 %v1854, %v2190
    %v2239 = vmul.f32 %v1855, %v2191
    %v2240 = vmul.f32 %v1856, %v2192
    %v2241 = vmul.f32 %v1857, %v2193
    %v2242 = vmul.f32 %v1858, %v2194
    %v2243 = vmul.f32 %v1859, %v2195
    %v2244 = vmul.f32 %v1860, %v2196
    %v2245 = vmul.f32 %v1861, %v2197
    %v2246 = vmul.f32 %v1862, %v2198
    %v2247 = vmul.f32 %v1863, %v2199
    %v2248 = vmul.f32 %v1864, %v2200
    %v2249 = vmul.f32 %v1865, %v2201
    %v2250 = vmul.f32 %v1866, %v2202
    %v2251 = vmul.f32 %v1867, %v2203
    %v2252 = vmul.f32 %v1868, %v2204
    %v2253 = vmul.f32 %v1869, %v2205
    %v2254 = vmul.f32 %v1870, %v2206
    %v2255 = vmul.f32 %v1871, %v2207
    %v2256 = vmul.f32 %v1872, %v2208
    %v2257 = vmul.f32 %v1873, %v2209
    %v2258 = vmul.f32 %v1874, %v2210
    %v2259 = vmul.f32 %v1875, %v2211
    %v2260 = vmul.f32 %v1876, %v2212
    %v2261 = vmul.f32 %v1877, %v2213
    %v2262 = vmul.f32 %v1878, %v2214
    %v2263 = vmul.f32 %v1879, %v2215
    %v2264 = vmul.f32 %v1880, %v2216
    %v2265 = vmul.f32 %v1881, %v2217
    %v2266 = vmul.f32 %v1882, %v2218
    %v2267 = vmul.f32 %v1883, %v2219
    %v2268 = vmul.f32 %v1884, %v2220
    %v2269 = vmul.f32 %v1885, %v2221
    %v2270 = vmul.f32 %v1886, %v2222
    %v2271 = vmul.f32 %v1887, %v2223
    %v2272 = vld [vmem:[#allocation7 + $0x720] sm:$0xff]
    %v2273 = vld [vmem:[#allocation7 + $0x728] sm:$0xff]
    %v2274 = vld [vmem:[#allocation7 + $0x730] sm:$0xff]
    %v2275 = vld [vmem:[#allocation7 + $0x738] sm:$0xff]
    %v2276 = vld [vmem:[#allocation7 + $0x740] sm:$0xff]
    %v2277 = vld [vmem:[#allocation7 + $0x748] sm:$0xff]
    %v2278 = vld [vmem:[#allocation7 + $0x750] sm:$0xff]
    %v2279 = vld [vmem:[#allocation7 + $0x758] sm:$0xff]
    %v2280 = vld [vmem:[#allocation7 + $0x760] sm:$0xff]
    %v2281 = vld [vmem:[#allocation7 + $0x768] sm:$0xff]
    %v2282 = vld [vmem:[#allocation7 + $0x770] sm:$0xff]
    %v2283 = vld [vmem:[#allocation7 + $0x778] sm:$0xff]
    %v2284 = vld [vmem:[#allocation7 + $0x780] sm:$0xff]
    %v2285 = vld [vmem:[#allocation7 + $0x788] sm:$0xff]
    %v2286 = vld [vmem:[#allocation7 + $0x790] sm:$0xff]
    %v2287 = vld [vmem:[#allocation7 + $0x798] sm:$0xff]
    %v2288 = vld [vmem:[#allocation7 + $0x7a0] sm:$0xff]
    %v2289 = vld [vmem:[#allocation7 + $0x7a8] sm:$0xff]
    %v2290 = vld [vmem:[#allocation7 + $0x7b0] sm:$0xff]
    %v2291 = vld [vmem:[#allocation7 + $0x7b8] sm:$0xff]
    %v2292 = vld [vmem:[#allocation7 + $0x7c0] sm:$0xff]
    %v2293 = vld [vmem:[#allocation7 + $0x7c8] sm:$0xff]
    %v2294 = vld [vmem:[#allocation7 + $0x7d0] sm:$0xff]
    %v2295 = vld [vmem:[#allocation7 + $0x7d8] sm:$0xff]
    %v2296 = vld [vmem:[#allocation7 + $0x7e0] sm:$0xff]
    %v2297 = vld [vmem:[#allocation7 + $0x7e8] sm:$0xff]
    %v2298 = vld [vmem:[#allocation7 + $0x7f0] sm:$0xff]
    %v2299 = vld [vmem:[#allocation7 + $0x7f8] sm:$0xff]
    %v2300 = vld [vmem:[#allocation7 + $0x800] sm:$0xff]
    %v2301 = vld [vmem:[#allocation7 + $0x808] sm:$0xff]
    %v2302 = vld [vmem:[#allocation7 + $0x810] sm:$0xff]
    %v2303 = vld [vmem:[#allocation7 + $0x818] sm:$0xff]
    %v2304 = vld [vmem:[#allocation7 + $0x820] sm:$0xff]
    %v2305 = vld [vmem:[#allocation7 + $0x828] sm:$0xff]
    %v2306 = vld [vmem:[#allocation7 + $0x830] sm:$0xff]
    %v2307 = vld [vmem:[#allocation7 + $0x838] sm:$0xff]
    %v2308 = vld [vmem:[#allocation7 + $0x840] sm:$0xff]
    %v2309 = vld [vmem:[#allocation7 + $0x848] sm:$0xff]
    %v2310 = vld [vmem:[#allocation7 + $0x850] sm:$0xff]
    %v2311 = vld [vmem:[#allocation7 + $0x858] sm:$0xff]
    %v2312 = vld [vmem:[#allocation7 + $0x860] sm:$0xff]
    %v2313 = vld [vmem:[#allocation7 + $0x868] sm:$0xff]
    %v2314 = vld [vmem:[#allocation7 + $0x870] sm:$0xff]
    %v2315 = vld [vmem:[#allocation7 + $0x878] sm:$0xff]
    %v2316 = vld [vmem:[#allocation7 + $0x880] sm:$0xff]
    %v2317 = vld [vmem:[#allocation7 + $0x888] sm:$0xff]
    %v2318 = vld [vmem:[#allocation7 + $0x890] sm:$0xff]
    %v2319 = vld [vmem:[#allocation7 + $0x898] sm:$0xff]
    %v2320 = vld [vmem:[#allocation7 + $0x8a0] sm:$0xff]
    %v2321 = vld [vmem:[#allocation7 + $0x8a8] sm:$0xff]
    %v2322 = vld [vmem:[#allocation7 + $0x8b0] sm:$0xff]
    %v2323 = vld [vmem:[#allocation7 + $0x8b8] sm:$0xff]
    %v2324 = vld [vmem:[#allocation7 + $0x8c0] sm:$0xff]
    %v2325 = vld [vmem:[#allocation7 + $0x8c8] sm:$0xff]
    %v2326 = vld [vmem:[#allocation7 + $0x8d0] sm:$0xff]
    %v2327 = vld [vmem:[#allocation7 + $0x8d8] sm:$0xff]
    %v2328 = vld [vmem:[#allocation7 + $0x8e0] sm:$0xff]
    %v2329 = vld [vmem:[#allocation7 + $0x8e8] sm:$0xff]
    %v2330 = vld [vmem:[#allocation7 + $0x8f0] sm:$0xff]
    %v2331 = vld [vmem:[#allocation7 + $0x8f8] sm:$0xff]
    %v2332 = vld [vmem:[#allocation7 + $0x900] sm:$0xff]
    %v2333 = vld [vmem:[#allocation7 + $0x908] sm:$0xff]
    %v2334 = vld [vmem:[#allocation7 + $0x910] sm:$0xff]
    %v2335 = vld [vmem:[#allocation7 + $0x918] sm:$0xff]
    %v2336 = vld [vmem:[#allocation7 + $0x920] sm:$0xff]
    %v2337 = vld [vmem:[#allocation7 + $0x928] sm:$0xff]
    %v2338 = vld [vmem:[#allocation7 + $0x930] sm:$0xff]
    %v2339 = vld [vmem:[#allocation7 + $0x938] sm:$0xff]
    %v2340 = vld [vmem:[#allocation7 + $0x940] sm:$0xff]
    %v2341 = vld [vmem:[#allocation7 + $0x948] sm:$0xff]
    %v2342 = vld [vmem:[#allocation7 + $0x950] sm:$0xff]
    %v2343 = vld [vmem:[#allocation7 + $0x958] sm:$0xff]
    %v2344 = vld [vmem:[#allocation7 + $0x960] sm:$0xff]
    %v2345 = vld [vmem:[#allocation7 + $0x968] sm:$0xff]
    %v2346 = vld [vmem:[#allocation7 + $0x970] sm:$0xff]
    %v2347 = vld [vmem:[#allocation7 + $0x978] sm:$0xff]
    %v2348 = vld [vmem:[#allocation7 + $0x980] sm:$0xff]
    %v2349 = vld [vmem:[#allocation7 + $0x988] sm:$0xff]
    %v2350 = vld [vmem:[#allocation7 + $0x990] sm:$0xff]
    %v2351 = vld [vmem:[#allocation7 + $0x998] sm:$0xff]
    %v2352 = vld [vmem:[#allocation7 + $0x9a0] sm:$0xff]
    %v2353 = vld [vmem:[#allocation7 + $0x9a8] sm:$0xff]
    %v2354 = vld [vmem:[#allocation7 + $0x9b0] sm:$0xff]
    %v2355 = vld [vmem:[#allocation7 + $0x9b8] sm:$0xff]
    %v2356 = vld [vmem:[#allocation7 + $0x9c0] sm:$0xff]
    %v2357 = vld [vmem:[#allocation7 + $0x9c8] sm:$0xff]
    %v2358 = vld [vmem:[#allocation7 + $0x9d0] sm:$0xff]
    %v2359 = vld [vmem:[#allocation7 + $0x9d8] sm:$0xff]
    %v2360 = vld [vmem:[#allocation7 + $0x9e0] sm:$0xff]
    %v2361 = vld [vmem:[#allocation7 + $0x9e8] sm:$0xff]
    %v2362 = vld [vmem:[#allocation7 + $0x9f0] sm:$0xff]
    %v2363 = vld [vmem:[#allocation7 + $0x9f8] sm:$0xff]
    %v2364 = vld [vmem:[#allocation7 + $0xa00] sm:$0xff]
    %v2365 = vld [vmem:[#allocation7 + $0xa08] sm:$0xff]
    %v2366 = vld [vmem:[#allocation7 + $0xa10] sm:$0xff]
    %v2367 = vld [vmem:[#allocation7 + $0xa18] sm:$0xff]
    %v2368 = vld [vmem:[#allocation7 + $0xa20] sm:$0xff]
    %v2369 = vld [vmem:[#allocation7 + $0xa28] sm:$0xff]
    %v2370 = vld [vmem:[#allocation7 + $0xa30] sm:$0xff]
    %v2371 = vld [vmem:[#allocation7 + $0xa38] sm:$0xff]
    %v2372 = vld [vmem:[#allocation7 + $0xa40] sm:$0xff]
    %v2373 = vld [vmem:[#allocation7 + $0xa48] sm:$0xff]
    %v2374 = vld [vmem:[#allocation7 + $0xa50] sm:$0xff]
    %v2375 = vld [vmem:[#allocation7 + $0xa58] sm:$0xff]
    %v2376 = vld [vmem:[#allocation7 + $0xa60] sm:$0xff]
    %v2377 = vld [vmem:[#allocation7 + $0xa68] sm:$0xff]
    %v2378 = vld [vmem:[#allocation7 + $0xa70] sm:$0xff]
    %v2379 = vld [vmem:[#allocation7 + $0xa78] sm:$0xff]
    %v2380 = vld [vmem:[#allocation7 + $0xa80] sm:$0xff]
    %v2381 = vld [vmem:[#allocation7 + $0xa88] sm:$0xff]
    %v2382 = vld [vmem:[#allocation7 + $0xa90] sm:$0xff]
    %v2383 = vld [vmem:[#allocation7 + $0xa98] sm:$0xff]
    %v2384 = vld [vmem:[#allocation7 + $0xaa0] sm:$0xff]
    %v2385 = vld [vmem:[#allocation7 + $0xaa8] sm:$0xff]
    %v2386 = vld [vmem:[#allocation7 + $0xab0] sm:$0xff]
    %v2387 = vld [vmem:[#allocation7 + $0xab8] sm:$0xff]
    %v2388 = vld [vmem:[#allocation7 + $0xac0] sm:$0xff]
    %v2389 = vld [vmem:[#allocation7 + $0xac8] sm:$0xff]
    %v2390 = vld [vmem:[#allocation7 + $0xad0] sm:$0xff]
    %v2391 = vld [vmem:[#allocation7 + $0xad8] sm:$0xff]
    %v2392 = vld [vmem:[#allocation7 + $0xae0] sm:$0xff]
    %v2393 = vld [vmem:[#allocation7 + $0xae8] sm:$0xff]
    %v2394 = vld [vmem:[#allocation7 + $0xaf0] sm:$0xff]
    %v2395 = vld [vmem:[#allocation7 + $0xaf8] sm:$0xff]
    %v2396 = vld [vmem:[#allocation7 + $0xb00] sm:$0xff]
    %v2397 = vld [vmem:[#allocation7 + $0xb08] sm:$0xff]
    %v2398 = vld [vmem:[#allocation7 + $0xb10] sm:$0xff]
    %v2399 = vld [vmem:[#allocation7 + $0xb18] sm:$0xff]
    %v2400 = vld [vmem:[#allocation7 + $0xb20] sm:$0xff]
    %v2401 = vld [vmem:[#allocation7 + $0xb28] sm:$0xff]
    %v2402 = vld [vmem:[#allocation7 + $0xb30] sm:$0xff]
    %v2403 = vld [vmem:[#allocation7 + $0xb38] sm:$0xff]
    %v2404 = vld [vmem:[#allocation7 + $0xb40] sm:$0xff]
    %v2405 = vld [vmem:[#allocation7 + $0xb48] sm:$0xff]
    %v2406 = vld [vmem:[#allocation7 + $0xb50] sm:$0xff]
    %v2407 = vld [vmem:[#allocation7 + $0xb58] sm:$0xff]
    %v2408 = vld [vmem:[#allocation7 + $0xb60] sm:$0xff]
    %v2409 = vld [vmem:[#allocation7 + $0xb68] sm:$0xff]
    %v2410 = vld [vmem:[#allocation7 + $0xb70] sm:$0xff]
    %v2411 = vld [vmem:[#allocation7 + $0xb78] sm:$0xff]
    %v2412 = vld [vmem:[#allocation7 + $0xb80] sm:$0xff]
    %v2413 = vld [vmem:[#allocation7 + $0xb88] sm:$0xff]
    %v2414 = vld [vmem:[#allocation7 + $0xb90] sm:$0xff]
    %v2415 = vld [vmem:[#allocation7 + $0xb98] sm:$0xff]
    %s2416 = scalar_lea.vmem [#allocation6], 2
    %v2417 = vld [vmem:[%s2416] ss:$8 sm:$0xf]
    %v2418 = vld [vmem:[%s2416] ss:$8 sm:$0x30]
    %v2419 = vor.u32 %v2417, %v2418
    %v2420 = vpack.c.bf16 %v2227, %v2224
    %v2421 = vpack.c.bf16 %v2228, %v2225
    %v2422 = vpack.c.bf16 %v2229, %v2226
    %v2423 = vpack.c.bf16 %v2233, %v2230
    %v2424 = vpack.c.bf16 %v2234, %v2231
    %v2425 = vpack.c.bf16 %v2235, %v2232
    %v2426 = vpack.c.bf16 %v2239, %v2236
    %v2427 = vpack.c.bf16 %v2240, %v2237
    %v2428 = vpack.c.bf16 %v2241, %v2238
    %v2429 = vpack.c.bf16 %v2245, %v2242
    %v2430 = vpack.c.bf16 %v2246, %v2243
    %v2431 = vpack.c.bf16 %v2247, %v2244
    %v2432 = vpack.c.bf16 %v2251, %v2248
    %v2433 = vpack.c.bf16 %v2252, %v2249
    %v2434 = vpack.c.bf16 %v2253, %v2250
    %v2435 = vpack.c.bf16 %v2257, %v2254
    %v2436 = vpack.c.bf16 %v2258, %v2255
    %v2437 = vpack.c.bf16 %v2259, %v2256
    %v2438 = vpack.c.bf16 %v2263, %v2260
    %v2439 = vpack.c.bf16 %v2264, %v2261
    %v2440 = vpack.c.bf16 %v2265, %v2262
    %v2441 = vpack.c.bf16 %v2269, %v2266
    %v2442 = vpack.c.bf16 %v2270, %v2267
    %v2443 = vpack.c.bf16 %v2271, %v2268
    %v2445 = vlaneseq
    %v2446 = vshrl.u32 %v2445, 7
    %v2447 = vsub.s32 0, %v2446
    %v2448 = vrot.slane %v2419, %v2447
    %v2449 = vlaneseq
    %v2450 = vshrl.u32 %v2449, 7
    %v2451 = vsub.s32 1, %v2450
    %v2452 = vrot.slane %v2419, %v2451
    %v2453 = vlaneseq
    %v2454 = vshrl.u32 %v2453, 7
    %v2455 = vsub.s32 2, %v2454
    %v2456 = vrot.slane %v2419, %v2455
    %v2457 = vlaneseq
    %v2458 = vshrl.u32 %v2457, 7
    %v2459 = vsub.s32 3, %v2458
    %v2460 = vrot.slane %v2419, %v2459
    %v2461 = vlaneseq
    %v2462 = vshrl.u32 %v2461, 7
    %v2463 = vsub.s32 4, %v2462
    %v2464 = vrot.slane %v2419, %v2463
    %v2465 = vlaneseq
    %v2466 = vshrl.u32 %v2465, 7
    %v2467 = vsub.s32 5, %v2466
    %v2468 = vrot.slane %v2419, %v2467
    %v2619 = vunpack.c.l.b16 %v2272
    %v2620 = vunpack.c.h.b16 %v2272
    %v2621 = vunpack.c.l.b16 %v2273
    %v2622 = vunpack.c.h.b16 %v2273
    %v2623 = vunpack.c.l.b16 %v2274
    %v2624 = vunpack.c.h.b16 %v2274
    %v2625 = vunpack.c.l.b16 %v2275
    %v2626 = vunpack.c.h.b16 %v2275
    %v2627 = vunpack.c.l.b16 %v2276
    %v2628 = vunpack.c.h.b16 %v2276
    %v2629 = vunpack.c.l.b16 %v2277
    %v2630 = vunpack.c.h.b16 %v2277
    %v2631 = vunpack.c.l.b16 %v2278
    %v2632 = vunpack.c.h.b16 %v2278
    %v2633 = vunpack.c.l.b16 %v2279
    %v2634 = vunpack.c.h.b16 %v2279
    %v2635 = vunpack.c.l.b16 %v2280
    %v2636 = vunpack.c.h.b16 %v2280
    %v2637 = vunpack.c.l.b16 %v2281
    %v2638 = vunpack.c.h.b16 %v2281
    %v2639 = vunpack.c.l.b16 %v2282
    %v2640 = vunpack.c.h.b16 %v2282
    %v2641 = vunpack.c.l.b16 %v2283
    %v2642 = vunpack.c.h.b16 %v2283
    %v2643 = vunpack.c.l.b16 %v2284
    %v2644 = vunpack.c.h.b16 %v2284
    %v2645 = vunpack.c.l.b16 %v2285
    %v2646 = vunpack.c.h.b16 %v2285
    %v2647 = vunpack.c.l.b16 %v2286
    %v2648 = vunpack.c.h.b16 %v2286
    %v2649 = vunpack.c.l.b16 %v2287
    %v2650 = vunpack.c.h.b16 %v2287
    %v2651 = vunpack.c.l.b16 %v2288
    %v2652 = vunpack.c.h.b16 %v2288
    %v2653 = vunpack.c.l.b16 %v2289
    %v2654 = vunpack.c.h.b16 %v2289
    %v2655 = vunpack.c.l.b16 %v2290
    %v2656 = vunpack.c.h.b16 %v2290
    %v2657 = vunpack.c.l.b16 %v2291
    %v2658 = vunpack.c.h.b16 %v2291
    %v2659 = vunpack.c.l.b16 %v2292
    %v2660 = vunpack.c.h.b16 %v2292
    %v2661 = vunpack.c.l.b16 %v2293
    %v2662 = vunpack.c.h.b16 %v2293
    %v2663 = vunpack.c.l.b16 %v2294
    %v2664 = vunpack.c.h.b16 %v2294
    %v2665 = vunpack.c.l.b16 %v2295
    %v2666 = vunpack.c.h.b16 %v2295
    %v2667 = vunpack.c.l.b16 %v2296
    %v2668 = vunpack.c.h.b16 %v2296
    %v2669 = vunpack.c.l.b16 %v2297
    %v2670 = vunpack.c.h.b16 %v2297
    %v2671 = vunpack.c.l.b16 %v2298
    %v2672 = vunpack.c.h.b16 %v2298
    %v2673 = vunpack.c.l.b16 %v2299
    %v2674 = vunpack.c.h.b16 %v2299
    %v2675 = vunpack.c.l.b16 %v2300
    %v2676 = vunpack.c.h.b16 %v2300
    %v2677 = vunpack.c.l.b16 %v2301
    %v2678 = vunpack.c.h.b16 %v2301
    %v2679 = vunpack.c.l.b16 %v2302
    %v2680 = vunpack.c.h.b16 %v2302
    %v2681 = vunpack.c.l.b16 %v2303
    %v2682 = vunpack.c.h.b16 %v2303
    %v2683 = vunpack.c.l.b16 %v2304
    %v2684 = vunpack.c.h.b16 %v2304
    %v2685 = vunpack.c.l.b16 %v2305
    %v2686 = vunpack.c.h.b16 %v2305
    %v2687 = vunpack.c.l.b16 %v2306
    %v2688 = vunpack.c.h.b16 %v2306
    %v2689 = vunpack.c.l.b16 %v2307
    %v2690 = vunpack.c.h.b16 %v2307
    %v2691 = vunpack.c.l.b16 %v2308
    %v2692 = vunpack.c.h.b16 %v2308
    %v2693 = vunpack.c.l.b16 %v2309
    %v2694 = vunpack.c.h.b16 %v2309
    %v2695 = vunpack.c.l.b16 %v2310
    %v2696 = vunpack.c.h.b16 %v2310
    %v2697 = vunpack.c.l.b16 %v2311
    %v2698 = vunpack.c.h.b16 %v2311
    %v2699 = vunpack.c.l.b16 %v2312
    %v2700 = vunpack.c.h.b16 %v2312
    %v2701 = vunpack.c.l.b16 %v2313
    %v2702 = vunpack.c.h.b16 %v2313
    %v2703 = vunpack.c.l.b16 %v2314
    %v2704 = vunpack.c.h.b16 %v2314
    %v2705 = vunpack.c.l.b16 %v2315
    %v2706 = vunpack.c.h.b16 %v2315
    %v2707 = vunpack.c.l.b16 %v2316
    %v2708 = vunpack.c.h.b16 %v2316
    %v2709 = vunpack.c.l.b16 %v2317
    %v2710 = vunpack.c.h.b16 %v2317
    %v2711 = vunpack.c.l.b16 %v2318
    %v2712 = vunpack.c.h.b16 %v2318
    %v2713 = vunpack.c.l.b16 %v2319
    %v2714 = vunpack.c.h.b16 %v2319
    %v2715 = vunpack.c.l.b16 %v2320
    %v2716 = vunpack.c.h.b16 %v2320
    %v2717 = vunpack.c.l.b16 %v2321
    %v2718 = vunpack.c.h.b16 %v2321
    %v2719 = vunpack.c.l.b16 %v2322
    %v2720 = vunpack.c.h.b16 %v2322
    %v2721 = vunpack.c.l.b16 %v2323
    %v2722 = vunpack.c.h.b16 %v2323
    %v2723 = vunpack.c.l.b16 %v2324
    %v2724 = vunpack.c.h.b16 %v2324
    %v2725 = vunpack.c.l.b16 %v2325
    %v2726 = vunpack.c.h.b16 %v2325
    %v2727 = vunpack.c.l.b16 %v2326
    %v2728 = vunpack.c.h.b16 %v2326
    %v2729 = vunpack.c.l.b16 %v2327
    %v2730 = vunpack.c.h.b16 %v2327
    %v2731 = vunpack.c.l.b16 %v2328
    %v2732 = vunpack.c.h.b16 %v2328
    %v2733 = vunpack.c.l.b16 %v2329
    %v2734 = vunpack.c.h.b16 %v2329
    %v2735 = vunpack.c.l.b16 %v2330
    %v2736 = vunpack.c.h.b16 %v2330
    %v2737 = vunpack.c.l.b16 %v2331
    %v2738 = vunpack.c.h.b16 %v2331
    %v2739 = vunpack.c.l.b16 %v2332
    %v2740 = vunpack.c.h.b16 %v2332
    %v2741 = vunpack.c.l.b16 %v2333
    %v2742 = vunpack.c.h.b16 %v2333
    %v2743 = vunpack.c.l.b16 %v2334
    %v2744 = vunpack.c.h.b16 %v2334
    %v2745 = vunpack.c.l.b16 %v2335
    %v2746 = vunpack.c.h.b16 %v2335
    %v2747 = vunpack.c.l.b16 %v2336
    %v2748 = vunpack.c.h.b16 %v2336
    %v2749 = vunpack.c.l.b16 %v2337
    %v2750 = vunpack.c.h.b16 %v2337
    %v2751 = vunpack.c.l.b16 %v2338
    %v2752 = vunpack.c.h.b16 %v2338
    %v2753 = vunpack.c.l.b16 %v2339
    %v2754 = vunpack.c.h.b16 %v2339
    %v2755 = vunpack.c.l.b16 %v2340
    %v2756 = vunpack.c.h.b16 %v2340
    %v2757 = vunpack.c.l.b16 %v2341
    %v2758 = vunpack.c.h.b16 %v2341
    %v2759 = vunpack.c.l.b16 %v2342
    %v2760 = vunpack.c.h.b16 %v2342
    %v2761 = vunpack.c.l.b16 %v2343
    %v2762 = vunpack.c.h.b16 %v2343
    %v2763 = vunpack.c.l.b16 %v2344
    %v2764 = vunpack.c.h.b16 %v2344
    %v2765 = vunpack.c.l.b16 %v2345
    %v2766 = vunpack.c.h.b16 %v2345
    %v2767 = vunpack.c.l.b16 %v2346
    %v2768 = vunpack.c.h.b16 %v2346
    %v2769 = vunpack.c.l.b16 %v2347
    %v2770 = vunpack.c.h.b16 %v2347
    %v2771 = vunpack.c.l.b16 %v2348
    %v2772 = vunpack.c.h.b16 %v2348
    %v2773 = vunpack.c.l.b16 %v2349
    %v2774 = vunpack.c.h.b16 %v2349
    %v2775 = vunpack.c.l.b16 %v2350
    %v2776 = vunpack.c.h.b16 %v2350
    %v2777 = vunpack.c.l.b16 %v2351
    %v2778 = vunpack.c.h.b16 %v2351
    %v2779 = vunpack.c.l.b16 %v2352
    %v2780 = vunpack.c.h.b16 %v2352
    %v2781 = vunpack.c.l.b16 %v2353
    %v2782 = vunpack.c.h.b16 %v2353
    %v2783 = vunpack.c.l.b16 %v2354
    %v2784 = vunpack.c.h.b16 %v2354
    %v2785 = vunpack.c.l.b16 %v2355
    %v2786 = vunpack.c.h.b16 %v2355
    %v2787 = vunpack.c.l.b16 %v2356
    %v2788 = vunpack.c.h.b16 %v2356
    %v2789 = vunpack.c.l.b16 %v2357
    %v2790 = vunpack.c.h.b16 %v2357
    %v2791 = vunpack.c.l.b16 %v2358
    %v2792 = vunpack.c.h.b16 %v2358
    %v2793 = vunpack.c.l.b16 %v2359
    %v2794 = vunpack.c.h.b16 %v2359
    %v2795 = vunpack.c.l.b16 %v2360
    %v2796 = vunpack.c.h.b16 %v2360
    %v2797 = vunpack.c.l.b16 %v2361
    %v2798 = vunpack.c.h.b16 %v2361
    %v2799 = vunpack.c.l.b16 %v2362
    %v2800 = vunpack.c.h.b16 %v2362
    %v2801 = vunpack.c.l.b16 %v2363
    %v2802 = vunpack.c.h.b16 %v2363
    %v2803 = vunpack.c.l.b16 %v2364
    %v2804 = vunpack.c.h.b16 %v2364
    %v2805 = vunpack.c.l.b16 %v2365
    %v2806 = vunpack.c.h.b16 %v2365
    %v2807 = vunpack.c.l.b16 %v2366
    %v2808 = vunpack.c.h.b16 %v2366
    %v2809 = vunpack.c.l.b16 %v2367
    %v2810 = vunpack.c.h.b16 %v2367
    %v2811 = vunpack.c.l.b16 %v2368
    %v2812 = vunpack.c.h.b16 %v2368
    %v2813 = vunpack.c.l.b16 %v2369
    %v2814 = vunpack.c.h.b16 %v2369
    %v2815 = vunpack.c.l.b16 %v2370
    %v2816 = vunpack.c.h.b16 %v2370
    %v2817 = vunpack.c.l.b16 %v2371
    %v2818 = vunpack.c.h.b16 %v2371
    %v2819 = vunpack.c.l.b16 %v2372
    %v2820 = vunpack.c.h.b16 %v2372
    %v2821 = vunpack.c.l.b16 %v2373
    %v2822 = vunpack.c.h.b16 %v2373
    %v2823 = vunpack.c.l.b16 %v2374
    %v2824 = vunpack.c.h.b16 %v2374
    %v2825 = vunpack.c.l.b16 %v2375
    %v2826 = vunpack.c.h.b16 %v2375
    %v2827 = vunpack.c.l.b16 %v2376
    %v2828 = vunpack.c.h.b16 %v2376
    %v2829 = vunpack.c.l.b16 %v2377
    %v2830 = vunpack.c.h.b16 %v2377
    %v2831 = vunpack.c.l.b16 %v2378
    %v2832 = vunpack.c.h.b16 %v2378
    %v2833 = vunpack.c.l.b16 %v2379
    %v2834 = vunpack.c.h.b16 %v2379
    %v2835 = vunpack.c.l.b16 %v2380
    %v2836 = vunpack.c.h.b16 %v2380
    %v2837 = vunpack.c.l.b16 %v2381
    %v2838 = vunpack.c.h.b16 %v2381
    %v2839 = vunpack.c.l.b16 %v2382
    %v2840 = vunpack.c.h.b16 %v2382
    %v2841 = vunpack.c.l.b16 %v2383
    %v2842 = vunpack.c.h.b16 %v2383
    %v2843 = vunpack.c.l.b16 %v2384
    %v2844 = vunpack.c.h.b16 %v2384
    %v2845 = vunpack.c.l.b16 %v2385
    %v2846 = vunpack.c.h.b16 %v2385
    %v2847 = vunpack.c.l.b16 %v2386
    %v2848 = vunpack.c.h.b16 %v2386
    %v2849 = vunpack.c.l.b16 %v2387
    %v2850 = vunpack.c.h.b16 %v2387
    %v2851 = vunpack.c.l.b16 %v2388
    %v2852 = vunpack.c.h.b16 %v2388
    %v2853 = vunpack.c.l.b16 %v2389
    %v2854 = vunpack.c.h.b16 %v2389
    %v2855 = vunpack.c.l.b16 %v2390
    %v2856 = vunpack.c.h.b16 %v2390
    %v2857 = vunpack.c.l.b16 %v2391
    %v2858 = vunpack.c.h.b16 %v2391
    %v2859 = vunpack.c.l.b16 %v2392
    %v2860 = vunpack.c.h.b16 %v2392
    %v2861 = vunpack.c.l.b16 %v2393
    %v2862 = vunpack.c.h.b16 %v2393
    %v2863 = vunpack.c.l.b16 %v2394
    %v2864 = vunpack.c.h.b16 %v2394
    %v2865 = vunpack.c.l.b16 %v2395
    %v2866 = vunpack.c.h.b16 %v2395
    %v2867 = vunpack.c.l.b16 %v2396
    %v2868 = vunpack.c.h.b16 %v2396
    %v2869 = vunpack.c.l.b16 %v2397
    %v2870 = vunpack.c.h.b16 %v2397
    %v2871 = vunpack.c.l.b16 %v2398
    %v2872 = vunpack.c.h.b16 %v2398
    %v2873 = vunpack.c.l.b16 %v2399
    %v2874 = vunpack.c.h.b16 %v2399
    %v2875 = vunpack.c.l.b16 %v2400
    %v2876 = vunpack.c.h.b16 %v2400
    %v2877 = vunpack.c.l.b16 %v2401
    %v2878 = vunpack.c.h.b16 %v2401
    %v2879 = vunpack.c.l.b16 %v2402
    %v2880 = vunpack.c.h.b16 %v2402
    %v2881 = vunpack.c.l.b16 %v2403
    %v2882 = vunpack.c.h.b16 %v2403
    %v2883 = vunpack.c.l.b16 %v2404
    %v2884 = vunpack.c.h.b16 %v2404
    %v2885 = vunpack.c.l.b16 %v2405
    %v2886 = vunpack.c.h.b16 %v2405
    %v2887 = vunpack.c.l.b16 %v2406
    %v2888 = vunpack.c.h.b16 %v2406
    %v2889 = vunpack.c.l.b16 %v2407
    %v2890 = vunpack.c.h.b16 %v2407
    %v2891 = vunpack.c.l.b16 %v2408
    %v2892 = vunpack.c.h.b16 %v2408
    %v2893 = vunpack.c.l.b16 %v2409
    %v2894 = vunpack.c.h.b16 %v2409
    %v2895 = vunpack.c.l.b16 %v2410
    %v2896 = vunpack.c.h.b16 %v2410
    %v2897 = vunpack.c.l.b16 %v2411
    %v2898 = vunpack.c.h.b16 %v2411
    %v2899 = vunpack.c.l.b16 %v2412
    %v2900 = vunpack.c.h.b16 %v2412
    %v2901 = vunpack.c.l.b16 %v2413
    %v2902 = vunpack.c.h.b16 %v2413
    %v2903 = vunpack.c.l.b16 %v2414
    %v2904 = vunpack.c.h.b16 %v2414
    %v2905 = vunpack.c.l.b16 %v2415
    %v2906 = vunpack.c.h.b16 %v2415
    %v2907 = vpack.c.b16 %v2625, %v2619
    %v2908 = vpack.c.b16 %v2626, %v2620
    %v2909 = vpack.c.b16 %v2627, %v2621
    %v2910 = vpack.c.b16 %v2628, %v2622
    %v2911 = vpack.c.b16 %v2629, %v2623
    %v2912 = vpack.c.b16 %v2630, %v2624
    %v2913 = vpack.c.b16 %v2637, %v2631
    %v2914 = vpack.c.b16 %v2638, %v2632
    %v2915 = vpack.c.b16 %v2639, %v2633
    %v2916 = vpack.c.b16 %v2640, %v2634
    %v2917 = vpack.c.b16 %v2641, %v2635
    %v2918 = vpack.c.b16 %v2642, %v2636
    %v2919 = vpack.c.b16 %v2649, %v2643
    %v2920 = vpack.c.b16 %v2650, %v2644
    %v2921 = vpack.c.b16 %v2651, %v2645
    %v2922 = vpack.c.b16 %v2652, %v2646
    %v2923 = vpack.c.b16 %v2653, %v2647
    %v2924 = vpack.c.b16 %v2654, %v2648
    %v2925 = vpack.c.b16 %v2661, %v2655
    %v2926 = vpack.c.b16 %v2662, %v2656
    %v2927 = vpack.c.b16 %v2663, %v2657
    %v2928 = vpack.c.b16 %v2664, %v2658
    %v2929 = vpack.c.b16 %v2665, %v2659
    %v2930 = vpack.c.b16 %v2666, %v2660
    %v2931 = vpack.c.b16 %v2673, %v2667
    %v2932 = vpack.c.b16 %v2674, %v2668
    %v2933 = vpack.c.b16 %v2675, %v2669
    %v2934 = vpack.c.b16 %v2676, %v2670
    %v2935 = vpack.c.b16 %v2677, %v2671
    %v2936 = vpack.c.b16 %v2678, %v2672
    %v2937 = vpack.c.b16 %v2685, %v2679
    %v2938 = vpack.c.b16 %v2686, %v2680
    %v2939 = vpack.c.b16 %v2687, %v2681
    %v2940 = vpack.c.b16 %v2688, %v2682
    %v2941 = vpack.c.b16 %v2689, %v2683
    %v2942 = vpack.c.b16 %v2690, %v2684
    %v2943 = vpack.c.b16 %v2697, %v2691
    %v2944 = vpack.c.b16 %v2698, %v2692
    %v2945 = vpack.c.b16 %v2699, %v2693
    %v2946 = vpack.c.b16 %v2700, %v2694
    %v2947 = vpack.c.b16 %v2701, %v2695
    %v2948 = vpack.c.b16 %v2702, %v2696
    %v2949 = vpack.c.b16 %v2709, %v2703
    %v2950 = vpack.c.b16 %v2710, %v2704
    %v2951 = vpack.c.b16 %v2711, %v2705
    %v2952 = vpack.c.b16 %v2712, %v2706
    %v2953 = vpack.c.b16 %v2713, %v2707
    %v2954 = vpack.c.b16 %v2714, %v2708
    %v2955 = vpack.c.b16 %v2721, %v2715
    %v2956 = vpack.c.b16 %v2722, %v2716
    %v2957 = vpack.c.b16 %v2723, %v2717
    %v2958 = vpack.c.b16 %v2724, %v2718
    %v2959 = vpack.c.b16 %v2725, %v2719
    %v2960 = vpack.c.b16 %v2726, %v2720
    %v2961 = vpack.c.b16 %v2733, %v2727
    %v2962 = vpack.c.b16 %v2734, %v2728
    %v2963 = vpack.c.b16 %v2735, %v2729
    %v2964 = vpack.c.b16 %v2736, %v2730
    %v2965 = vpack.c.b16 %v2737, %v2731
    %v2966 = vpack.c.b16 %v2738, %v2732
    %v2967 = vpack.c.b16 %v2745, %v2739
    %v2968 = vpack.c.b16 %v2746, %v2740
    %v2969 = vpack.c.b16 %v2747, %v2741
    %v2970 = vpack.c.b16 %v2748, %v2742
    %v2971 = vpack.c.b16 %v2749, %v2743
    %v2972 = vpack.c.b16 %v2750, %v2744
    %v2973 = vpack.c.b16 %v2757, %v2751
    %v2974 = vpack.c.b16 %v2758, %v2752
    %v2975 = vpack.c.b16 %v2759, %v2753
    %v2976 = vpack.c.b16 %v2760, %v2754
    %v2977 = vpack.c.b16 %v2761, %v2755
    %v2978 = vpack.c.b16 %v2762, %v2756
    %v2979 = vpack.c.b16 %v2769, %v2763
    %v2980 = vpack.c.b16 %v2770, %v2764
    %v2981 = vpack.c.b16 %v2771, %v2765
    %v2982 = vpack.c.b16 %v2772, %v2766
    %v2983 = vpack.c.b16 %v2773, %v2767
    %v2984 = vpack.c.b16 %v2774, %v2768
    %v2985 = vpack.c.b16 %v2781, %v2775
    %v2986 = vpack.c.b16 %v2782, %v2776
    %v2987 = vpack.c.b16 %v2783, %v2777
    %v2988 = vpack.c.b16 %v2784, %v2778
    %v2989 = vpack.c.b16 %v2785, %v2779
    %v2990 = vpack.c.b16 %v2786, %v2780
    %v2991 = vpack.c.b16 %v2793, %v2787
    %v2992 = vpack.c.b16 %v2794, %v2788
    %v2993 = vpack.c.b16 %v2795, %v2789
    %v2994 = vpack.c.b16 %v2796, %v2790
    %v2995 = vpack.c.b16 %v2797, %v2791
    %v2996 = vpack.c.b16 %v2798, %v2792
    %v2997 = vpack.c.b16 %v2805, %v2799
    %v2998 = vpack.c.b16 %v2806, %v2800
    %v2999 = vpack.c.b16 %v2807, %v2801
    %v3000 = vpack.c.b16 %v2808, %v2802
    %v3001 = vpack.c.b16 %v2809, %v2803
    %v3002 = vpack.c.b16 %v2810, %v2804
    %v3003 = vpack.c.b16 %v2817, %v2811
    %v3004 = vpack.c.b16 %v2818, %v2812
    %v3005 = vpack.c.b16 %v2819, %v2813
    %v3006 = vpack.c.b16 %v2820, %v2814
    %v3007 = vpack.c.b16 %v2821, %v2815
    %v3008 = vpack.c.b16 %v2822, %v2816
    %v3009 = vpack.c.b16 %v2829, %v2823
    %v3010 = vpack.c.b16 %v2830, %v2824
    %v3011 = vpack.c.b16 %v2831, %v2825
    %v3012 = vpack.c.b16 %v2832, %v2826
    %v3013 = vpack.c.b16 %v2833, %v2827
    %v3014 = vpack.c.b16 %v2834, %v2828
    %v3015 = vpack.c.b16 %v2841, %v2835
    %v3016 = vpack.c.b16 %v2842, %v2836
    %v3017 = vpack.c.b16 %v2843, %v2837
    %v3018 = vpack.c.b16 %v2844, %v2838
    %v3019 = vpack.c.b16 %v2845, %v2839
    %v3020 = vpack.c.b16 %v2846, %v2840
    %v3021 = vpack.c.b16 %v2853, %v2847
    %v3022 = vpack.c.b16 %v2854, %v2848
    %v3023 = vpack.c.b16 %v2855, %v2849
    %v3024 = vpack.c.b16 %v2856, %v2850
    %v3025 = vpack.c.b16 %v2857, %v2851
    %v3026 = vpack.c.b16 %v2858, %v2852
    %v3027 = vpack.c.b16 %v2865, %v2859
    %v3028 = vpack.c.b16 %v2866, %v2860
    %v3029 = vpack.c.b16 %v2867, %v2861
    %v3030 = vpack.c.b16 %v2868, %v2862
    %v3031 = vpack.c.b16 %v2869, %v2863
    %v3032 = vpack.c.b16 %v2870, %v2864
    %v3033 = vpack.c.b16 %v2877, %v2871
    %v3034 = vpack.c.b16 %v2878, %v2872
    %v3035 = vpack.c.b16 %v2879, %v2873
    %v3036 = vpack.c.b16 %v2880, %v2874
    %v3037 = vpack.c.b16 %v2881, %v2875
    %v3038 = vpack.c.b16 %v2882, %v2876
    %v3039 = vpack.c.b16 %v2889, %v2883
    %v3040 = vpack.c.b16 %v2890, %v2884
    %v3041 = vpack.c.b16 %v2891, %v2885
    %v3042 = vpack.c.b16 %v2892, %v2886
    %v3043 = vpack.c.b16 %v2893, %v2887
    %v3044 = vpack.c.b16 %v2894, %v2888
    %v3045 = vpack.c.b16 %v2901, %v2895
    %v3046 = vpack.c.b16 %v2902, %v2896
    %v3047 = vpack.c.b16 %v2903, %v2897
    %v3048 = vpack.c.b16 %v2904, %v2898
    %v3049 = vpack.c.b16 %v2905, %v2899
    %v3050 = vpack.c.b16 %v2906, %v2900
    %3195 = vmatprep.subr.bf16.mxu0 %v2908
    %3196 = vmatpush1.bf16.msra.mxu0 %v2907
    %3197 = vmatprep.subr.bf16.mxu0 %v2914
    %3198 = vmatpush1.bf16.msra.mxu0 %v2913
    %3199 = vmatprep.subr.bf16.mxu0 %v2920
    %3200 = vmatpush1.bf16.msra.mxu0 %v2919
    %3201 = vmatprep.subr.bf16.mxu0 %v2926
    %3202 = vmatpush1.bf16.msra.mxu0 %v2925
    %3203 = vmatprep.subr.bf16.mxu0 %v2932
    %3204 = vmatpush1.bf16.msra.mxu0 %v2931
    %3205 = vmatprep.subr.bf16.mxu0 %v2938
    %3206 = vmatpush1.bf16.msra.mxu0 %v2937
    %3207 = vmatprep.subr.bf16.mxu0 %v2944
    %3208 = vmatpush1.bf16.msra.mxu0 %v2943
    %3209 = vmatprep.subr.bf16.mxu0 %v2950
    %3210 = vmatpush1.bf16.msra.mxu0 %v2949
    %3211 = vmatprep.subr.bf16.mxu0 %v2956
    %3212 = vmatpush1.bf16.msra.mxu0 %v2955
    %3213 = vmatprep.subr.bf16.mxu0 %v2962
    %3214 = vmatpush1.bf16.msra.mxu0 %v2961
    %3215 = vmatprep.subr.bf16.mxu0 %v2968
    %3216 = vmatpush1.bf16.msra.mxu0 %v2967
    %3217 = vmatprep.subr.bf16.mxu0 %v2974
    %3218 = vmatpush1.bf16.msra.mxu0 %v2973
    %3219 = vmatprep.subr.bf16.mxu0 %v2980
    %3220 = vmatpush1.bf16.msra.mxu0 %v2979
    %3221 = vmatprep.subr.bf16.mxu0 %v2986
    %3222 = vmatpush1.bf16.msra.mxu0 %v2985
    %3223 = vmatprep.subr.bf16.mxu0 %v2992
    %3224 = vmatpush1.bf16.msra.mxu0 %v2991
    %3225 = vmatprep.subr.bf16.mxu0 %v2998
    %3226 = vmatpush1.bf16.msra.mxu0 %v2997
    %3227 = vmatprep.mubr.bf16.mxu0 %v2421
    %3228 = vmatmul.mubr.bf16.gmra.mrb[0].mxu0 %v2420
    %v3229 = vpop.f32.mrb[0].mxu0
    %v3230 = vadd.f32 %v2448, %v3229
    %v3231 = vpop.f32.mrb[0].mxu0
    %v3232 = vadd.f32 %v2452, %v3231
    %v3233 = vpop.f32.mrb[0].mxu0
    %v3234 = vadd.f32 %v2448, %v3233
    %v3235 = vpop.f32.mrb[0].mxu0
    %v3236 = vadd.f32 %v2452, %v3235
    %3237 = vmatprep.mubr.bf16.mxu0 %v2424
    %3238 = vmatmul.mubr.bf16.gmra.mrb[0].mxu0 %v2423
    %v3239 = vpop.f32.mrb[0].mxu0
    %v3240 = vadd.f32 %v2448, %v3239
    %v3241 = vpop.f32.mrb[0].mxu0
    %v3242 = vadd.f32 %v2452, %v3241
    %v3243 = vpop.f32.mrb[0].mxu0
    %v3244 = vadd.f32 %v2448, %v3243
    %v3245 = vpop.f32.mrb[0].mxu0
    %v3246 = vadd.f32 %v2452, %v3245
    %3247 = vmatprep.mubr.bf16.mxu0 %v2427
    %3248 = vmatmul.mubr.bf16.gmra.mrb[0].mxu0 %v2426
    %v3249 = vpop.f32.mrb[0].mxu0
    %v3250 = vadd.f32 %v2448, %v3249
    %v3251 = vpop.f32.mrb[0].mxu0
    %v3252 = vadd.f32 %v2452, %v3251
    %v3253 = vpop.f32.mrb[0].mxu0
    %v3254 = vadd.f32 %v2448, %v3253
    %v3255 = vpop.f32.mrb[0].mxu0
    %v3256 = vadd.f32 %v2452, %v3255
    %3257 = vmatprep.mubr.bf16.mxu0 %v2430
    %3258 = vmatmul.mubr.bf16.gmra.mrb[0].mxu0 %v2429
    %v3259 = vpop.f32.mrb[0].mxu0
    %v3260 = vadd.f32 %v2448, %v3259
    %v3261 = vpop.f32.mrb[0].mxu0
    %v3262 = vadd.f32 %v2452, %v3261
    %v3263 = vpop.f32.mrb[0].mxu0
    %v3264 = vadd.f32 %v2448, %v3263
    %v3265 = vpop.f32.mrb[0].mxu0
    %v3266 = vadd.f32 %v2452, %v3265
    %3267 = vmatprep.mubr.bf16.mxu0 %v2433
    %3268 = vmatmul.mubr.bf16.gmra.mrb[0].mxu0 %v2432
    %v3269 = vpop.f32.mrb[0].mxu0
    %v3270 = vadd.f32 %v2448, %v3269
    %v3271 = vpop.f32.mrb[0].mxu0
    %v3272 = vadd.f32 %v2452, %v3271
    %v3273 = vpop.f32.mrb[0].mxu0
    %v3274 = vadd.f32 %v2448, %v3273
    %v3275 = vpop.f32.mrb[0].mxu0
    %v3276 = vadd.f32 %v2452, %v3275
    %3277 = vmatprep.mubr.bf16.mxu0 %v2436
    %3278 = vmatmul.mubr.bf16.gmra.mrb[0].mxu0 %v2435
    %v3279 = vpop.f32.mrb[0].mxu0
    %v3280 = vadd.f32 %v2448, %v3279
    %v3281 = vpop.f32.mrb[0].mxu0
    %v3282 = vadd.f32 %v2452, %v3281
    %v3283 = vpop.f32.mrb[0].mxu0
    %v3284 = vadd.f32 %v2448, %v3283
    %v3285 = vpop.f32.mrb[0].mxu0
    %v3286 = vadd.f32 %v2452, %v3285
    %3287 = vmatprep.mubr.bf16.mxu0 %v2439
    %3288 = vmatmul.mubr.bf16.gmra.mrb[0].mxu0 %v2438
    %v3289 = vpop.f32.mrb[0].mxu0
    %v3290 = vadd.f32 %v2448, %v3289
    %v3291 = vpop.f32.mrb[0].mxu0
    %v3292 = vadd.f32 %v2452, %v3291
    %v3293 = vpop.f32.mrb[0].mxu0
    %v3294 = vadd.f32 %v2448, %v3293
    %v3295 = vpop.f32.mrb[0].mxu0
    %v3296 = vadd.f32 %v2452, %v3295
    %3297 = vmatprep.mubr.bf16.mxu0 %v2442
    %3298 = vmatmul.mubr.bf16.gmra.mrb[0].mxu0 %v2441
    %v3299 = vpop.f32.mrb[0].mxu0
    %v3300 = vadd.f32 %v2448, %v3299
    %v3301 = vpop.f32.mrb[0].mxu0
    %v3302 = vadd.f32 %v2452, %v3301
    %v3303 = vpop.f32.mrb[0].mxu0
    %v3304 = vadd.f32 %v2448, %v3303
    %v3305 = vpop.f32.mrb[0].mxu0
    %v3306 = vadd.f32 %v2452, %v3305
    %3307 = vdwg.mxu0
    %3308 = vmatprep.subr.bf16.mxu0 %v3004
    %3309 = vmatpush1.bf16.msra.mxu0 %v3003
    %3310 = vmatprep.subr.bf16.mxu0 %v3010
    %3311 = vmatpush1.bf16.msra.mxu0 %v3009
    %3312 = vmatprep.subr.bf16.mxu0 %v3016
    %3313 = vmatpush1.bf16.msra.mxu0 %v3015
    %3314 = vmatprep.subr.bf16.mxu0 %v3022
    %3315 = vmatpush1.bf16.msra.mxu0 %v3021
    %3316 = vmatprep.subr.bf16.mxu0 %v3028
    %3317 = vmatpush1.bf16.msra.mxu0 %v3027
    %3318 = vmatprep.subr.bf16.mxu0 %v3034
    %3319 = vmatpush1.bf16.msra.mxu0 %v3033
    %3320 = vmatprep.subr.bf16.mxu0 %v3040
    %3321 = vmatpush1.bf16.msra.mxu0 %v3039
    %3322 = vmatprep.subr.bf16.mxu0 %v3046
    %3323 = vmatpush1.bf16.msra.mxu0 %v3045
    %3324 = vmatprep.subr.bf16.mxu0 0
    %3325 = vmatpush1.bf16.msra.mxu0 0
    %3326 = vmatprep.subr.bf16.mxu0 0
    %3327 = vmatpush1.bf16.msra.mxu0 0
    %3328 = vmatprep.subr.bf16.mxu0 0
    %3329 = vmatpush1.bf16.msra.mxu0 0
    %3330 = vmatprep.subr.bf16.mxu0 0
    %3331 = vmatpush1.bf16.msra.mxu0 0
    %3332 = vmatprep.subr.bf16.mxu0 0
    %3333 = vmatpush1.bf16.msra.mxu0 0
    %3334 = vmatprep.subr.bf16.mxu0 0
    %3335 = vmatpush1.bf16.msra.mxu0 0
    %3336 = vmatprep.subr.bf16.mxu0 0
    %3337 = vmatpush1.bf16.msra.mxu0 0
    %3338 = vmatprep.subr.bf16.mxu0 0
    %3339 = vmatpush1.bf16.msra.mxu0 0
    %3340 = vmatprep.mubr.bf16.mxu0 0
    %3341 = vmatmul.mubr.bf16.gmra.mrb[0].mxu0 %v2422
    %v3342 = vpop.f32.mrb[0].mxu0
    %v3343 = vadd.f32 %v3230, %v3342
    %v3344 = vpop.f32.mrb[0].mxu0
    %v3345 = vadd.f32 %v3232, %v3344
    %v3346 = vpop.f32.mrb[0].mxu0
    %v3347 = vadd.f32 %v3234, %v3346
    %v3348 = vpop.f32.mrb[0].mxu0
    %v3349 = vadd.f32 %v3236, %v3348
    %3350 = vmatprep.mubr.bf16.mxu0 0
    %3351 = vmatmul.mubr.bf16.gmra.mrb[0].mxu0 %v2425
    %v3352 = vpop.f32.mrb[0].mxu0
    %v3353 = vadd.f32 %v3240, %v3352
    %v3354 = vpop.f32.mrb[0].mxu0
    %v3355 = vadd.f32 %v3242, %v3354
    %v3356 = vpop.f32.mrb[0].mxu0
    %v3357 = vadd.f32 %v3244, %v3356
    %v3358 = vpop.f32.mrb[0].mxu0
    %v3359 = vadd.f32 %v3246, %v3358
    %3360 = vmatprep.mubr.bf16.mxu0 0
    %3361 = vmatmul.mubr.bf16.gmra.mrb[0].mxu0 %v2428
    %v3362 = vpop.f32.mrb[0].mxu0
    %v3363 = vadd.f32 %v3250, %v3362
    %v3364 = vpop.f32.mrb[0].mxu0
    %v3365 = vadd.f32 %v3252, %v3364
    %v3366 = vpop.f32.mrb[0].mxu0
    %v3367 = vadd.f32 %v3254, %v3366
    %v3368 = vpop.f32.mrb[0].mxu0
    %v3369 = vadd.f32 %v3256, %v3368
    %3370 = vmatprep.mubr.bf16.mxu0 0
    %3371 = vmatmul.mubr.bf16.gmra.mrb[0].mxu0 %v2431
    %v3372 = vpop.f32.mrb[0].mxu0
    %v3373 = vadd.f32 %v3260, %v3372
    %v3374 = vpop.f32.mrb[0].mxu0
    %v3375 = vadd.f32 %v3262, %v3374
    %v3376 = vpop.f32.mrb[0].mxu0
    %v3377 = vadd.f32 %v3264, %v3376
    %v3378 = vpop.f32.mrb[0].mxu0
    %v3379 = vadd.f32 %v3266, %v3378
    %3380 = vmatprep.mubr.bf16.mxu0 0
    %3381 = vmatmul.mubr.bf16.gmra.mrb[0].mxu0 %v2434
    %v3382 = vpop.f32.mrb[0].mxu0
    %v3383 = vadd.f32 %v3270, %v3382
    %v3384 = vpop.f32.mrb[0].mxu0
    %v3385 = vadd.f32 %v3272, %v3384
    %v3386 = vpop.f32.mrb[0].mxu0
    %v3387 = vadd.f32 %v3274, %v3386
    %v3388 = vpop.f32.mrb[0].mxu0
    %v3389 = vadd.f32 %v3276, %v3388
    %3390 = vmatprep.mubr.bf16.mxu0 0
    %3391 = vmatmul.mubr.bf16.gmra.mrb[0].mxu0 %v2437
    %v3392 = vpop.f32.mrb[0].mxu0
    %v3393 = vadd.f32 %v3280, %v3392
    %v3394 = vpop.f32.mrb[0].mxu0
    %v3395 = vadd.f32 %v3282, %v3394
    %v3396 = vpop.f32.mrb[0].mxu0
    %v3397 = vadd.f32 %v3284, %v3396
    %v3398 = vpop.f32.mrb[0].mxu0
    %v3399 = vadd.f32 %v3286, %v3398
    %3400 = vmatprep.mubr.bf16.mxu0 0
    %3401 = vmatmul.mubr.bf16.gmra.mrb[0].mxu0 %v2440
    %v3402 = vpop.f32.mrb[0].mxu0
    %v3403 = vadd.f32 %v3290, %v3402
    %v3404 = vpop.f32.mrb[0].mxu0
    %v3405 = vadd.f32 %v3292, %v3404
    %v3406 = vpop.f32.mrb[0].mxu0
    %v3407 = vadd.f32 %v3294, %v3406
    %v3408 = vpop.f32.mrb[0].mxu0
    %v3409 = vadd.f32 %v3296, %v3408
    %3410 = vmatprep.mubr.bf16.mxu0 0
    %3411 = vmatmul.mubr.bf16.gmra.mrb[0].mxu0 %v2443
    %v3412 = vpop.f32.mrb[0].mxu0
    %v3413 = vadd.f32 %v3300, %v3412
    %v3414 = vpop.f32.mrb[0].mxu0
    %v3415 = vadd.f32 %v3302, %v3414
    %v3416 = vpop.f32.mrb[0].mxu0
    %v3417 = vadd.f32 %v3304, %v3416
    %v3418 = vpop.f32.mrb[0].mxu0
    %v3419 = vadd.f32 %v3306, %v3418
    %3420 = vdwg.mxu0
    %3421 = vmatprep.subr.bf16.mxu0 %v2910
    %3422 = vmatpush1.bf16.msra.mxu0 %v2909
    %3423 = vmatprep.subr.bf16.mxu0 %v2916
    %3424 = vmatpush1.bf16.msra.mxu0 %v2915
    %3425 = vmatprep.subr.bf16.mxu0 %v2922
    %3426 = vmatpush1.bf16.msra.mxu0 %v2921
    %3427 = vmatprep.subr.bf16.mxu0 %v2928
    %3428 = vmatpush1.bf16.msra.mxu0 %v2927
    %3429 = vmatprep.subr.bf16.mxu0 %v2934
    %3430 = vmatpush1.bf16.msra.mxu0 %v2933
    %3431 = vmatprep.subr.bf16.mxu0 %v2940
    %3432 = vmatpush1.bf16.msra.mxu0 %v2939
    %3433 = vmatprep.subr.bf16.mxu0 %v2946
    %3434 = vmatpush1.bf16.msra.mxu0 %v2945
    %3435 = vmatprep.subr.bf16.mxu0 %v2952
    %3436 = vmatpush1.bf16.msra.mxu0 %v2951
    %3437 = vmatprep.subr.bf16.mxu0 %v2958
    %3438 = vmatpush1.bf16.msra.mxu0 %v2957
    %3439 = vmatprep.subr.bf16.mxu0 %v2964
    %3440 = vmatpush1.bf16.msra.mxu0 %v2963
    %3441 = vmatprep.subr.bf16.mxu0 %v2970
    %3442 = vmatpush1.bf16.msra.mxu0 %v2969
    %3443 = vmatprep.subr.bf16.mxu0 %v2976
    %3444 = vmatpush1.bf16.msra.mxu0 %v2975
    %3445 = vmatprep.subr.bf16.mxu0 %v2982
    %3446 = vmatpush1.bf16.msra.mxu0 %v2981
    %3447 = vmatprep.subr.bf16.mxu0 %v2988
    %3448 = vmatpush1.bf16.msra.mxu0 %v2987
    %3449 = vmatprep.subr.bf16.mxu0 %v2994
    %3450 = vmatpush1.bf16.msra.mxu0 %v2993
    %3451 = vmatprep.subr.bf16.mxu0 %v3000
    %3452 = vmatpush1.bf16.msra.mxu0 %v2999
    %3453 = vmatprep.mubr.bf16.mxu0 %v2421
    %3454 = vmatmul.mubr.bf16.gmra.mrb[0].mxu0 %v2420
    %v3455 = vpop.f32.mrb[0].mxu0
    %v3456 = vadd.f32 %v2456, %v3455
    %v3457 = vpop.f32.mrb[0].mxu0
    %v3458 = vadd.f32 %v2460, %v3457
    %v3459 = vpop.f32.mrb[0].mxu0
    %v3460 = vadd.f32 %v2456, %v3459
    %v3461 = vpop.f32.mrb[0].mxu0
    %v3462 = vadd.f32 %v2460, %v3461
    %3463 = vmatprep.mubr.bf16.mxu0 %v2424
    %3464 = vmatmul.mubr.bf16.gmra.mrb[0].mxu0 %v2423
    %v3465 = vpop.f32.mrb[0].mxu0
    %v3466 = vadd.f32 %v2456, %v3465
    %v3467 = vpop.f32.mrb[0].mxu0
    %v3468 = vadd.f32 %v2460, %v3467
    %v3469 = vpop.f32.mrb[0].mxu0
    %v3470 = vadd.f32 %v2456, %v3469
    %v3471 = vpop.f32.mrb[0].mxu0
    %v3472 = vadd.f32 %v2460, %v3471
    %3473 = vmatprep.mubr.bf16.mxu0 %v2427
    %3474 = vmatmul.mubr.bf16.gmra.mrb[0].mxu0 %v2426
    %v3475 = vpop.f32.mrb[0].mxu0
    %v3476 = vadd.f32 %v2456, %v3475
    %v3477 = vpop.f32.mrb[0].mxu0
    %v3478 = vadd.f32 %v2460, %v3477
    %v3479 = vpop.f32.mrb[0].mxu0
    %v3480 = vadd.f32 %v2456, %v3479
    %v3481 = vpop.f32.mrb[0].mxu0
    %v3482 = vadd.f32 %v2460, %v3481
    %3483 = vmatprep.mubr.bf16.mxu0 %v2430
    %3484 = vmatmul.mubr.bf16.gmra.mrb[0].mxu0 %v2429
    %v3485 = vpop.f32.mrb[0].mxu0
    %v3486 = vadd.f32 %v2456, %v3485
    %v3487 = vpop.f32.mrb[0].mxu0
    %v3488 = vadd.f32 %v2460, %v3487
    %v3489 = vpop.f32.mrb[0].mxu0
    %v3490 = vadd.f32 %v2456, %v3489
    %v3491 = vpop.f32.mrb[0].mxu0
    %v3492 = vadd.f32 %v2460, %v3491
    %3493 = vmatprep.mubr.bf16.mxu0 %v2433
    %3494 = vmatmul.mubr.bf16.gmra.mrb[0].mxu0 %v2432
    %v3495 = vpop.f32.mrb[0].mxu0
    %v3496 = vadd.f32 %v2456, %v3495
    %v3497 = vpop.f32.mrb[0].mxu0
    %v3498 = vadd.f32 %v2460, %v3497
    %v3499 = vpop.f32.mrb[0].mxu0
    %v3500 = vadd.f32 %v2456, %v3499
    %v3501 = vpop.f32.mrb[0].mxu0
    %v3502 = vadd.f32 %v2460, %v3501
    %3503 = vmatprep.mubr.bf16.mxu0 %v2436
    %3504 = vmatmul.mubr.bf16.gmra.mrb[0].mxu0 %v2435
    %v3505 = vpop.f32.mrb[0].mxu0
    %v3506 = vadd.f32 %v2456, %v3505
    %v3507 = vpop.f32.mrb[0].mxu0
    %v3508 = vadd.f32 %v2460, %v3507
    %v3509 = vpop.f32.mrb[0].mxu0
    %v3510 = vadd.f32 %v2456, %v3509
    %v3511 = vpop.f32.mrb[0].mxu0
    %v3512 = vadd.f32 %v2460, %v3511
    %3513 = vmatprep.mubr.bf16.mxu0 %v2439
    %3514 = vmatmul.mubr.bf16.gmra.mrb[0].mxu0 %v2438
    %v3515 = vpop.f32.mrb[0].mxu0
    %v3516 = vadd.f32 %v2456, %v3515
    %v3517 = vpop.f32.mrb[0].mxu0
    %v3518 = vadd.f32 %v2460, %v3517
    %v3519 = vpop.f32.mrb[0].mxu0
    %v3520 = vadd.f32 %v2456, %v3519
    %v3521 = vpop.f32.mrb[0].mxu0
    %v3522 = vadd.f32 %v2460, %v3521
    %3523 = vmatprep.mubr.bf16.mxu0 %v2442
    %3524 = vmatmul.mubr.bf16.gmra.mrb[0].mxu0 %v2441
    %v3525 = vpop.f32.mrb[0].mxu0
    %v3526 = vadd.f32 %v2456, %v3525
    %v3527 = vpop.f32.mrb[0].mxu0
    %v3528 = vadd.f32 %v2460, %v3527
    %v3529 = vpop.f32.mrb[0].mxu0
    %v3530 = vadd.f32 %v2456, %v3529
    %v3531 = vpop.f32.mrb[0].mxu0
    %v3532 = vadd.f32 %v2460, %v3531
    %3533 = vdwg.mxu0
    %3534 = vmatprep.subr.bf16.mxu0 %v3006
    %3535 = vmatpush1.bf16.msra.mxu0 %v3005
    %3536 = vmatprep.subr.bf16.mxu0 %v3012
    %3537 = vmatpush1.bf16.msra.mxu0 %v3011
    %3538 = vmatprep.subr.bf16.mxu0 %v3018
    %3539 = vmatpush1.bf16.msra.mxu0 %v3017
    %3540 = vmatprep.subr.bf16.mxu0 %v3024
    %3541 = vmatpush1.bf16.msra.mxu0 %v3023
    %3542 = vmatprep.subr.bf16.mxu0 %v3030
    %3543 = vmatpush1.bf16.msra.mxu0 %v3029
    %3544 = vmatprep.subr.bf16.mxu0 %v3036
    %3545 = vmatpush1.bf16.msra.mxu0 %v3035
    %3546 = vmatprep.subr.bf16.mxu0 %v3042
    %3547 = vmatpush1.bf16.msra.mxu0 %v3041
    %3548 = vmatprep.subr.bf16.mxu0 %v3048
    %3549 = vmatpush1.bf16.msra.mxu0 %v3047
    %3550 = vmatprep.subr.bf16.mxu0 0
    %3551 = vmatpush1.bf16.msra.mxu0 0
    %3552 = vmatprep.subr.bf16.mxu0 0
    %3553 = vmatpush1.bf16.msra.mxu0 0
    %3554 = vmatprep.subr.bf16.mxu0 0
    %3555 = vmatpush1.bf16.msra.mxu0 0
    %3556 = vmatprep.subr.bf16.mxu0 0
    %3557 = vmatpush1.bf16.msra.mxu0 0
    %3558 = vmatprep.subr.bf16.mxu0 0
    %3559 = vmatpush1.bf16.msra.mxu0 0
    %3560 = vmatprep.subr.bf16.mxu0 0
    %3561 = vmatpush1.bf16.msra.mxu0 0
    %3562 = vmatprep.subr.bf16.mxu0 0
    %3563 = vmatpush1.bf16.msra.mxu0 0
    %3564 = vmatprep.subr.bf16.mxu0 0
    %3565 = vmatpush1.bf16.msra.mxu0 0
    %3566 = vmatprep.mubr.bf16.mxu0 0
    %3567 = vmatmul.mubr.bf16.gmra.mrb[0].mxu0 %v2422
    %v3568 = vpop.f32.mrb[0].mxu0
    %v3569 = vadd.f32 %v3456, %v3568
    %v3570 = vpop.f32.mrb[0].mxu0
    %v3571 = vadd.f32 %v3458, %v3570
    %v3572 = vpop.f32.mrb[0].mxu0
    %v3573 = vadd.f32 %v3460, %v3572
    %v3574 = vpop.f32.mrb[0].mxu0
    %v3575 = vadd.f32 %v3462, %v3574
    %3576 = vmatprep.mubr.bf16.mxu0 0
    %3577 = vmatmul.mubr.bf16.gmra.mrb[0].mxu0 %v2425
    %v3578 = vpop.f32.mrb[0].mxu0
    %v3579 = vadd.f32 %v3466, %v3578
    %v3580 = vpop.f32.mrb[0].mxu0
    %v3581 = vadd.f32 %v3468, %v3580
    %v3582 = vpop.f32.mrb[0].mxu0
    %v3583 = vadd.f32 %v3470, %v3582
    %v3584 = vpop.f32.mrb[0].mxu0
    %v3585 = vadd.f32 %v3472, %v3584
    %3586 = vmatprep.mubr.bf16.mxu0 0
    %3587 = vmatmul.mubr.bf16.gmra.mrb[0].mxu0 %v2428
    %v3588 = vpop.f32.mrb[0].mxu0
    %v3589 = vadd.f32 %v3476, %v3588
    %v3590 = vpop.f32.mrb[0].mxu0
    %v3591 = vadd.f32 %v3478, %v3590
    %v3592 = vpop.f32.mrb[0].mxu0
    %v3593 = vadd.f32 %v3480, %v3592
    %v3594 = vpop.f32.mrb[0].mxu0
    %v3595 = vadd.f32 %v3482, %v3594
    %3596 = vmatprep.mubr.bf16.mxu0 0
    %3597 = vmatmul.mubr.bf16.gmra.mrb[0].mxu0 %v2431
    %v3598 = vpop.f32.mrb[0].mxu0
    %v3599 = vadd.f32 %v3486, %v3598
    %v3600 = vpop.f32.mrb[0].mxu0
    %v3601 = vadd.f32 %v3488, %v3600
    %v3602 = vpop.f32.mrb[0].mxu0
    %v3603 = vadd.f32 %v3490, %v3602
    %v3604 = vpop.f32.mrb[0].mxu0
    %v3605 = vadd.f32 %v3492, %v3604
    %3606 = vmatprep.mubr.bf16.mxu0 0
    %3607 = vmatmul.mubr.bf16.gmra.mrb[0].mxu0 %v2434
    %v3608 = vpop.f32.mrb[0].mxu0
    %v3609 = vadd.f32 %v3496, %v3608
    %v3610 = vpop.f32.mrb[0].mxu0
    %v3611 = vadd.f32 %v3498, %v3610
    %v3612 = vpop.f32.mrb[0].mxu0
    %v3613 = vadd.f32 %v3500, %v3612
    %v3614 = vpop.f32.mrb[0].mxu0
    %v3615 = vadd.f32 %v3502, %v3614
    %3616 = vmatprep.mubr.bf16.mxu0 0
    %3617 = vmatmul.mubr.bf16.gmra.mrb[0].mxu0 %v2437
    %v3618 = vpop.f32.mrb[0].mxu0
    %v3619 = vadd.f32 %v3506, %v3618
    %v3620 = vpop.f32.mrb[0].mxu0
    %v3621 = vadd.f32 %v3508, %v3620
    %v3622 = vpop.f32.mrb[0].mxu0
    %v3623 = vadd.f32 %v3510, %v3622
    %v3624 = vpop.f32.mrb[0].mxu0
    %v3625 = vadd.f32 %v3512, %v3624
    %3626 = vmatprep.mubr.bf16.mxu0 0
    %3627 = vmatmul.mubr.bf16.gmra.mrb[0].mxu0 %v2440
    %v3628 = vpop.f32.mrb[0].mxu0
    %v3629 = vadd.f32 %v3516, %v3628
    %v3630 = vpop.f32.mrb[0].mxu0
    %v3631 = vadd.f32 %v3518, %v3630
    %v3632 = vpop.f32.mrb[0].mxu0
    %v3633 = vadd.f32 %v3520, %v3632
    %v3634 = vpop.f32.mrb[0].mxu0
    %v3635 = vadd.f32 %v3522, %v3634
    %3636 = vmatprep.mubr.bf16.mxu0 0
    %3637 = vmatmul.mubr.bf16.gmra.mrb[0].mxu0 %v2443
    %v3638 = vpop.f32.mrb[0].mxu0
    %v3639 = vadd.f32 %v3526, %v3638
    %v3640 = vpop.f32.mrb[0].mxu0
    %v3641 = vadd.f32 %v3528, %v3640
    %v3642 = vpop.f32.mrb[0].mxu0
    %v3643 = vadd.f32 %v3530, %v3642
    %v3644 = vpop.f32.mrb[0].mxu0
    %v3645 = vadd.f32 %v3532, %v3644
    %3646 = vdwg.mxu0
    %3647 = vmatprep.subr.bf16.mxu0 %v2912
    %3648 = vmatpush1.bf16.msra.mxu0 %v2911
    %3649 = vmatprep.subr.bf16.mxu0 %v2918
    %3650 = vmatpush1.bf16.msra.mxu0 %v2917
    %3651 = vmatprep.subr.bf16.mxu0 %v2924
    %3652 = vmatpush1.bf16.msra.mxu0 %v2923
    %3653 = vmatprep.subr.bf16.mxu0 %v2930
    %3654 = vmatpush1.bf16.msra.mxu0 %v2929
    %3655 = vmatprep.subr.bf16.mxu0 %v2936
    %3656 = vmatpush1.bf16.msra.mxu0 %v2935
    %3657 = vmatprep.subr.bf16.mxu0 %v2942
    %3658 = vmatpush1.bf16.msra.mxu0 %v2941
    %3659 = vmatprep.subr.bf16.mxu0 %v2948
    %3660 = vmatpush1.bf16.msra.mxu0 %v2947
    %3661 = vmatprep.subr.bf16.mxu0 %v2954
    %3662 = vmatpush1.bf16.msra.mxu0 %v2953
    %3663 = vmatprep.subr.bf16.mxu0 %v2960
    %3664 = vmatpush1.bf16.msra.mxu0 %v2959
    %3665 = vmatprep.subr.bf16.mxu0 %v2966
    %3666 = vmatpush1.bf16.msra.mxu0 %v2965
    %3667 = vmatprep.subr.bf16.mxu0 %v2972
    %3668 = vmatpush1.bf16.msra.mxu0 %v2971
    %3669 = vmatprep.subr.bf16.mxu0 %v2978
    %3670 = vmatpush1.bf16.msra.mxu0 %v2977
    %3671 = vmatprep.subr.bf16.mxu0 %v2984
    %3672 = vmatpush1.bf16.msra.mxu0 %v2983
    %3673 = vmatprep.subr.bf16.mxu0 %v2990
    %3674 = vmatpush1.bf16.msra.mxu0 %v2989
    %3675 = vmatprep.subr.bf16.mxu0 %v2996
    %3676 = vmatpush1.bf16.msra.mxu0 %v2995
    %3677 = vmatprep.subr.bf16.mxu0 %v3002
    %3678 = vmatpush1.bf16.msra.mxu0 %v3001
    %3679 = vmatprep.mubr.bf16.mxu0 %v2421
    %3680 = vmatmul.mubr.bf16.gmra.mrb[0].mxu0 %v2420
    %v3681 = vpop.f32.mrb[0].mxu0
    %v3682 = vadd.f32 %v2464, %v3681
    %v3683 = vpop.f32.mrb[0].mxu0
    %v3684 = vadd.f32 %v2468, %v3683
    %v3685 = vpop.f32.mrb[0].mxu0
    %v3686 = vadd.f32 %v2464, %v3685
    %v3687 = vpop.f32.mrb[0].mxu0
    %v3688 = vadd.f32 %v2468, %v3687
    %3689 = vmatprep.mubr.bf16.mxu0 %v2424
    %3690 = vmatmul.mubr.bf16.gmra.mrb[0].mxu0 %v2423
    %v3691 = vpop.f32.mrb[0].mxu0
    %v3692 = vadd.f32 %v2464, %v3691
    %v3693 = vpop.f32.mrb[0].mxu0
    %v3694 = vadd.f32 %v2468, %v3693
    %v3695 = vpop.f32.mrb[0].mxu0
    %v3696 = vadd.f32 %v2464, %v3695
    %v3697 = vpop.f32.mrb[0].mxu0
    %v3698 = vadd.f32 %v2468, %v3697
    %3699 = vmatprep.mubr.bf16.mxu0 %v2427
    %3700 = vmatmul.mubr.bf16.gmra.mrb[0].mxu0 %v2426
    %v3701 = vpop.f32.mrb[0].mxu0
    %v3702 = vadd.f32 %v2464, %v3701
    %v3703 = vpop.f32.mrb[0].mxu0
    %v3704 = vadd.f32 %v2468, %v3703
    %v3705 = vpop.f32.mrb[0].mxu0
    %v3706 = vadd.f32 %v2464, %v3705
    %v3707 = vpop.f32.mrb[0].mxu0
    %v3708 = vadd.f32 %v2468, %v3707
    %3709 = vmatprep.mubr.bf16.mxu0 %v2430
    %3710 = vmatmul.mubr.bf16.gmra.mrb[0].mxu0 %v2429
    %v3711 = vpop.f32.mrb[0].mxu0
    %v3712 = vadd.f32 %v2464, %v3711
    %v3713 = vpop.f32.mrb[0].mxu0
    %v3714 = vadd.f32 %v2468, %v3713
    %v3715 = vpop.f32.mrb[0].mxu0
    %v3716 = vadd.f32 %v2464, %v3715
    %v3717 = vpop.f32.mrb[0].mxu0
    %v3718 = vadd.f32 %v2468, %v3717
    %3719 = vmatprep.mubr.bf16.mxu0 %v2433
    %3720 = vmatmul.mubr.bf16.gmra.mrb[0].mxu0 %v2432
    %v3721 = vpop.f32.mrb[0].mxu0
    %v3722 = vadd.f32 %v2464, %v3721
    %v3723 = vpop.f32.mrb[0].mxu0
    %v3724 = vadd.f32 %v2468, %v3723
    %v3725 = vpop.f32.mrb[0].mxu0
    %v3726 = vadd.f32 %v2464, %v3725
    %v3727 = vpop.f32.mrb[0].mxu0
    %v3728 = vadd.f32 %v2468, %v3727
    %3729 = vmatprep.mubr.bf16.mxu0 %v2436
    %3730 = vmatmul.mubr.bf16.gmra.mrb[0].mxu0 %v2435
    %v3731 = vpop.f32.mrb[0].mxu0
    %v3732 = vadd.f32 %v2464, %v3731
    %v3733 = vpop.f32.mrb[0].mxu0
    %v3734 = vadd.f32 %v2468, %v3733
    %v3735 = vpop.f32.mrb[0].mxu0
    %v3736 = vadd.f32 %v2464, %v3735
    %v3737 = vpop.f32.mrb[0].mxu0
    %v3738 = vadd.f32 %v2468, %v3737
    %3739 = vmatprep.mubr.bf16.mxu0 %v2439
    %3740 = vmatmul.mubr.bf16.gmra.mrb[0].mxu0 %v2438
    %v3741 = vpop.f32.mrb[0].mxu0
    %v3742 = vadd.f32 %v2464, %v3741
    %v3743 = vpop.f32.mrb[0].mxu0
    %v3744 = vadd.f32 %v2468, %v3743
    %v3745 = vpop.f32.mrb[0].mxu0
    %v3746 = vadd.f32 %v2464, %v3745
    %v3747 = vpop.f32.mrb[0].mxu0
    %v3748 = vadd.f32 %v2468, %v3747
    %3749 = vmatprep.mubr.bf16.mxu0 %v2442
    %3750 = vmatmul.mubr.bf16.gmra.mrb[0].mxu0 %v2441
    %v3751 = vpop.f32.mrb[0].mxu0
    %v3752 = vadd.f32 %v2464, %v3751
    %v3753 = vpop.f32.mrb[0].mxu0
    %v3754 = vadd.f32 %v2468, %v3753
    %v3755 = vpop.f32.mrb[0].mxu0
    %v3756 = vadd.f32 %v2464, %v3755
    %v3757 = vpop.f32.mrb[0].mxu0
    %v3758 = vadd.f32 %v2468, %v3757
    %3759 = vdwg.mxu0
    %3760 = vmatprep.subr.bf16.mxu0 %v3008
    %3761 = vmatpush1.bf16.msra.mxu0 %v3007
    %3762 = vmatprep.subr.bf16.mxu0 %v3014
    %3763 = vmatpush1.bf16.msra.mxu0 %v3013
    %3764 = vmatprep.subr.bf16.mxu0 %v3020
    %3765 = vmatpush1.bf16.msra.mxu0 %v3019
    %3766 = vmatprep.subr.bf16.mxu0 %v3026
    %3767 = vmatpush1.bf16.msra.mxu0 %v3025
    %3768 = vmatprep.subr.bf16.mxu0 %v3032
    %3769 = vmatpush1.bf16.msra.mxu0 %v3031
    %3770 = vmatprep.subr.bf16.mxu0 %v3038
    %3771 = vmatpush1.bf16.msra.mxu0 %v3037
    %3772 = vmatprep.subr.bf16.mxu0 %v3044
    %3773 = vmatpush1.bf16.msra.mxu0 %v3043
    %3774 = vmatprep.subr.bf16.mxu0 %v3050
    %3775 = vmatpush1.bf16.msra.mxu0 %v3049
    %3776 = vmatprep.subr.bf16.mxu0 0
    %3777 = vmatpush1.bf16.msra.mxu0 0
    %3778 = vmatprep.subr.bf16.mxu0 0
    %3779 = vmatpush1.bf16.msra.mxu0 0
    %3780 = vmatprep.subr.bf16.mxu0 0
    %3781 = vmatpush1.bf16.msra.mxu0 0
    %3782 = vmatprep.subr.bf16.mxu0 0
    %3783 = vmatpush1.bf16.msra.mxu0 0
    %3784 = vmatprep.subr.bf16.mxu0 0
    %3785 = vmatpush1.bf16.msra.mxu0 0
    %3786 = vmatprep.subr.bf16.mxu0 0
    %3787 = vmatpush1.bf16.msra.mxu0 0
    %3788 = vmatprep.subr.bf16.mxu0 0
    %3789 = vmatpush1.bf16.msra.mxu0 0
    %3790 = vmatprep.subr.bf16.mxu0 0
    %3791 = vmatpush1.bf16.msra.mxu0 0
    %3792 = vmatprep.mubr.bf16.mxu0 0
    %3793 = vmatmul.mubr.bf16.gmra.mrb[0].mxu0 %v2422
    %v3794 = vpop.f32.mrb[0].mxu0
    %v3795 = vadd.f32 %v3682, %v3794
    %v3796 = vpop.f32.mrb[0].mxu0
    %v3797 = vadd.f32 %v3684, %v3796
    %v3798 = vpop.f32.mrb[0].mxu0
    %v3799 = vadd.f32 %v3686, %v3798
    %v3800 = vpop.f32.mrb[0].mxu0
    %v3801 = vadd.f32 %v3688, %v3800
    %3802 = vmatprep.mubr.bf16.mxu0 0
    %3803 = vmatmul.mubr.bf16.gmra.mrb[0].mxu0 %v2425
    %v3804 = vpop.f32.mrb[0].mxu0
    %v3805 = vadd.f32 %v3692, %v3804
    %v3806 = vpop.f32.mrb[0].mxu0
    %v3807 = vadd.f32 %v3694, %v3806
    %v3808 = vpop.f32.mrb[0].mxu0
    %v3809 = vadd.f32 %v3696, %v3808
    %v3810 = vpop.f32.mrb[0].mxu0
    %v3811 = vadd.f32 %v3698, %v3810
    %3812 = vmatprep.mubr.bf16.mxu0 0
    %3813 = vmatmul.mubr.bf16.gmra.mrb[0].mxu0 %v2428
    %v3814 = vpop.f32.mrb[0].mxu0
    %v3815 = vadd.f32 %v3702, %v3814
    %v3816 = vpop.f32.mrb[0].mxu0
    %v3817 = vadd.f32 %v3704, %v3816
    %v3818 = vpop.f32.mrb[0].mxu0
    %v3819 = vadd.f32 %v3706, %v3818
    %v3820 = vpop.f32.mrb[0].mxu0
    %v3821 = vadd.f32 %v3708, %v3820
    %3822 = vmatprep.mubr.bf16.mxu0 0
    %3823 = vmatmul.mubr.bf16.gmra.mrb[0].mxu0 %v2431
    %v3824 = vpop.f32.mrb[0].mxu0
    %v3825 = vadd.f32 %v3712, %v3824
    %v3826 = vpop.f32.mrb[0].mxu0
    %v3827 = vadd.f32 %v3714, %v3826
    %v3828 = vpop.f32.mrb[0].mxu0
    %v3829 = vadd.f32 %v3716, %v3828
    %v3830 = vpop.f32.mrb[0].mxu0
    %v3831 = vadd.f32 %v3718, %v3830
    %3832 = vmatprep.mubr.bf16.mxu0 0
    %3833 = vmatmul.mubr.bf16.gmra.mrb[0].mxu0 %v2434
    %v3834 = vpop.f32.mrb[0].mxu0
    %v3835 = vadd.f32 %v3722, %v3834
    %v3836 = vpop.f32.mrb[0].mxu0
    %v3837 = vadd.f32 %v3724, %v3836
    %v3838 = vpop.f32.mrb[0].mxu0
    %v3839 = vadd.f32 %v3726, %v3838
    %v3840 = vpop.f32.mrb[0].mxu0
    %v3841 = vadd.f32 %v3728, %v3840
    %3842 = vmatprep.mubr.bf16.mxu0 0
    %3843 = vmatmul.mubr.bf16.gmra.mrb[0].mxu0 %v2437
    %v3844 = vpop.f32.mrb[0].mxu0
    %v3845 = vadd.f32 %v3732, %v3844
    %v3846 = vpop.f32.mrb[0].mxu0
    %v3847 = vadd.f32 %v3734, %v3846
    %v3848 = vpop.f32.mrb[0].mxu0
    %v3849 = vadd.f32 %v3736, %v3848
    %v3850 = vpop.f32.mrb[0].mxu0
    %v3851 = vadd.f32 %v3738, %v3850
    %3852 = vmatprep.mubr.bf16.mxu0 0
    %3853 = vmatmul.mubr.bf16.gmra.mrb[0].mxu0 %v2440
    %v3854 = vpop.f32.mrb[0].mxu0
    %v3855 = vadd.f32 %v3742, %v3854
    %v3856 = vpop.f32.mrb[0].mxu0
    %v3857 = vadd.f32 %v3744, %v3856
    %v3858 = vpop.f32.mrb[0].mxu0
    %v3859 = vadd.f32 %v3746, %v3858
    %v3860 = vpop.f32.mrb[0].mxu0
    %v3861 = vadd.f32 %v3748, %v3860
    %3862 = vmatprep.mubr.bf16.mxu0 0
    %3863 = vmatmul.mubr.bf16.gmra.mrb[0].mxu0 %v2443
    %v3864 = vpop.f32.mrb[0].mxu0
    %v3865 = vadd.f32 %v3752, %v3864
    %v3866 = vpop.f32.mrb[0].mxu0
    %v3867 = vadd.f32 %v3754, %v3866
    %v3868 = vpop.f32.mrb[0].mxu0
    %v3869 = vadd.f32 %v3756, %v3868
    %v3870 = vpop.f32.mrb[0].mxu0
    %v3871 = vadd.f32 %v3758, %v3870
    %3872 = vdwg.mxu0
    %v3873 = vmul.f32 %v3343, 0.5
    %v3874 = vmul.f32 %v3345, 0.5
    %v3875 = vmul.f32 %v3569, 0.5
    %v3876 = vmul.f32 %v3571, 0.5
    %v3877 = vmul.f32 %v3795, 0.5
    %v3878 = vmul.f32 %v3797, 0.5
    %v3879 = vmul.f32 %v3347, 0.5
    %v3880 = vmul.f32 %v3349, 0.5
    %v3881 = vmul.f32 %v3573, 0.5
    %v3882 = vmul.f32 %v3575, 0.5
    %v3883 = vmul.f32 %v3799, 0.5
    %v3884 = vmul.f32 %v3801, 0.5
    %v3885 = vmul.f32 %v3353, 0.5
    %v3886 = vmul.f32 %v3355, 0.5
    %v3887 = vmul.f32 %v3579, 0.5
    %v3888 = vmul.f32 %v3581, 0.5
    %v3889 = vmul.f32 %v3805, 0.5
    %v3890 = vmul.f32 %v3807, 0.5
    %v3891 = vmul.f32 %v3357, 0.5
    %v3892 = vmul.f32 %v3359, 0.5
    %v3893 = vmul.f32 %v3583, 0.5
    %v3894 = vmul.f32 %v3585, 0.5
    %v3895 = vmul.f32 %v3809, 0.5
    %v3896 = vmul.f32 %v3811, 0.5
    %v3897 = vmul.f32 %v3363, 0.5
    %v3898 = vmul.f32 %v3365, 0.5
    %v3899 = vmul.f32 %v3589, 0.5
    %v3900 = vmul.f32 %v3591, 0.5
    %v3901 = vmul.f32 %v3815, 0.5
    %v3902 = vmul.f32 %v3817, 0.5
    %v3903 = vmul.f32 %v3367, 0.5
    %v3904 = vmul.f32 %v3369, 0.5
    %v3905 = vmul.f32 %v3593, 0.5
    %v3906 = vmul.f32 %v3595, 0.5
    %v3907 = vmul.f32 %v3819, 0.5
    %v3908 = vmul.f32 %v3821, 0.5
    %v3909 = vmul.f32 %v3373, 0.5
    %v3910 = vmul.f32 %v3375, 0.5
    %v3911 = vmul.f32 %v3599, 0.5
    %v3912 = vmul.f32 %v3601, 0.5
    %v3913 = vmul.f32 %v3825, 0.5
    %v3914 = vmul.f32 %v3827, 0.5
    %v3915 = vmul.f32 %v3377, 0.5
    %v3916 = vmul.f32 %v3379, 0.5
    %v3917 = vmul.f32 %v3603, 0.5
    %v3918 = vmul.f32 %v3605, 0.5
    %v3919 = vmul.f32 %v3829, 0.5
    %v3920 = vmul.f32 %v3831, 0.5
    %v3921 = vmul.f32 %v3383, 0.5
    %v3922 = vmul.f32 %v3385, 0.5
    %v3923 = vmul.f32 %v3609, 0.5
    %v3924 = vmul.f32 %v3611, 0.5
    %v3925 = vmul.f32 %v3835, 0.5
    %v3926 = vmul.f32 %v3837, 0.5
    %v3927 = vmul.f32 %v3387, 0.5
    %v3928 = vmul.f32 %v3389, 0.5
    %v3929 = vmul.f32 %v3613, 0.5
    %v3930 = vmul.f32 %v3615, 0.5
    %v3931 = vmul.f32 %v3839, 0.5
    %v3932 = vmul.f32 %v3841, 0.5
    %v3933 = vmul.f32 %v3393, 0.5
    %v3934 = vmul.f32 %v3395, 0.5
    %v3935 = vmul.f32 %v3619, 0.5
    %v3936 = vmul.f32 %v3621, 0.5
    %v3937 = vmul.f32 %v3845, 0.5
    %v3938 = vmul.f32 %v3847, 0.5
    %v3939 = vmul.f32 %v3397, 0.5
    %v3940 = vmul.f32 %v3399, 0.5
    %v3941 = vmul.f32 %v3623, 0.5
    %v3942 = vmul.f32 %v3625, 0.5
    %v3943 = vmul.f32 %v3849, 0.5
    %v3944 = vmul.f32 %v3851, 0.5
    %v3945 = vmul.f32 %v3403, 0.5
    %v3946 = vmul.f32 %v3405, 0.5
    %v3947 = vmul.f32 %v3629, 0.5
    %v3948 = vmul.f32 %v3631, 0.5
    %v3949 = vmul.f32 %v3855, 0.5
    %v3950 = vmul.f32 %v3857, 0.5
    %v3951 = vmul.f32 %v3407, 0.5
    %v3952 = vmul.f32 %v3409, 0.5
    %v3953 = vmul.f32 %v3633, 0.5
    %v3954 = vmul.f32 %v3635, 0.5
    %v3955 = vmul.f32 %v3859, 0.5
    %v3956 = vmul.f32 %v3861, 0.5
    %v3957 = vmul.f32 %v3413, 0.5
    %v3958 = vmul.f32 %v3415, 0.5
    %v3959 = vmul.f32 %v3639, 0.5
    %v3960 = vmul.f32 %v3641, 0.5
    %v3961 = vmul.f32 %v3865, 0.5
    %v3962 = vmul.f32 %v3867, 0.5
    %v3963 = vmul.f32 %v3417, 0.5
    %v3964 = vmul.f32 %v3419, 0.5
    %v3965 = vmul.f32 %v3643, 0.5
    %v3966 = vmul.f32 %v3645, 0.5
    %v3967 = vmul.f32 %v3869, 0.5
    %v3968 = vmul.f32 %v3871, 0.5
    %v3969 = vmul.f32 %v3343, %v3343
    %v3970 = vmul.f32 %v3345, %v3345
    %v3971 = vmul.f32 %v3569, %v3569
    %v3972 = vmul.f32 %v3571, %v3571
    %v3973 = vmul.f32 %v3795, %v3795
    %v3974 = vmul.f32 %v3797, %v3797
    %v3975 = vmul.f32 %v3347, %v3347
    %v3976 = vmul.f32 %v3349, %v3349
    %v3977 = vmul.f32 %v3573, %v3573
    %v3978 = vmul.f32 %v3575, %v3575
    %v3979 = vmul.f32 %v3799, %v3799
    %v3980 = vmul.f32 %v3801, %v3801
    %v3981 = vmul.f32 %v3353, %v3353
    %v3982 = vmul.f32 %v3355, %v3355
    %v3983 = vmul.f32 %v3579, %v3579
    %v3984 = vmul.f32 %v3581, %v3581
    %v3985 = vmul.f32 %v3805, %v3805
    %v3986 = vmul.f32 %v3807, %v3807
    %v3987 = vmul.f32 %v3357, %v3357
    %v3988 = vmul.f32 %v3359, %v3359
    %v3989 = vmul.f32 %v3583, %v3583
    %v3990 = vmul.f32 %v3585, %v3585
    %v3991 = vmul.f32 %v3809, %v3809
    %v3992 = vmul.f32 %v3811, %v3811
    %v3993 = vmul.f32 %v3363, %v3363
    %v3994 = vmul.f32 %v3365, %v3365
    %v3995 = vmul.f32 %v3589, %v3589
    %v3996 = vmul.f32 %v3591, %v3591
    %v3997 = vmul.f32 %v3815, %v3815
    %v3998 = vmul.f32 %v3817, %v3817
    %v3999 = vmul.f32 %v3367, %v3367
    %v4000 = vmul.f32 %v3369, %v3369
    %v4001 = vmul.f32 %v3593, %v3593
    %v4002 = vmul.f32 %v3595, %v3595
    %v4003 = vmul.f32 %v3819, %v3819
    %v4004 = vmul.f32 %v3821, %v3821
    %v4005 = vmul.f32 %v3373, %v3373
    %v4006 = vmul.f32 %v3375, %v3375
    %v4007 = vmul.f32 %v3599, %v3599
    %v4008 = vmul.f32 %v3601, %v3601
    %v4009 = vmul.f32 %v3825, %v3825
    %v4010 = vmul.f32 %v3827, %v3827
    %v4011 = vmul.f32 %v3377, %v3377
    %v4012 = vmul.f32 %v3379, %v3379
    %v4013 = vmul.f32 %v3603, %v3603
    %v4014 = vmul.f32 %v3605, %v3605
    %v4015 = vmul.f32 %v3829, %v3829
    %v4016 = vmul.f32 %v3831, %v3831
    %v4017 = vmul.f32 %v3383, %v3383
    %v4018 = vmul.f32 %v3385, %v3385
    %v4019 = vmul.f32 %v3609, %v3609
    %v4020 = vmul.f32 %v3611, %v3611
    %v4021 = vmul.f32 %v3835, %v3835
    %v4022 = vmul.f32 %v3837, %v3837
    %v4023 = vmul.f32 %v3387, %v3387
    %v4024 = vmul.f32 %v3389, %v3389
    %v4025 = vmul.f32 %v3613, %v3613
    %v4026 = vmul.f32 %v3615, %v3615
    %v4027 = vmul.f32 %v3839, %v3839
    %v4028 = vmul.f32 %v3841, %v3841
    %v4029 = vmul.f32 %v3393, %v3393
    %v4030 = vmul.f32 %v3395, %v3395
    %v4031 = vmul.f32 %v3619, %v3619
    %v4032 = vmul.f32 %v3621, %v3621
    %v4033 = vmul.f32 %v3845, %v3845
    %v4034 = vmul.f32 %v3847, %v3847
    %v4035 = vmul.f32 %v3397, %v3397
    %v4036 = vmul.f32 %v3399, %v3399
    %v4037 = vmul.f32 %v3623, %v3623
    %v4038 = vmul.f32 %v3625, %v3625
    %v4039 = vmul.f32 %v3849, %v3849
    %v4040 = vmul.f32 %v3851, %v3851
    %v4041 = vmul.f32 %v3403, %v3403
    %v4042 = vmul.f32 %v3405, %v3405
    %v4043 = vmul.f32 %v3629, %v3629
    %v4044 = vmul.f32 %v3631, %v3631
    %v4045 = vmul.f32 %v3855, %v3855
    %v4046 = vmul.f32 %v3857, %v3857
    %v4047 = vmul.f32 %v3407, %v3407
    %v4048 = vmul.f32 %v3409, %v3409
    %v4049 = vmul.f32 %v3633, %v3633
    %v4050 = vmul.f32 %v3635, %v3635
    %v4051 = vmul.f32 %v3859, %v3859
    %v4052 = vmul.f32 %v3861, %v3861
    %v4053 = vmul.f32 %v3413, %v3413
    %v4054 = vmul.f32 %v3415, %v3415
    %v4055 = vmul.f32 %v3639, %v3639
    %v4056 = vmul.f32 %v3641, %v3641
    %v4057 = vmul.f32 %v3865, %v3865
    %v4058 = vmul.f32 %v3867, %v3867
    %v4059 = vmul.f32 %v3417, %v3417
    %v4060 = vmul.f32 %v3419, %v3419
    %v4061 = vmul.f32 %v3643, %v3643
    %v4062 = vmul.f32 %v3645, %v3645
    %v4063 = vmul.f32 %v3869, %v3869
    %v4064 = vmul.f32 %v3871, %v3871
    %v4065 = vmul.f32 %v3969, %v3343
    %v4066 = vmul.f32 %v3970, %v3345
    %v4067 = vmul.f32 %v3971, %v3569
    %v4068 = vmul.f32 %v3972, %v3571
    %v4069 = vmul.f32 %v3973, %v3795
    %v4070 = vmul.f32 %v3974, %v3797
    %v4071 = vmul.f32 %v3975, %v3347
    %v4072 = vmul.f32 %v3976, %v3349
    %v4073 = vmul.f32 %v3977, %v3573
    %v4074 = vmul.f32 %v3978, %v3575
    %v4075 = vmul.f32 %v3979, %v3799
    %v4076 = vmul.f32 %v3980, %v3801
    %v4077 = vmul.f32 %v3981, %v3353
    %v4078 = vmul.f32 %v3982, %v3355
    %v4079 = vmul.f32 %v3983, %v3579
    %v4080 = vmul.f32 %v3984, %v3581
    %v4081 = vmul.f32 %v3985, %v3805
    %v4082 = vmul.f32 %v3986, %v3807
    %v4083 = vmul.f32 %v3987, %v3357
    %v4084 = vmul.f32 %v3988, %v3359
    %v4085 = vmul.f32 %v3989, %v3583
    %v4086 = vmul.f32 %v3990, %v3585
    %v4087 = vmul.f32 %v3991, %v3809
    %v4088 = vmul.f32 %v3992, %v3811
    %v4089 = vmul.f32 %v3993, %v3363
    %v4090 = vmul.f32 %v3994, %v3365
    %v4091 = vmul.f32 %v3995, %v3589
    %v4092 = vmul.f32 %v3996, %v3591
    %v4093 = vmul.f32 %v3997, %v3815
    %v4094 = vmul.f32 %v3998, %v3817
    %v4095 = vmul.f32 %v3999, %v3367
    %v4096 = vmul.f32 %v4000, %v3369
    %v4097 = vmul.f32 %v4001, %v3593
    %v4098 = vmul.f32 %v4002, %v3595
    %v4099 = vmul.f32 %v4003, %v3819
    %v4100 = vmul.f32 %v4004, %v3821
    %v4101 = vmul.f32 %v4005, %v3373
    %v4102 = vmul.f32 %v4006, %v3375
    %v4103 = vmul.f32 %v4007, %v3599
    %v4104 = vmul.f32 %v4008, %v3601
    %v4105 = vmul.f32 %v4009, %v3825
    %v4106 = vmul.f32 %v4010, %v3827
    %v4107 = vmul.f32 %v4011, %v3377
    %v4108 = vmul.f32 %v4012, %v3379
    %v4109 = vmul.f32 %v4013, %v3603
    %v4110 = vmul.f32 %v4014, %v3605
    %v4111 = vmul.f32 %v4015, %v3829
    %v4112 = vmul.f32 %v4016, %v3831
    %v4113 = vmul.f32 %v4017, %v3383
    %v4114 = vmul.f32 %v4018, %v3385
    %v4115 = vmul.f32 %v4019, %v3609
    %v4116 = vmul.f32 %v4020, %v3611
    %v4117 = vmul.f32 %v4021, %v3835
    %v4118 = vmul.f32 %v4022, %v3837
    %v4119 = vmul.f32 %v4023, %v3387
    %v4120 = vmul.f32 %v4024, %v3389
    %v4121 = vmul.f32 %v4025, %v3613
    %v4122 = vmul.f32 %v4026, %v3615
    %v4123 = vmul.f32 %v4027, %v3839
    %v4124 = vmul.f32 %v4028, %v3841
    %v4125 = vmul.f32 %v4029, %v3393
    %v4126 = vmul.f32 %v4030, %v3395
    %v4127 = vmul.f32 %v4031, %v3619
    %v4128 = vmul.f32 %v4032, %v3621
    %v4129 = vmul.f32 %v4033, %v3845
    %v4130 = vmul.f32 %v4034, %v3847
    %v4131 = vmul.f32 %v4035, %v3397
    %v4132 = vmul.f32 %v4036, %v3399
    %v4133 = vmul.f32 %v4037, %v3623
    %v4134 = vmul.f32 %v4038, %v3625
    %v4135 = vmul.f32 %v4039, %v3849
    %v4136 = vmul.f32 %v4040, %v3851
    %v4137 = vmul.f32 %v4041, %v3403
    %v4138 = vmul.f32 %v4042, %v3405
    %v4139 = vmul.f32 %v4043, %v3629
    %v4140 = vmul.f32 %v4044, %v3631
    %v4141 = vmul.f32 %v4045, %v3855
    %v4142 = vmul.f32 %v4046, %v3857
    %v4143 = vmul.f32 %v4047, %v3407
    %v4144 = vmul.f32 %v4048, %v3409
    %v4145 = vmul.f32 %v4049, %v3633
    %v4146 = vmul.f32 %v4050, %v3635
    %v4147 = vmul.f32 %v4051, %v3859
    %v4148 = vmul.f32 %v4052, %v3861
    %v4149 = vmul.f32 %v4053, %v3413
    %v4150 = vmul.f32 %v4054, %v3415
    %v4151 = vmul.f32 %v4055, %v3639
    %v4152 = vmul.f32 %v4056, %v3641
    %v4153 = vmul.f32 %v4057, %v3865
    %v4154 = vmul.f32 %v4058, %v3867
    %v4155 = vmul.f32 %v4059, %v3417
    %v4156 = vmul.f32 %v4060, %v3419
    %v4157 = vmul.f32 %v4061, %v3643
    %v4158 = vmul.f32 %v4062, %v3645
    %v4159 = vmul.f32 %v4063, %v3869
    %v4160 = vmul.f32 %v4064, %v3871
    %v4161 = vmul.f32 %v4065, 0.044715
    %v4162 = vmul.f32 %v4066, 0.044715
    %v4163 = vmul.f32 %v4067, 0.044715
    %v4164 = vmul.f32 %v4068, 0.044715
    %v4165 = vmul.f32 %v4069, 0.044715
    %v4166 = vmul.f32 %v4070, 0.044715
    %v4167 = vmul.f32 %v4071, 0.044715
    %v4168 = vmul.f32 %v4072, 0.044715
    %v4169 = vmul.f32 %v4073, 0.044715
    %v4170 = vmul.f32 %v4074, 0.044715
    %v4171 = vmul.f32 %v4075, 0.044715
    %v4172 = vmul.f32 %v4076, 0.044715
    %v4173 = vmul.f32 %v4077, 0.044715
    %v4174 = vmul.f32 %v4078, 0.044715
    %v4175 = vmul.f32 %v4079, 0.044715
    %v4176 = vmul.f32 %v4080, 0.044715
    %v4177 = vmul.f32 %v4081, 0.044715
    %v4178 = vmul.f32 %v4082, 0.044715
    %v4179 = vmul.f32 %v4083, 0.044715
    %v4180 = vmul.f32 %v4084, 0.044715
    %v4181 = vmul.f32 %v4085, 0.044715
    %v4182 = vmul.f32 %v4086, 0.044715
    %v4183 = vmul.f32 %v4087, 0.044715
    %v4184 = vmul.f32 %v4088, 0.044715
    %v4185 = vmul.f32 %v4089, 0.044715
    %v4186 = vmul.f32 %v4090, 0.044715
    %v4187 = vmul.f32 %v4091, 0.044715
    %v4188 = vmul.f32 %v4092, 0.044715
    %v4189 = vmul.f32 %v4093, 0.044715
    %v4190 = vmul.f32 %v4094, 0.044715
    %v4191 = vmul.f32 %v4095, 0.044715
    %v4192 = vmul.f32 %v4096, 0.044715
    %v4193 = vmul.f32 %v4097, 0.044715
    %v4194 = vmul.f32 %v4098, 0.044715
    %v4195 = vmul.f32 %v4099, 0.044715
    %v4196 = vmul.f32 %v4100, 0.044715
    %v4197 = vmul.f32 %v4101, 0.044715
    %v4198 = vmul.f32 %v4102, 0.044715
    %v4199 = vmul.f32 %v4103, 0.044715
    %v4200 = vmul.f32 %v4104, 0.044715
    %v4201 = vmul.f32 %v4105, 0.044715
    %v4202 = vmul.f32 %v4106, 0.044715
    %v4203 = vmul.f32 %v4107, 0.044715
    %v4204 = vmul.f32 %v4108, 0.044715
    %v4205 = vmul.f32 %v4109, 0.044715
    %v4206 = vmul.f32 %v4110, 0.044715
    %v4207 = vmul.f32 %v4111, 0.044715
    %v4208 = vmul.f32 %v4112, 0.044715
    %v4209 = vmul.f32 %v4113, 0.044715
    %v4210 = vmul.f32 %v4114, 0.044715
    %v4211 = vmul.f32 %v4115, 0.044715
    %v4212 = vmul.f32 %v4116, 0.044715
    %v4213 = vmul.f32 %v4117, 0.044715
    %v4214 = vmul.f32 %v4118, 0.044715
    %v4215 = vmul.f32 %v4119, 0.044715
    %v4216 = vmul.f32 %v4120, 0.044715
    %v4217 = vmul.f32 %v4121, 0.044715
    %v4218 = vmul.f32 %v4122, 0.044715
    %v4219 = vmul.f32 %v4123, 0.044715
    %v4220 = vmul.f32 %v4124, 0.044715
    %v4221 = vmul.f32 %v4125, 0.044715
    %v4222 = vmul.f32 %v4126, 0.044715
    %v4223 = vmul.f32 %v4127, 0.044715
    %v4224 = vmul.f32 %v4128, 0.044715
    %v4225 = vmul.f32 %v4129, 0.044715
    %v4226 = vmul.f32 %v4130, 0.044715
    %v4227 = vmul.f32 %v4131, 0.044715
    %v4228 = vmul.f32 %v4132, 0.044715
    %v4229 = vmul.f32 %v4133, 0.044715
    %v4230 = vmul.f32 %v4134, 0.044715
    %v4231 = vmul.f32 %v4135, 0.044715
    %v4232 = vmul.f32 %v4136, 0.044715
    %v4233 = vmul.f32 %v4137, 0.044715
    %v4234 = vmul.f32 %v4138, 0.044715
    %v4235 = vmul.f32 %v4139, 0.044715
    %v4236 = vmul.f32 %v4140, 0.044715
    %v4237 = vmul.f32 %v4141, 0.044715
    %v4238 = vmul.f32 %v4142, 0.044715
    %v4239 = vmul.f32 %v4143, 0.044715
    %v4240 = vmul.f32 %v4144, 0.044715
    %v4241 = vmul.f32 %v4145, 0.044715
    %v4242 = vmul.f32 %v4146, 0.044715
    %v4243 = vmul.f32 %v4147, 0.044715
    %v4244 = vmul.f32 %v4148, 0.044715
    %v4245 = vmul.f32 %v4149, 0.044715
    %v4246 = vmul.f32 %v4150, 0.044715
    %v4247 = vmul.f32 %v4151, 0.044715
    %v4248 = vmul.f32 %v4152, 0.044715
    %v4249 = vmul.f32 %v4153, 0.044715
    %v4250 = vmul.f32 %v4154, 0.044715
    %v4251 = vmul.f32 %v4155, 0.044715
    %v4252 = vmul.f32 %v4156, 0.044715
    %v4253 = vmul.f32 %v4157, 0.044715
    %v4254 = vmul.f32 %v4158, 0.044715
    %v4255 = vmul.f32 %v4159, 0.044715
    %v4256 = vmul.f32 %v4160, 0.044715
    %v4257 = vadd.f32 %v3343, %v4161
    %v4258 = vadd.f32 %v3345, %v4162
    %v4259 = vadd.f32 %v3569, %v4163
    %v4260 = vadd.f32 %v3571, %v4164
    %v4261 = vadd.f32 %v3795, %v4165
    %v4262 = vadd.f32 %v3797, %v4166
    %v4263 = vadd.f32 %v3347, %v4167
    %v4264 = vadd.f32 %v3349, %v4168
    %v4265 = vadd.f32 %v3573, %v4169
    %v4266 = vadd.f32 %v3575, %v4170
    %v4267 = vadd.f32 %v3799, %v4171
    %v4268 = vadd.f32 %v3801, %v4172
    %v4269 = vadd.f32 %v3353, %v4173
    %v4270 = vadd.f32 %v3355, %v4174
    %v4271 = vadd.f32 %v3579, %v4175
    %v4272 = vadd.f32 %v3581, %v4176
    %v4273 = vadd.f32 %v3805, %v4177
    %v4274 = vadd.f32 %v3807, %v4178
    %v4275 = vadd.f32 %v3357, %v4179
    %v4276 = vadd.f32 %v3359, %v4180
    %v4277 = vadd.f32 %v3583, %v4181
    %v4278 = vadd.f32 %v3585, %v4182
    %v4279 = vadd.f32 %v3809, %v4183
    %v4280 = vadd.f32 %v3811, %v4184
    %v4281 = vadd.f32 %v3363, %v4185
    %v4282 = vadd.f32 %v3365, %v4186
    %v4283 = vadd.f32 %v3589, %v4187
    %v4284 = vadd.f32 %v3591, %v4188
    %v4285 = vadd.f32 %v3815, %v4189
    %v4286 = vadd.f32 %v3817, %v4190
    %v4287 = vadd.f32 %v3367, %v4191
    %v4288 = vadd.f32 %v3369, %v4192
    %v4289 = vadd.f32 %v3593, %v4193
    %v4290 = vadd.f32 %v3595, %v4194
    %v4291 = vadd.f32 %v3819, %v4195
    %v4292 = vadd.f32 %v3821, %v4196
    %v4293 = vadd.f32 %v3373, %v4197
    %v4294 = vadd.f32 %v3375, %v4198
    %v4295 = vadd.f32 %v3599, %v4199
    %v4296 = vadd.f32 %v3601, %v4200
    %v4297 = vadd.f32 %v3825, %v4201
    %v4298 = vadd.f32 %v3827, %v4202
    %v4299 = vadd.f32 %v3377, %v4203
    %v4300 = vadd.f32 %v3379, %v4204
    %v4301 = vadd.f32 %v3603, %v4205
    %v4302 = vadd.f32 %v3605, %v4206
    %v4303 = vadd.f32 %v3829, %v4207
    %v4304 = vadd.f32 %v3831, %v4208
    %v4305 = vadd.f32 %v3383, %v4209
    %v4306 = vadd.f32 %v3385, %v4210
    %v4307 = vadd.f32 %v3609, %v4211
    %v4308 = vadd.f32 %v3611, %v4212
    %v4309 = vadd.f32 %v3835, %v4213
    %v4310 = vadd.f32 %v3837, %v4214
    %v4311 = vadd.f32 %v3387, %v4215
    %v4312 = vadd.f32 %v3389, %v4216
    %v4313 = vadd.f32 %v3613, %v4217
    %v4314 = vadd.f32 %v3615, %v4218
    %v4315 = vadd.f32 %v3839, %v4219
    %v4316 = vadd.f32 %v3841, %v4220
    %v4317 = vadd.f32 %v3393, %v4221
    %v4318 = vadd.f32 %v3395, %v4222
    %v4319 = vadd.f32 %v3619, %v4223
    %v4320 = vadd.f32 %v3621, %v4224
    %v4321 = vadd.f32 %v3845, %v4225
    %v4322 = vadd.f32 %v3847, %v4226
    %v4323 = vadd.f32 %v3397, %v4227
    %v4324 = vadd.f32 %v3399, %v4228
    %v4325 = vadd.f32 %v3623, %v4229
    %v4326 = vadd.f32 %v3625, %v4230
    %v4327 = vadd.f32 %v3849, %v4231
    %v4328 = vadd.f32 %v3851, %v4232
    %v4329 = vadd.f32 %v3403, %v4233
    %v4330 = vadd.f32 %v3405, %v4234
    %v4331 = vadd.f32 %v3629, %v4235
    %v4332 = vadd.f32 %v3631, %v4236
    %v4333 = vadd.f32 %v3855, %v4237
    %v4334 = vadd.f32 %v3857, %v4238
    %v4335 = vadd.f32 %v3407, %v4239
    %v4336 = vadd.f32 %v3409, %v4240
    %v4337 = vadd.f32 %v3633, %v4241
    %v4338 = vadd.f32 %v3635, %v4242
    %v4339 = vadd.f32 %v3859, %v4243
    %v4340 = vadd.f32 %v3861, %v4244
    %v4341 = vadd.f32 %v3413, %v4245
    %v4342 = vadd.f32 %v3415, %v4246
    %v4343 = vadd.f32 %v3639, %v4247
    %v4344 = vadd.f32 %v3641, %v4248
    %v4345 = vadd.f32 %v3865, %v4249
    %v4346 = vadd.f32 %v3867, %v4250
    %v4347 = vadd.f32 %v3417, %v4251
    %v4348 = vadd.f32 %v3419, %v4252
    %v4349 = vadd.f32 %v3643, %v4253
    %v4350 = vadd.f32 %v3645, %v4254
    %v4351 = vadd.f32 %v3869, %v4255
    %v4352 = vadd.f32 %v3871, %v4256
    %v4353 = vmul.f32 %v4257, 0.7978846
    %v4354 = vmul.f32 %v4258, 0.7978846
    %v4355 = vmul.f32 %v4259, 0.7978846
    %v4356 = vmul.f32 %v4260, 0.7978846
    %v4357 = vmul.f32 %v4261, 0.7978846
    %v4358 = vmul.f32 %v4262, 0.7978846
    %v4359 = vmul.f32 %v4263, 0.7978846
    %v4360 = vmul.f32 %v4264, 0.7978846
    %v4361 = vmul.f32 %v4265, 0.7978846
    %v4362 = vmul.f32 %v4266, 0.7978846
    %v4363 = vmul.f32 %v4267, 0.7978846
    %v4364 = vmul.f32 %v4268, 0.7978846
    %v4365 = vmul.f32 %v4269, 0.7978846
    %v4366 = vmul.f32 %v4270, 0.7978846
    %v4367 = vmul.f32 %v4271, 0.7978846
    %v4368 = vmul.f32 %v4272, 0.7978846
    %v4369 = vmul.f32 %v4273, 0.7978846
    %v4370 = vmul.f32 %v4274, 0.7978846
    %v4371 = vmul.f32 %v4275, 0.7978846
    %v4372 = vmul.f32 %v4276, 0.7978846
    %v4373 = vmul.f32 %v4277, 0.7978846
    %v4374 = vmul.f32 %v4278, 0.7978846
    %v4375 = vmul.f32 %v4279, 0.7978846
    %v4376 = vmul.f32 %v4280, 0.7978846
    %v4377 = vmul.f32 %v4281, 0.7978846
    %v4378 = vmul.f32 %v4282, 0.7978846
    %v4379 = vmul.f32 %v4283, 0.7978846
    %v4380 = vmul.f32 %v4284, 0.7978846
    %v4381 = vmul.f32 %v4285, 0.7978846
    %v4382 = vmul.f32 %v4286, 0.7978846
    %v4383 = vmul.f32 %v4287, 0.7978846
    %v4384 = vmul.f32 %v4288, 0.7978846
    %v4385 = vmul.f32 %v4289, 0.7978846
    %v4386 = vmul.f32 %v4290, 0.7978846
    %v4387 = vmul.f32 %v4291, 0.7978846
    %v4388 = vmul.f32 %v4292, 0.7978846
    %v4389 = vmul.f32 %v4293, 0.7978846
    %v4390 = vmul.f32 %v4294, 0.7978846
    %v4391 = vmul.f32 %v4295, 0.7978846
    %v4392 = vmul.f32 %v4296, 0.7978846
    %v4393 = vmul.f32 %v4297, 0.7978846
    %v4394 = vmul.f32 %v4298, 0.7978846
    %v4395 = vmul.f32 %v4299, 0.7978846
    %v4396 = vmul.f32 %v4300, 0.7978846
    %v4397 = vmul.f32 %v4301, 0.7978846
    %v4398 = vmul.f32 %v4302, 0.7978846
    %v4399 = vmul.f32 %v4303, 0.7978846
    %v4400 = vmul.f32 %v4304, 0.7978846
    %v4401 = vmul.f32 %v4305, 0.7978846
    %v4402 = vmul.f32 %v4306, 0.7978846
    %v4403 = vmul.f32 %v4307, 0.7978846
    %v4404 = vmul.f32 %v4308, 0.7978846
    %v4405 = vmul.f32 %v4309, 0.7978846
    %v4406 = vmul.f32 %v4310, 0.7978846
    %v4407 = vmul.f32 %v4311, 0.7978846
    %v4408 = vmul.f32 %v4312, 0.7978846
    %v4409 = vmul.f32 %v4313, 0.7978846
    %v4410 = vmul.f32 %v4314, 0.7978846
    %v4411 = vmul.f32 %v4315, 0.7978846
    %v4412 = vmul.f32 %v4316, 0.7978846
    %v4413 = vmul.f32 %v4317, 0.7978846
    %v4414 = vmul.f32 %v4318, 0.7978846
    %v4415 = vmul.f32 %v4319, 0.7978846
    %v4416 = vmul.f32 %v4320, 0.7978846
    %v4417 = vmul.f32 %v4321, 0.7978846
    %v4418 = vmul.f32 %v4322, 0.7978846
    %v4419 = vmul.f32 %v4323, 0.7978846
    %v4420 = vmul.f32 %v4324, 0.7978846
    %v4421 = vmul.f32 %v4325, 0.7978846
    %v4422 = vmul.f32 %v4326, 0.7978846
    %v4423 = vmul.f32 %v4327, 0.7978846
    %v4424 = vmul.f32 %v4328, 0.7978846
    %v4425 = vmul.f32 %v4329, 0.7978846
    %v4426 = vmul.f32 %v4330, 0.7978846
    %v4427 = vmul.f32 %v4331, 0.7978846
    %v4428 = vmul.f32 %v4332, 0.7978846
    %v4429 = vmul.f32 %v4333, 0.7978846
    %v4430 = vmul.f32 %v4334, 0.7978846
    %v4431 = vmul.f32 %v4335, 0.7978846
    %v4432 = vmul.f32 %v4336, 0.7978846
    %v4433 = vmul.f32 %v4337, 0.7978846
    %v4434 = vmul.f32 %v4338, 0.7978846
    %v4435 = vmul.f32 %v4339, 0.7978846
    %v4436 = vmul.f32 %v4340, 0.7978846
    %v4437 = vmul.f32 %v4341, 0.7978846
    %v4438 = vmul.f32 %v4342, 0.7978846
    %v4439 = vmul.f32 %v4343, 0.7978846
    %v4440 = vmul.f32 %v4344, 0.7978846
    %v4441 = vmul.f32 %v4345, 0.7978846
    %v4442 = vmul.f32 %v4346, 0.7978846
    %v4443 = vmul.f32 %v4347, 0.7978846
    %v4444 = vmul.f32 %v4348, 0.7978846
    %v4445 = vmul.f32 %v4349, 0.7978846
    %v4446 = vmul.f32 %v4350, 0.7978846
    %v4447 = vmul.f32 %v4351, 0.7978846
    %v4448 = vmul.f32 %v4352, 0.7978846
    %v4449 = vtanh.pop %v4353
    %v4450 = vtanh.pop %v4354
    %v4451 = vtanh.pop %v4355
    %v4452 = vtanh.pop %v4356
    %v4453 = vtanh.pop %v4357
    %v4454 = vtanh.pop %v4358
    %v4455 = vtanh.pop %v4359
    %v4456 = vtanh.pop %v4360
    %v4457 = vtanh.pop %v4361
    %v4458 = vtanh.pop %v4362
    %v4459 = vtanh.pop %v4363
    %v4460 = vtanh.pop %v4364
    %v4461 = vtanh.pop %v4365
    %v4462 = vtanh.pop %v4366
    %v4463 = vtanh.pop %v4367
    %v4464 = vtanh.pop %v4368
    %v4465 = vtanh.pop %v4369
    %v4466 = vtanh.pop %v4370
    %v4467 = vtanh.pop %v4371
    %v4468 = vtanh.pop %v4372
    %v4469 = vtanh.pop %v4373
    %v4470 = vtanh.pop %v4374
    %v4471 = vtanh.pop %v4375
    %v4472 = vtanh.pop %v4376
    %v4473 = vtanh.pop %v4377
    %v4474 = vtanh.pop %v4378
    %v4475 = vtanh.pop %v4379
    %v4476 = vtanh.pop %v4380
    %v4477 = vtanh.pop %v4381
    %v4478 = vtanh.pop %v4382
    %v4479 = vtanh.pop %v4383
    %v4480 = vtanh.pop %v4384
    %v4481 = vtanh.pop %v4385
    %v4482 = vtanh.pop %v4386
    %v4483 = vtanh.pop %v4387
    %v4484 = vtanh.pop %v4388
    %v4485 = vtanh.pop %v4389
    %v4486 = vtanh.pop %v4390
    %v4487 = vtanh.pop %v4391
    %v4488 = vtanh.pop %v4392
    %v4489 = vtanh.pop %v4393
    %v4490 = vtanh.pop %v4394
    %v4491 = vtanh.pop %v4395
    %v4492 = vtanh.pop %v4396
    %v4493 = vtanh.pop %v4397
    %v4494 = vtanh.pop %v4398
    %v4495 = vtanh.pop %v4399
    %v4496 = vtanh.pop %v4400
    %v4497 = vtanh.pop %v4401
    %v4498 = vtanh.pop %v4402
    %v4499 = vtanh.pop %v4403
    %v4500 = vtanh.pop %v4404
    %v4501 = vtanh.pop %v4405
    %v4502 = vtanh.pop %v4406
    %v4503 = vtanh.pop %v4407
    %v4504 = vtanh.pop %v4408
    %v4505 = vtanh.pop %v4409
    %v4506 = vtanh.pop %v4410
    %v4507 = vtanh.pop %v4411
    %v4508 = vtanh.pop %v4412
    %v4509 = vtanh.pop %v4413
    %v4510 = vtanh.pop %v4414
    %v4511 = vtanh.pop %v4415
    %v4512 = vtanh.pop %v4416
    %v4513 = vtanh.pop %v4417
    %v4514 = vtanh.pop %v4418
    %v4515 = vtanh.pop %v4419
    %v4516 = vtanh.pop %v4420
    %v4517 = vtanh.pop %v4421
    %v4518 = vtanh.pop %v4422
    %v4519 = vtanh.pop %v4423
    %v4520 = vtanh.pop %v4424
    %v4521 = vtanh.pop %v4425
    %v4522 = vtanh.pop %v4426
    %v4523 = vtanh.pop %v4427
    %v4524 = vtanh.pop %v4428
    %v4525 = vtanh.pop %v4429
    %v4526 = vtanh.pop %v4430
    %v4527 = vtanh.pop %v4431
    %v4528 = vtanh.pop %v4432
    %v4529 = vtanh.pop %v4433
    %v4530 = vtanh.pop %v4434
    %v4531 = vtanh.pop %v4435
    %v4532 = vtanh.pop %v4436
    %v4533 = vtanh.pop %v4437
    %v4534 = vtanh.pop %v4438
    %v4535 = vtanh.pop %v4439
    %v4536 = vtanh.pop %v4440
    %v4537 = vtanh.pop %v4441
    %v4538 = vtanh.pop %v4442
    %v4539 = vtanh.pop %v4443
    %v4540 = vtanh.pop %v4444
    %v4541 = vtanh.pop %v4445
    %v4542 = vtanh.pop %v4446
    %v4543 = vtanh.pop %v4447
    %v4544 = vtanh.pop %v4448
    %v4545 = vadd.f32 %v4449, 1.0
    %v4546 = vadd.f32 %v4450, 1.0
    %v4547 = vadd.f32 %v4451, 1.0
    %v4548 = vadd.f32 %v4452, 1.0
    %v4549 = vadd.f32 %v4453, 1.0
    %v4550 = vadd.f32 %v4454, 1.0
    %v4551 = vadd.f32 %v4455, 1.0
    %v4552 = vadd.f32 %v4456, 1.0
    %v4553 = vadd.f32 %v4457, 1.0
    %v4554 = vadd.f32 %v4458, 1.0
    %v4555 = vadd.f32 %v4459, 1.0
    %v4556 = vadd.f32 %v4460, 1.0
    %v4557 = vadd.f32 %v4461, 1.0
    %v4558 = vadd.f32 %v4462, 1.0
    %v4559 = vadd.f32 %v4463, 1.0
    %v4560 = vadd.f32 %v4464, 1.0
    %v4561 = vadd.f32 %v4465, 1.0
    %v4562 = vadd.f32 %v4466, 1.0
    %v4563 = vadd.f32 %v4467, 1.0
    %v4564 = vadd.f32 %v4468, 1.0
    %v4565 = vadd.f32 %v4469, 1.0
    %v4566 = vadd.f32 %v4470, 1.0
    %v4567 = vadd.f32 %v4471, 1.0
    %v4568 = vadd.f32 %v4472, 1.0
    %v4569 = vadd.f32 %v4473, 1.0
    %v4570 = vadd.f32 %v4474, 1.0
    %v4571 = vadd.f32 %v4475, 1.0
    %v4572 = vadd.f32 %v4476, 1.0
    %v4573 = vadd.f32 %v4477, 1.0
    %v4574 = vadd.f32 %v4478, 1.0
    %v4575 = vadd.f32 %v4479, 1.0
    %v4576 = vadd.f32 %v4480, 1.0
    %v4577 = vadd.f32 %v4481, 1.0
    %v4578 = vadd.f32 %v4482, 1.0
    %v4579 = vadd.f32 %v4483, 1.0
    %v4580 = vadd.f32 %v4484, 1.0
    %v4581 = vadd.f32 %v4485, 1.0
    %v4582 = vadd.f32 %v4486, 1.0
    %v4583 = vadd.f32 %v4487, 1.0
    %v4584 = vadd.f32 %v4488, 1.0
    %v4585 = vadd.f32 %v4489, 1.0
    %v4586 = vadd.f32 %v4490, 1.0
    %v4587 = vadd.f32 %v4491, 1.0
    %v4588 = vadd.f32 %v4492, 1.0
    %v4589 = vadd.f32 %v4493, 1.0
    %v4590 = vadd.f32 %v4494, 1.0
    %v4591 = vadd.f32 %v4495, 1.0
    %v4592 = vadd.f32 %v4496, 1.0
    %v4593 = vadd.f32 %v4497, 1.0
    %v4594 = vadd.f32 %v4498, 1.0
    %v4595 = vadd.f32 %v4499, 1.0
    %v4596 = vadd.f32 %v4500, 1.0
    %v4597 = vadd.f32 %v4501, 1.0
    %v4598 = vadd.f32 %v4502, 1.0
    %v4599 = vadd.f32 %v4503, 1.0
    %v4600 = vadd.f32 %v4504, 1.0
    %v4601 = vadd.f32 %v4505, 1.0
    %v4602 = vadd.f32 %v4506, 1.0
    %v4603 = vadd.f32 %v4507, 1.0
    %v4604 = vadd.f32 %v4508, 1.0
    %v4605 = vadd.f32 %v4509, 1.0
    %v4606 = vadd.f32 %v4510, 1.0
    %v4607 = vadd.f32 %v4511, 1.0
    %v4608 = vadd.f32 %v4512, 1.0
    %v4609 = vadd.f32 %v4513, 1.0
    %v4610 = vadd.f32 %v4514, 1.0
    %v4611 = vadd.f32 %v4515, 1.0
    %v4612 = vadd.f32 %v4516, 1.0
    %v4613 = vadd.f32 %v4517, 1.0
    %v4614 = vadd.f32 %v4518, 1.0
    %v4615 = vadd.f32 %v4519, 1.0
    %v4616 = vadd.f32 %v4520, 1.0
    %v4617 = vadd.f32 %v4521, 1.0
    %v4618 = vadd.f32 %v4522, 1.0
    %v4619 = vadd.f32 %v4523, 1.0
    %v4620 = vadd.f32 %v4524, 1.0
    %v4621 = vadd.f32 %v4525, 1.0
    %v4622 = vadd.f32 %v4526, 1.0
    %v4623 = vadd.f32 %v4527, 1.0
    %v4624 = vadd.f32 %v4528, 1.0
    %v4625 = vadd.f32 %v4529, 1.0
    %v4626 = vadd.f32 %v4530, 1.0
    %v4627 = vadd.f32 %v4531, 1.0
    %v4628 = vadd.f32 %v4532, 1.0
    %v4629 = vadd.f32 %v4533, 1.0
    %v4630 = vadd.f32 %v4534, 1.0
    %v4631 = vadd.f32 %v4535, 1.0
    %v4632 = vadd.f32 %v4536, 1.0
    %v4633 = vadd.f32 %v4537, 1.0
    %v4634 = vadd.f32 %v4538, 1.0
    %v4635 = vadd.f32 %v4539, 1.0
    %v4636 = vadd.f32 %v4540, 1.0
    %v4637 = vadd.f32 %v4541, 1.0
    %v4638 = vadd.f32 %v4542, 1.0
    %v4639 = vadd.f32 %v4543, 1.0
    %v4640 = vadd.f32 %v4544, 1.0
    %v4641 = vmul.f32 %v3873, %v4545
    %v4642 = vmul.f32 %v3874, %v4546
    %v4643 = vmul.f32 %v3875, %v4547
    %v4644 = vmul.f32 %v3876, %v4548
    %v4645 = vmul.f32 %v3877, %v4549
    %v4646 = vmul.f32 %v3878, %v4550
    %v4647 = vmul.f32 %v3879, %v4551
    %v4648 = vmul.f32 %v3880, %v4552
    %v4649 = vmul.f32 %v3881, %v4553
    %v4650 = vmul.f32 %v3882, %v4554
    %v4651 = vmul.f32 %v3883, %v4555
    %v4652 = vmul.f32 %v3884, %v4556
    %v4653 = vmul.f32 %v3885, %v4557
    %v4654 = vmul.f32 %v3886, %v4558
    %v4655 = vmul.f32 %v3887, %v4559
    %v4656 = vmul.f32 %v3888, %v4560
    %v4657 = vmul.f32 %v3889, %v4561
    %v4658 = vmul.f32 %v3890, %v4562
    %v4659 = vmul.f32 %v3891, %v4563
    %v4660 = vmul.f32 %v3892, %v4564
    %v4661 = vmul.f32 %v3893, %v4565
    %v4662 = vmul.f32 %v3894, %v4566
    %v4663 = vmul.f32 %v3895, %v4567
    %v4664 = vmul.f32 %v3896, %v4568
    %v4665 = vmul.f32 %v3897, %v4569
    %v4666 = vmul.f32 %v3898, %v4570
    %v4667 = vmul.f32 %v3899, %v4571
    %v4668 = vmul.f32 %v3900, %v4572
    %v4669 = vmul.f32 %v3901, %v4573
    %v4670 = vmul.f32 %v3902, %v4574
    %v4671 = vmul.f32 %v3903, %v4575
    %v4672 = vmul.f32 %v3904, %v4576
    %v4673 = vmul.f32 %v3905, %v4577
    %v4674 = vmul.f32 %v3906, %v4578
    %v4675 = vmul.f32 %v3907, %v4579
    %v4676 = vmul.f32 %v3908, %v4580
    %v4677 = vmul.f32 %v3909, %v4581
    %v4678 = vmul.f32 %v3910, %v4582
    %v4679 = vmul.f32 %v3911, %v4583
    %v4680 = vmul.f32 %v3912, %v4584
    %v4681 = vmul.f32 %v3913, %v4585
    %v4682 = vmul.f32 %v3914, %v4586
    %v4683 = vmul.f32 %v3915, %v4587
    %v4684 = vmul.f32 %v3916, %v4588
    %v4685 = vmul.f32 %v3917, %v4589
    %v4686 = vmul.f32 %v3918, %v4590
    %v4687 = vmul.f32 %v3919, %v4591
    %v4688 = vmul.f32 %v3920, %v4592
    %v4689 = vmul.f32 %v3921, %v4593
    %v4690 = vmul.f32 %v3922, %v4594
    %v4691 = vmul.f32 %v3923, %v4595
    %v4692 = vmul.f32 %v3924, %v4596
    %v4693 = vmul.f32 %v3925, %v4597
    %v4694 = vmul.f32 %v3926, %v4598
    %v4695 = vmul.f32 %v3927, %v4599
    %v4696 = vmul.f32 %v3928, %v4600
    %v4697 = vmul.f32 %v3929, %v4601
    %v4698 = vmul.f32 %v3930, %v4602
    %v4699 = vmul.f32 %v3931, %v4603
    %v4700 = vmul.f32 %v3932, %v4604
    %v4701 = vmul.f32 %v3933, %v4605
    %v4702 = vmul.f32 %v3934, %v4606
    %v4703 = vmul.f32 %v3935, %v4607
    %v4704 = vmul.f32 %v3936, %v4608
    %v4705 = vmul.f32 %v3937, %v4609
    %v4706 = vmul.f32 %v3938, %v4610
    %v4707 = vmul.f32 %v3939, %v4611
    %v4708 = vmul.f32 %v3940, %v4612
    %v4709 = vmul.f32 %v3941, %v4613
    %v4710 = vmul.f32 %v3942, %v4614
    %v4711 = vmul.f32 %v3943, %v4615
    %v4712 = vmul.f32 %v3944, %v4616
    %v4713 = vmul.f32 %v3945, %v4617
    %v4714 = vmul.f32 %v3946, %v4618
    %v4715 = vmul.f32 %v3947, %v4619
    %v4716 = vmul.f32 %v3948, %v4620
    %v4717 = vmul.f32 %v3949, %v4621
    %v4718 = vmul.f32 %v3950, %v4622
    %v4719 = vmul.f32 %v3951, %v4623
    %v4720 = vmul.f32 %v3952, %v4624
    %v4721 = vmul.f32 %v3953, %v4625
    %v4722 = vmul.f32 %v3954, %v4626
    %v4723 = vmul.f32 %v3955, %v4627
    %v4724 = vmul.f32 %v3956, %v4628
    %v4725 = vmul.f32 %v3957, %v4629
    %v4726 = vmul.f32 %v3958, %v4630
    %v4727 = vmul.f32 %v3959, %v4631
    %v4728 = vmul.f32 %v3960, %v4632
    %v4729 = vmul.f32 %v3961, %v4633
    %v4730 = vmul.f32 %v3962, %v4634
    %v4731 = vmul.f32 %v3963, %v4635
    %v4732 = vmul.f32 %v3964, %v4636
    %v4733 = vmul.f32 %v3965, %v4637
    %v4734 = vmul.f32 %v3966, %v4638
    %v4735 = vmul.f32 %v3967, %v4639
    %v4736 = vmul.f32 %v3968, %v4640
    %v4737 = vld [vmem:[#allocation6] ss:$8 sm:$0xf]
    %v4738 = vld [vmem:[#allocation6] ss:$8 sm:$0x30]
    %v4739 = vor.u32 %v4737, %v4738
    %s4740 = scalar_lea.vmem [#allocation6], 1
    %v4741 = vld [vmem:[%s4740] ss:$8 sm:$0xf]
    %v4742 = vld [vmem:[%s4740] ss:$8 sm:$0x30]
    %v4743 = vor.u32 %v4741, %v4742
    %v4744 = vadd.f32 %v4641, %v4642
    %v4745 = vadd.f32 %v4744, %v4643
    %v4746 = vadd.f32 %v4745, %v4644
    %v4747 = vadd.f32 %v4746, %v4645
    %v4748 = vadd.f32 %v4747, %v4646
    %4749 = vadd.xlane.f32.xlu0 %v4748
    %v4750 = vpop.xlane.xlu0 %4749
    %v4751 = vadd.f32 %v4647, %v4648
    %v4752 = vadd.f32 %v4751, %v4649
    %v4753 = vadd.f32 %v4752, %v4650
    %v4754 = vadd.f32 %v4753, %v4651
    %v4755 = vadd.f32 %v4754, %v4652
    %4756 = vadd.xlane.f32.xlu0 %v4755
    %v4757 = vpop.xlane.xlu0 %4756
    %v4758 = vadd.f32 %v4653, %v4654
    %v4759 = vadd.f32 %v4758, %v4655
    %v4760 = vadd.f32 %v4759, %v4656
    %v4761 = vadd.f32 %v4760, %v4657
    %v4762 = vadd.f32 %v4761, %v4658
    %4763 = vadd.xlane.f32.xlu0 %v4762
    %v4764 = vpop.xlane.xlu0 %4763
    %v4765 = vadd.f32 %v4659, %v4660
    %v4766 = vadd.f32 %v4765, %v4661
    %v4767 = vadd.f32 %v4766, %v4662
    %v4768 = vadd.f32 %v4767, %v4663
    %v4769 = vadd.f32 %v4768, %v4664
    %4770 = vadd.xlane.f32.xlu0 %v4769
    %v4771 = vpop.xlane.xlu0 %4770
    %v4772 = vadd.f32 %v4665, %v4666
    %v4773 = vadd.f32 %v4772, %v4667
    %v4774 = vadd.f32 %v4773, %v4668
    %v4775 = vadd.f32 %v4774, %v4669
    %v4776 = vadd.f32 %v4775, %v4670
    %4777 = vadd.xlane.f32.xlu0 %v4776
    %v4778 = vpop.xlane.xlu0 %4777
    %v4779 = vadd.f32 %v4671, %v4672
    %v4780 = vadd.f32 %v4779, %v4673
    %v4781 = vadd.f32 %v4780, %v4674
    %v4782 = vadd.f32 %v4781, %v4675
    %v4783 = vadd.f32 %v4782, %v4676
    %4784 = vadd.xlane.f32.xlu0 %v4783
    %v4785 = vpop.xlane.xlu0 %4784
    %v4786 = vadd.f32 %v4677, %v4678
    %v4787 = vadd.f32 %v4786, %v4679
    %v4788 = vadd.f32 %v4787, %v4680
    %v4789 = vadd.f32 %v4788, %v4681
    %v4790 = vadd.f32 %v4789, %v4682
    %4791 = vadd.xlane.f32.xlu0 %v4790
    %v4792 = vpop.xlane.xlu0 %4791
    %v4793 = vadd.f32 %v4683, %v4684
    %v4794 = vadd.f32 %v4793, %v4685
    %v4795 = vadd.f32 %v4794, %v4686
    %v4796 = vadd.f32 %v4795, %v4687
    %v4797 = vadd.f32 %v4796, %v4688
    %4798 = vadd.xlane.f32.xlu0 %v4797
    %v4799 = vpop.xlane.xlu0 %4798
    %v4800 = vadd.f32 %v4689, %v4690
    %v4801 = vadd.f32 %v4800, %v4691
    %v4802 = vadd.f32 %v4801, %v4692
    %v4803 = vadd.f32 %v4802, %v4693
    %v4804 = vadd.f32 %v4803, %v4694
    %4805 = vadd.xlane.f32.xlu0 %v4804
    %v4806 = vpop.xlane.xlu0 %4805
    %v4807 = vadd.f32 %v4695, %v4696
    %v4808 = vadd.f32 %v4807, %v4697
    %v4809 = vadd.f32 %v4808, %v4698
    %v4810 = vadd.f32 %v4809, %v4699
    %v4811 = vadd.f32 %v4810, %v4700
    %4812 = vadd.xlane.f32.xlu0 %v4811
    %v4813 = vpop.xlane.xlu0 %4812
    %v4814 = vadd.f32 %v4701, %v4702
    %v4815 = vadd.f32 %v4814, %v4703
    %v4816 = vadd.f32 %v4815, %v4704
    %v4817 = vadd.f32 %v4816, %v4705
    %v4818 = vadd.f32 %v4817, %v4706
    %4819 = vadd.xlane.f32.xlu0 %v4818
    %v4820 = vpop.xlane.xlu0 %4819
    %v4821 = vadd.f32 %v4707, %v4708
    %v4822 = vadd.f32 %v4821, %v4709
    %v4823 = vadd.f32 %v4822, %v4710
    %v4824 = vadd.f32 %v4823, %v4711
    %v4825 = vadd.f32 %v4824, %v4712
    %4826 = vadd.xlane.f32.xlu0 %v4825
    %v4827 = vpop.xlane.xlu0 %4826
    %v4828 = vadd.f32 %v4713, %v4714
    %v4829 = vadd.f32 %v4828, %v4715
    %v4830 = vadd.f32 %v4829, %v4716
    %v4831 = vadd.f32 %v4830, %v4717
    %v4832 = vadd.f32 %v4831, %v4718
    %4833 = vadd.xlane.f32.xlu0 %v4832
    %v4834 = vpop.xlane.xlu0 %4833
    %v4835 = vadd.f32 %v4719, %v4720
    %v4836 = vadd.f32 %v4835, %v4721
    %v4837 = vadd.f32 %v4836, %v4722
    %v4838 = vadd.f32 %v4837, %v4723
    %v4839 = vadd.f32 %v4838, %v4724
    %4840 = vadd.xlane.f32.xlu0 %v4839
    %v4841 = vpop.xlane.xlu0 %4840
    %v4842 = vadd.f32 %v4725, %v4726
    %v4843 = vadd.f32 %v4842, %v4727
    %v4844 = vadd.f32 %v4843, %v4728
    %v4845 = vadd.f32 %v4844, %v4729
    %v4846 = vadd.f32 %v4845, %v4730
    %4847 = vadd.xlane.f32.xlu0 %v4846
    %v4848 = vpop.xlane.xlu0 %4847
    %v4849 = vadd.f32 %v4731, %v4732
    %v4850 = vadd.f32 %v4849, %v4733
    %v4851 = vadd.f32 %v4850, %v4734
    %v4852 = vadd.f32 %v4851, %v4735
    %v4853 = vadd.f32 %v4852, %v4736
    %4854 = vadd.xlane.f32.xlu0 %v4853
    %v4855 = vpop.xlane.xlu0 %4854
    %v4856 = vrcp.pop 768.0
    %v4857 = vmul.f32 %v4750, %v4856
    %v4858 = vmul.f32 %v4757, %v4856
    %v4859 = vmul.f32 %v4764, %v4856
    %v4860 = vmul.f32 %v4771, %v4856
    %v4861 = vmul.f32 %v4778, %v4856
    %v4862 = vmul.f32 %v4785, %v4856
    %v4863 = vmul.f32 %v4792, %v4856
    %v4864 = vmul.f32 %v4799, %v4856
    %v4865 = vmul.f32 %v4806, %v4856
    %v4866 = vmul.f32 %v4813, %v4856
    %v4867 = vmul.f32 %v4820, %v4856
    %v4868 = vmul.f32 %v4827, %v4856
    %v4869 = vmul.f32 %v4834, %v4856
    %v4870 = vmul.f32 %v4841, %v4856
    %v4871 = vmul.f32 %v4848, %v4856
    %v4872 = vmul.f32 %v4855, %v4856
    %v4873 = vsub.f32 %v4641, %v4857
    %v4874 = vsub.f32 %v4642, %v4857
    %v4875 = vsub.f32 %v4643, %v4857
    %v4876 = vsub.f32 %v4644, %v4857
    %v4877 = vsub.f32 %v4645, %v4857
    %v4878 = vsub.f32 %v4646, %v4857
    %v4879 = vsub.f32 %v4647, %v4858
    %v4880 = vsub.f32 %v4648, %v4858
    %v4881 = vsub.f32 %v4649, %v4858
    %v4882 = vsub.f32 %v4650, %v4858
    %v4883 = vsub.f32 %v4651, %v4858
    %v4884 = vsub.f32 %v4652, %v4858
    %v4885 = vsub.f32 %v4653, %v4859
    %v4886 = vsub.f32 %v4654, %v4859
    %v4887 = vsub.f32 %v4655, %v4859
    %v4888 = vsub.f32 %v4656, %v4859
    %v4889 = vsub.f32 %v4657, %v4859
    %v4890 = vsub.f32 %v4658, %v4859
    %v4891 = vsub.f32 %v4659, %v4860
    %v4892 = vsub.f32 %v4660, %v4860
    %v4893 = vsub.f32 %v4661, %v4860
    %v4894 = vsub.f32 %v4662, %v4860
    %v4895 = vsub.f32 %v4663, %v4860
    %v4896 = vsub.f32 %v4664, %v4860
    %v4897 = vsub.f32 %v4665, %v4861
    %v4898 = vsub.f32 %v4666, %v4861
    %v4899 = vsub.f32 %v4667, %v4861
    %v4900 = vsub.f32 %v4668, %v4861
    %v4901 = vsub.f32 %v4669, %v4861
    %v4902 = vsub.f32 %v4670, %v4861
    %v4903 = vsub.f32 %v4671, %v4862
    %v4904 = vsub.f32 %v4672, %v4862
    %v4905 = vsub.f32 %v4673, %v4862
    %v4906 = vsub.f32 %v4674, %v4862
    %v4907 = vsub.f32 %v4675, %v4862
    %v4908 = vsub.f32 %v4676, %v4862
    %v4909 = vsub.f32 %v4677, %v4863
    %v4910 = vsub.f32 %v4678, %v4863
    %v4911 = vsub.f32 %v4679, %v4863
    %v4912 = vsub.f32 %v4680, %v4863
    %v4913 = vsub.f32 %v4681, %v4863
    %v4914 = vsub.f32 %v4682, %v4863
    %v4915 = vsub.f32 %v4683, %v4864
    %v4916 = vsub.f32 %v4684, %v4864
    %v4917 = vsub.f32 %v4685, %v4864
    %v4918 = vsub.f32 %v4686, %v4864
    %v4919 = vsub.f32 %v4687, %v4864
    %v4920 = vsub.f32 %v4688, %v4864
    %v4921 = vsub.f32 %v4689, %v4865
    %v4922 = vsub.f32 %v4690, %v4865
    %v4923 = vsub.f32 %v4691, %v4865
    %v4924 = vsub.f32 %v4692, %v4865
    %v4925 = vsub.f32 %v4693, %v4865
    %v4926 = vsub.f32 %v4694, %v4865
    %v4927 = vsub.f32 %v4695, %v4866
    %v4928 = vsub.f32 %v4696, %v4866
    %v4929 = vsub.f32 %v4697, %v4866
    %v4930 = vsub.f32 %v4698, %v4866
    %v4931 = vsub.f32 %v4699, %v4866
    %v4932 = vsub.f32 %v4700, %v4866
    %v4933 = vsub.f32 %v4701, %v4867
    %v4934 = vsub.f32 %v4702, %v4867
    %v4935 = vsub.f32 %v4703, %v4867
    %v4936 = vsub.f32 %v4704, %v4867
    %v4937 = vsub.f32 %v4705, %v4867
    %v4938 = vsub.f32 %v4706, %v4867
    %v4939 = vsub.f32 %v4707, %v4868
    %v4940 = vsub.f32 %v4708, %v4868
    %v4941 = vsub.f32 %v4709, %v4868
    %v4942 = vsub.f32 %v4710, %v4868
    %v4943 = vsub.f32 %v4711, %v4868
    %v4944 = vsub.f32 %v4712, %v4868
    %v4945 = vsub.f32 %v4713, %v4869
    %v4946 = vsub.f32 %v4714, %v4869
    %v4947 = vsub.f32 %v4715, %v4869
    %v4948 = vsub.f32 %v4716, %v4869
    %v4949 = vsub.f32 %v4717, %v4869
    %v4950 = vsub.f32 %v4718, %v4869
    %v4951 = vsub.f32 %v4719, %v4870
    %v4952 = vsub.f32 %v4720, %v4870
    %v4953 = vsub.f32 %v4721, %v4870
    %v4954 = vsub.f32 %v4722, %v4870
    %v4955 = vsub.f32 %v4723, %v4870
    %v4956 = vsub.f32 %v4724, %v4870
    %v4957 = vsub.f32 %v4725, %v4871
    %v4958 = vsub.f32 %v4726, %v4871
    %v4959 = vsub.f32 %v4727, %v4871
    %v4960 = vsub.f32 %v4728, %v4871
    %v4961 = vsub.f32 %v4729, %v4871
    %v4962 = vsub.f32 %v4730, %v4871
    %v4963 = vsub.f32 %v4731, %v4872
    %v4964 = vsub.f32 %v4732, %v4872
    %v4965 = vsub.f32 %v4733, %v4872
    %v4966 = vsub.f32 %v4734, %v4872
    %v4967 = vsub.f32 %v4735, %v4872
    %v4968 = vsub.f32 %v4736, %v4872
    %v4969 = vmul.f32 %v4873, %v4873
    %v4970 = vmul.f32 %v4874, %v4874
    %v4971 = vmul.f32 %v4875, %v4875
    %v4972 = vmul.f32 %v4876, %v4876
    %v4973 = vmul.f32 %v4877, %v4877
    %v4974 = vmul.f32 %v4878, %v4878
    %v4975 = vmul.f32 %v4879, %v4879
    %v4976 = vmul.f32 %v4880, %v4880
    %v4977 = vmul.f32 %v4881, %v4881
    %v4978 = vmul.f32 %v4882, %v4882
    %v4979 = vmul.f32 %v4883, %v4883
    %v4980 = vmul.f32 %v4884, %v4884
    %v4981 = vmul.f32 %v4885, %v4885
    %v4982 = vmul.f32 %v4886, %v4886
    %v4983 = vmul.f32 %v4887, %v4887
    %v4984 = vmul.f32 %v4888, %v4888
    %v4985 = vmul.f32 %v4889, %v4889
    %v4986 = vmul.f32 %v4890, %v4890
    %v4987 = vmul.f32 %v4891, %v4891
    %v4988 = vmul.f32 %v4892, %v4892
    %v4989 = vmul.f32 %v4893, %v4893
    %v4990 = vmul.f32 %v4894, %v4894
    %v4991 = vmul.f32 %v4895, %v4895
    %v4992 = vmul.f32 %v4896, %v4896
    %v4993 = vmul.f32 %v4897, %v4897
    %v4994 = vmul.f32 %v4898, %v4898
    %v4995 = vmul.f32 %v4899, %v4899
    %v4996 = vmul.f32 %v4900, %v4900
    %v4997 = vmul.f32 %v4901, %v4901
    %v4998 = vmul.f32 %v4902, %v4902
    %v4999 = vmul.f32 %v4903, %v4903
    %v5000 = vmul.f32 %v4904, %v4904
    %v5001 = vmul.f32 %v4905, %v4905
    %v5002 = vmul.f32 %v4906, %v4906
    %v5003 = vmul.f32 %v4907, %v4907
    %v5004 = vmul.f32 %v4908, %v4908
    %v5005 = vmul.f32 %v4909, %v4909
    %v5006 = vmul.f32 %v4910, %v4910
    %v5007 = vmul.f32 %v4911, %v4911
    %v5008 = vmul.f32 %v4912, %v4912
    %v5009 = vmul.f32 %v4913, %v4913
    %v5010 = vmul.f32 %v4914, %v4914
    %v5011 = vmul.f32 %v4915, %v4915
    %v5012 = vmul.f32 %v4916, %v4916
    %v5013 = vmul.f32 %v4917, %v4917
    %v5014 = vmul.f32 %v4918, %v4918
    %v5015 = vmul.f32 %v4919, %v4919
    %v5016 = vmul.f32 %v4920, %v4920
    %v5017 = vmul.f32 %v4921, %v4921
    %v5018 = vmul.f32 %v4922, %v4922
    %v5019 = vmul.f32 %v4923, %v4923
    %v5020 = vmul.f32 %v4924, %v4924
    %v5021 = vmul.f32 %v4925, %v4925
    %v5022 = vmul.f32 %v4926, %v4926
    %v5023 = vmul.f32 %v4927, %v4927
    %v5024 = vmul.f32 %v4928, %v4928
    %v5025 = vmul.f32 %v4929, %v4929
    %v5026 = vmul.f32 %v4930, %v4930
    %v5027 = vmul.f32 %v4931, %v4931
    %v5028 = vmul.f32 %v4932, %v4932
    %v5029 = vmul.f32 %v4933, %v4933
    %v5030 = vmul.f32 %v4934, %v4934
    %v5031 = vmul.f32 %v4935, %v4935
    %v5032 = vmul.f32 %v4936, %v4936
    %v5033 = vmul.f32 %v4937, %v4937
    %v5034 = vmul.f32 %v4938, %v4938
    %v5035 = vmul.f32 %v4939, %v4939
    %v5036 = vmul.f32 %v4940, %v4940
    %v5037 = vmul.f32 %v4941, %v4941
    %v5038 = vmul.f32 %v4942, %v4942
    %v5039 = vmul.f32 %v4943, %v4943
    %v5040 = vmul.f32 %v4944, %v4944
    %v5041 = vmul.f32 %v4945, %v4945
    %v5042 = vmul.f32 %v4946, %v4946
    %v5043 = vmul.f32 %v4947, %v4947
    %v5044 = vmul.f32 %v4948, %v4948
    %v5045 = vmul.f32 %v4949, %v4949
    %v5046 = vmul.f32 %v4950, %v4950
    %v5047 = vmul.f32 %v4951, %v4951
    %v5048 = vmul.f32 %v4952, %v4952
    %v5049 = vmul.f32 %v4953, %v4953
    %v5050 = vmul.f32 %v4954, %v4954
    %v5051 = vmul.f32 %v4955, %v4955
    %v5052 = vmul.f32 %v4956, %v4956
    %v5053 = vmul.f32 %v4957, %v4957
    %v5054 = vmul.f32 %v4958, %v4958
    %v5055 = vmul.f32 %v4959, %v4959
    %v5056 = vmul.f32 %v4960, %v4960
    %v5057 = vmul.f32 %v4961, %v4961
    %v5058 = vmul.f32 %v4962, %v4962
    %v5059 = vmul.f32 %v4963, %v4963
    %v5060 = vmul.f32 %v4964, %v4964
    %v5061 = vmul.f32 %v4965, %v4965
    %v5062 = vmul.f32 %v4966, %v4966
    %v5063 = vmul.f32 %v4967, %v4967
    %v5064 = vmul.f32 %v4968, %v4968
    %v5065 = vadd.f32 %v4969, %v4970
    %v5066 = vadd.f32 %v5065, %v4971
    %v5067 = vadd.f32 %v5066, %v4972
    %v5068 = vadd.f32 %v5067, %v4973
    %v5069 = vadd.f32 %v5068, %v4974
    %5070 = vadd.xlane.f32.xlu0 %v5069
    %v5071 = vpop.xlane.xlu0 %5070
    %v5072 = vadd.f32 %v4975, %v4976
    %v5073 = vadd.f32 %v5072, %v4977
    %v5074 = vadd.f32 %v5073, %v4978
    %v5075 = vadd.f32 %v5074, %v4979
    %v5076 = vadd.f32 %v5075, %v4980
    %5077 = vadd.xlane.f32.xlu0 %v5076
    %v5078 = vpop.xlane.xlu0 %5077
    %v5079 = vadd.f32 %v4981, %v4982
    %v5080 = vadd.f32 %v5079, %v4983
    %v5081 = vadd.f32 %v5080, %v4984
    %v5082 = vadd.f32 %v5081, %v4985
    %v5083 = vadd.f32 %v5082, %v4986
    %5084 = vadd.xlane.f32.xlu0 %v5083
    %v5085 = vpop.xlane.xlu0 %5084
    %v5086 = vadd.f32 %v4987, %v4988
    %v5087 = vadd.f32 %v5086, %v4989
    %v5088 = vadd.f32 %v5087, %v4990
    %v5089 = vadd.f32 %v5088, %v4991
    %v5090 = vadd.f32 %v5089, %v4992
    %5091 = vadd.xlane.f32.xlu0 %v5090
    %v5092 = vpop.xlane.xlu0 %5091
    %v5093 = vadd.f32 %v4993, %v4994
    %v5094 = vadd.f32 %v5093, %v4995
    %v5095 = vadd.f32 %v5094, %v4996
    %v5096 = vadd.f32 %v5095, %v4997
    %v5097 = vadd.f32 %v5096, %v4998
    %5098 = vadd.xlane.f32.xlu0 %v5097
    %v5099 = vpop.xlane.xlu0 %5098
    %v5100 = vadd.f32 %v4999, %v5000
    %v5101 = vadd.f32 %v5100, %v5001
    %v5102 = vadd.f32 %v5101, %v5002
    %v5103 = vadd.f32 %v5102, %v5003
    %v5104 = vadd.f32 %v5103, %v5004
    %5105 = vadd.xlane.f32.xlu0 %v5104
    %v5106 = vpop.xlane.xlu0 %5105
    %v5107 = vadd.f32 %v5005, %v5006
    %v5108 = vadd.f32 %v5107, %v5007
    %v5109 = vadd.f32 %v5108, %v5008
    %v5110 = vadd.f32 %v5109, %v5009
    %v5111 = vadd.f32 %v5110, %v5010
    %5112 = vadd.xlane.f32.xlu0 %v5111
    %v5113 = vpop.xlane.xlu0 %5112
    %v5114 = vadd.f32 %v5011, %v5012
    %v5115 = vadd.f32 %v5114, %v5013
    %v5116 = vadd.f32 %v5115, %v5014
    %v5117 = vadd.f32 %v5116, %v5015
    %v5118 = vadd.f32 %v5117, %v5016
    %5119 = vadd.xlane.f32.xlu0 %v5118
    %v5120 = vpop.xlane.xlu0 %5119
    %v5121 = vadd.f32 %v5017, %v5018
    %v5122 = vadd.f32 %v5121, %v5019
    %v5123 = vadd.f32 %v5122, %v5020
    %v5124 = vadd.f32 %v5123, %v5021
    %v5125 = vadd.f32 %v5124, %v5022
    %5126 = vadd.xlane.f32.xlu0 %v5125
    %v5127 = vpop.xlane.xlu0 %5126
    %v5128 = vadd.f32 %v5023, %v5024
    %v5129 = vadd.f32 %v5128, %v5025
    %v5130 = vadd.f32 %v5129, %v5026
    %v5131 = vadd.f32 %v5130, %v5027
    %v5132 = vadd.f32 %v5131, %v5028
    %5133 = vadd.xlane.f32.xlu0 %v5132
    %v5134 = vpop.xlane.xlu0 %5133
    %v5135 = vadd.f32 %v5029, %v5030
    %v5136 = vadd.f32 %v5135, %v5031
    %v5137 = vadd.f32 %v5136, %v5032
    %v5138 = vadd.f32 %v5137, %v5033
    %v5139 = vadd.f32 %v5138, %v5034
    %5140 = vadd.xlane.f32.xlu0 %v5139
    %v5141 = vpop.xlane.xlu0 %5140
    %v5142 = vadd.f32 %v5035, %v5036
    %v5143 = vadd.f32 %v5142, %v5037
    %v5144 = vadd.f32 %v5143, %v5038
    %v5145 = vadd.f32 %v5144, %v5039
    %v5146 = vadd.f32 %v5145, %v5040
    %5147 = vadd.xlane.f32.xlu0 %v5146
    %v5148 = vpop.xlane.xlu0 %5147
    %v5149 = vadd.f32 %v5041, %v5042
    %v5150 = vadd.f32 %v5149, %v5043
    %v5151 = vadd.f32 %v5150, %v5044
    %v5152 = vadd.f32 %v5151, %v5045
    %v5153 = vadd.f32 %v5152, %v5046
    %5154 = vadd.xlane.f32.xlu0 %v5153
    %v5155 = vpop.xlane.xlu0 %5154
    %v5156 = vadd.f32 %v5047, %v5048
    %v5157 = vadd.f32 %v5156, %v5049
    %v5158 = vadd.f32 %v5157, %v5050
    %v5159 = vadd.f32 %v5158, %v5051
    %v5160 = vadd.f32 %v5159, %v5052
    %5161 = vadd.xlane.f32.xlu0 %v5160
    %v5162 = vpop.xlane.xlu0 %5161
    %v5163 = vadd.f32 %v5053, %v5054
    %v5164 = vadd.f32 %v5163, %v5055
    %v5165 = vadd.f32 %v5164, %v5056
    %v5166 = vadd.f32 %v5165, %v5057
    %v5167 = vadd.f32 %v5166, %v5058
    %5168 = vadd.xlane.f32.xlu0 %v5167
    %v5169 = vpop.xlane.xlu0 %5168
    %v5170 = vadd.f32 %v5059, %v5060
    %v5171 = vadd.f32 %v5170, %v5061
    %v5172 = vadd.f32 %v5171, %v5062
    %v5173 = vadd.f32 %v5172, %v5063
    %v5174 = vadd.f32 %v5173, %v5064
    %5175 = vadd.xlane.f32.xlu0 %v5174
    %v5176 = vpop.xlane.xlu0 %5175
    %v5177 = vmul.f32 %v5071, %v4856
    %v5178 = vmul.f32 %v5078, %v4856
    %v5179 = vmul.f32 %v5085, %v4856
    %v5180 = vmul.f32 %v5092, %v4856
    %v5181 = vmul.f32 %v5099, %v4856
    %v5182 = vmul.f32 %v5106, %v4856
    %v5183 = vmul.f32 %v5113, %v4856
    %v5184 = vmul.f32 %v5120, %v4856
    %v5185 = vmul.f32 %v5127, %v4856
    %v5186 = vmul.f32 %v5134, %v4856
    %v5187 = vmul.f32 %v5141, %v4856
    %v5188 = vmul.f32 %v5148, %v4856
    %v5189 = vmul.f32 %v5155, %v4856
    %v5190 = vmul.f32 %v5162, %v4856
    %v5191 = vmul.f32 %v5169, %v4856
    %v5192 = vmul.f32 %v5176, %v4856
    %v5193 = vadd.f32 %v5177, 1e-05
    %v5194 = vadd.f32 %v5178, 1e-05
    %v5195 = vadd.f32 %v5179, 1e-05
    %v5196 = vadd.f32 %v5180, 1e-05
    %v5197 = vadd.f32 %v5181, 1e-05
    %v5198 = vadd.f32 %v5182, 1e-05
    %v5199 = vadd.f32 %v5183, 1e-05
    %v5200 = vadd.f32 %v5184, 1e-05
    %v5201 = vadd.f32 %v5185, 1e-05
    %v5202 = vadd.f32 %v5186, 1e-05
    %v5203 = vadd.f32 %v5187, 1e-05
    %v5204 = vadd.f32 %v5188, 1e-05
    %v5205 = vadd.f32 %v5189, 1e-05
    %v5206 = vadd.f32 %v5190, 1e-05
    %v5207 = vadd.f32 %v5191, 1e-05
    %v5208 = vadd.f32 %v5192, 1e-05
    %v5209 = vrsqrt.pop %v5193
    %v5210 = vrsqrt.pop %v5194
    %v5211 = vrsqrt.pop %v5195
    %v5212 = vrsqrt.pop %v5196
    %v5213 = vrsqrt.pop %v5197
    %v5214 = vrsqrt.pop %v5198
    %v5215 = vrsqrt.pop %v5199
    %v5216 = vrsqrt.pop %v5200
    %v5217 = vrsqrt.pop %v5201
    %v5218 = vrsqrt.pop %v5202
    %v5219 = vrsqrt.pop %v5203
    %v5220 = vrsqrt.pop %v5204
    %v5221 = vrsqrt.pop %v5205
    %v5222 = vrsqrt.pop %v5206
    %v5223 = vrsqrt.pop %v5207
    %v5224 = vrsqrt.pop %v5208
    %v5225 = vmul.f32 %v4873, %v5209
    %v5226 = vmul.f32 %v4874, %v5209
    %v5227 = vmul.f32 %v4875, %v5209
    %v5228 = vmul.f32 %v4876, %v5209
    %v5229 = vmul.f32 %v4877, %v5209
    %v5230 = vmul.f32 %v4878, %v5209
    %v5231 = vmul.f32 %v4879, %v5210
    %v5232 = vmul.f32 %v4880, %v5210
    %v5233 = vmul.f32 %v4881, %v5210
    %v5234 = vmul.f32 %v4882, %v5210
    %v5235 = vmul.f32 %v4883, %v5210
    %v5236 = vmul.f32 %v4884, %v5210
    %v5237 = vmul.f32 %v4885, %v5211
    %v5238 = vmul.f32 %v4886, %v5211
    %v5239 = vmul.f32 %v4887, %v5211
    %v5240 = vmul.f32 %v4888, %v5211
    %v5241 = vmul.f32 %v4889, %v5211
    %v5242 = vmul.f32 %v4890, %v5211
    %v5243 = vmul.f32 %v4891, %v5212
    %v5244 = vmul.f32 %v4892, %v5212
    %v5245 = vmul.f32 %v4893, %v5212
    %v5246 = vmul.f32 %v4894, %v5212
    %v5247 = vmul.f32 %v4895, %v5212
    %v5248 = vmul.f32 %v4896, %v5212
    %v5249 = vmul.f32 %v4897, %v5213
    %v5250 = vmul.f32 %v4898, %v5213
    %v5251 = vmul.f32 %v4899, %v5213
    %v5252 = vmul.f32 %v4900, %v5213
    %v5253 = vmul.f32 %v4901, %v5213
    %v5254 = vmul.f32 %v4902, %v5213
    %v5255 = vmul.f32 %v4903, %v5214
    %v5256 = vmul.f32 %v4904, %v5214
    %v5257 = vmul.f32 %v4905, %v5214
    %v5258 = vmul.f32 %v4906, %v5214
    %v5259 = vmul.f32 %v4907, %v5214
    %v5260 = vmul.f32 %v4908, %v5214
    %v5261 = vmul.f32 %v4909, %v5215
    %v5262 = vmul.f32 %v4910, %v5215
    %v5263 = vmul.f32 %v4911, %v5215
    %v5264 = vmul.f32 %v4912, %v5215
    %v5265 = vmul.f32 %v4913, %v5215
    %v5266 = vmul.f32 %v4914, %v5215
    %v5267 = vmul.f32 %v4915, %v5216
    %v5268 = vmul.f32 %v4916, %v5216
    %v5269 = vmul.f32 %v4917, %v5216
    %v5270 = vmul.f32 %v4918, %v5216
    %v5271 = vmul.f32 %v4919, %v5216
    %v5272 = vmul.f32 %v4920, %v5216
    %v5273 = vmul.f32 %v4921, %v5217
    %v5274 = vmul.f32 %v4922, %v5217
    %v5275 = vmul.f32 %v4923, %v5217
    %v5276 = vmul.f32 %v4924, %v5217
    %v5277 = vmul.f32 %v4925, %v5217
    %v5278 = vmul.f32 %v4926, %v5217
    %v5279 = vmul.f32 %v4927, %v5218
    %v5280 = vmul.f32 %v4928, %v5218
    %v5281 = vmul.f32 %v4929, %v5218
    %v5282 = vmul.f32 %v4930, %v5218
    %v5283 = vmul.f32 %v4931, %v5218
    %v5284 = vmul.f32 %v4932, %v5218
    %v5285 = vmul.f32 %v4933, %v5219
    %v5286 = vmul.f32 %v4934, %v5219
    %v5287 = vmul.f32 %v4935, %v5219
    %v5288 = vmul.f32 %v4936, %v5219
    %v5289 = vmul.f32 %v4937, %v5219
    %v5290 = vmul.f32 %v4938, %v5219
    %v5291 = vmul.f32 %v4939, %v5220
    %v5292 = vmul.f32 %v4940, %v5220
    %v5293 = vmul.f32 %v4941, %v5220
    %v5294 = vmul.f32 %v4942, %v5220
    %v5295 = vmul.f32 %v4943, %v5220
    %v5296 = vmul.f32 %v4944, %v5220
    %v5297 = vmul.f32 %v4945, %v5221
    %v5298 = vmul.f32 %v4946, %v5221
    %v5299 = vmul.f32 %v4947, %v5221
    %v5300 = vmul.f32 %v4948, %v5221
    %v5301 = vmul.f32 %v4949, %v5221
    %v5302 = vmul.f32 %v4950, %v5221
    %v5303 = vmul.f32 %v4951, %v5222
    %v5304 = vmul.f32 %v4952, %v5222
    %v5305 = vmul.f32 %v4953, %v5222
    %v5306 = vmul.f32 %v4954, %v5222
    %v5307 = vmul.f32 %v4955, %v5222
    %v5308 = vmul.f32 %v4956, %v5222
    %v5309 = vmul.f32 %v4957, %v5223
    %v5310 = vmul.f32 %v4958, %v5223
    %v5311 = vmul.f32 %v4959, %v5223
    %v5312 = vmul.f32 %v4960, %v5223
    %v5313 = vmul.f32 %v4961, %v5223
    %v5314 = vmul.f32 %v4962, %v5223
    %v5315 = vmul.f32 %v4963, %v5224
    %v5316 = vmul.f32 %v4964, %v5224
    %v5317 = vmul.f32 %v4965, %v5224
    %v5318 = vmul.f32 %v4966, %v5224
    %v5319 = vmul.f32 %v4967, %v5224
    %v5320 = vmul.f32 %v4968, %v5224
    %v5322 = vlaneseq
    %v5323 = vshrl.u32 %v5322, 7
    %v5324 = vsub.s32 0, %v5323
    %v5325 = vrot.slane %v4739, %v5324
    %v5326 = vlaneseq
    %v5327 = vshrl.u32 %v5326, 7
    %v5328 = vsub.s32 1, %v5327
    %v5329 = vrot.slane %v4739, %v5328
    %v5330 = vlaneseq
    %v5331 = vshrl.u32 %v5330, 7
    %v5332 = vsub.s32 2, %v5331
    %v5333 = vrot.slane %v4739, %v5332
    %v5334 = vlaneseq
    %v5335 = vshrl.u32 %v5334, 7
    %v5336 = vsub.s32 3, %v5335
    %v5337 = vrot.slane %v4739, %v5336
    %v5338 = vlaneseq
    %v5339 = vshrl.u32 %v5338, 7
    %v5340 = vsub.s32 4, %v5339
    %v5341 = vrot.slane %v4739, %v5340
    %v5342 = vlaneseq
    %v5343 = vshrl.u32 %v5342, 7
    %v5344 = vsub.s32 5, %v5343
    %v5345 = vrot.slane %v4739, %v5344
    %v5352 = vmul.f32 %v5225, %v5325
    %v5353 = vmul.f32 %v5226, %v5329
    %v5354 = vmul.f32 %v5227, %v5333
    %v5355 = vmul.f32 %v5228, %v5337
    %v5356 = vmul.f32 %v5229, %v5341
    %v5357 = vmul.f32 %v5230, %v5345
    %v5358 = vmul.f32 %v5231, %v5325
    %v5359 = vmul.f32 %v5232, %v5329
    %v5360 = vmul.f32 %v5233, %v5333
    %v5361 = vmul.f32 %v5234, %v5337
    %v5362 = vmul.f32 %v5235, %v5341
    %v5363 = vmul.f32 %v5236, %v5345
    %v5364 = vmul.f32 %v5237, %v5325
    %v5365 = vmul.f32 %v5238, %v5329
    %v5366 = vmul.f32 %v5239, %v5333
    %v5367 = vmul.f32 %v5240, %v5337
    %v5368 = vmul.f32 %v5241, %v5341
    %v5369 = vmul.f32 %v5242, %v5345
    %v5370 = vmul.f32 %v5243, %v5325
    %v5371 = vmul.f32 %v5244, %v5329
    %v5372 = vmul.f32 %v5245, %v5333
    %v5373 = vmul.f32 %v5246, %v5337
    %v5374 = vmul.f32 %v5247, %v5341
    %v5375 = vmul.f32 %v5248, %v5345
    %v5376 = vmul.f32 %v5249, %v5325
    %v5377 = vmul.f32 %v5250, %v5329
    %v5378 = vmul.f32 %v5251, %v5333
    %v5379 = vmul.f32 %v5252, %v5337
    %v5380 = vmul.f32 %v5253, %v5341
    %v5381 = vmul.f32 %v5254, %v5345
    %v5382 = vmul.f32 %v5255, %v5325
    %v5383 = vmul.f32 %v5256, %v5329
    %v5384 = vmul.f32 %v5257, %v5333
    %v5385 = vmul.f32 %v5258, %v5337
    %v5386 = vmul.f32 %v5259, %v5341
    %v5387 = vmul.f32 %v5260, %v5345
    %v5388 = vmul.f32 %v5261, %v5325
    %v5389 = vmul.f32 %v5262, %v5329
    %v5390 = vmul.f32 %v5263, %v5333
    %v5391 = vmul.f32 %v5264, %v5337
    %v5392 = vmul.f32 %v5265, %v5341
    %v5393 = vmul.f32 %v5266, %v5345
    %v5394 = vmul.f32 %v5267, %v5325
    %v5395 = vmul.f32 %v5268, %v5329
    %v5396 = vmul.f32 %v5269, %v5333
    %v5397 = vmul.f32 %v5270, %v5337
    %v5398 = vmul.f32 %v5271, %v5341
    %v5399 = vmul.f32 %v5272, %v5345
    %v5400 = vmul.f32 %v5273, %v5325
    %v5401 = vmul.f32 %v5274, %v5329
    %v5402 = vmul.f32 %v5275, %v5333
    %v5403 = vmul.f32 %v5276, %v5337
    %v5404 = vmul.f32 %v5277, %v5341
    %v5405 = vmul.f32 %v5278, %v5345
    %v5406 = vmul.f32 %v5279, %v5325
    %v5407 = vmul.f32 %v5280, %v5329
    %v5408 = vmul.f32 %v5281, %v5333
    %v5409 = vmul.f32 %v5282, %v5337
    %v5410 = vmul.f32 %v5283, %v5341
    %v5411 = vmul.f32 %v5284, %v5345
    %v5412 = vmul.f32 %v5285, %v5325
    %v5413 = vmul.f32 %v5286, %v5329
    %v5414 = vmul.f32 %v5287, %v5333
    %v5415 = vmul.f32 %v5288, %v5337
    %v5416 = vmul.f32 %v5289, %v5341
    %v5417 = vmul.f32 %v5290, %v5345
    %v5418 = vmul.f32 %v5291, %v5325
    %v5419 = vmul.f32 %v5292, %v5329
    %v5420 = vmul.f32 %v5293, %v5333
    %v5421 = vmul.f32 %v5294, %v5337
    %v5422 = vmul.f32 %v5295, %v5341
    %v5423 = vmul.f32 %v5296, %v5345
    %v5424 = vmul.f32 %v5297, %v5325
    %v5425 = vmul.f32 %v5298, %v5329
    %v5426 = vmul.f32 %v5299, %v5333
    %v5427 = vmul.f32 %v5300, %v5337
    %v5428 = vmul.f32 %v5301, %v5341
    %v5429 = vmul.f32 %v5302, %v5345
    %v5430 = vmul.f32 %v5303, %v5325
    %v5431 = vmul.f32 %v5304, %v5329
    %v5432 = vmul.f32 %v5305, %v5333
    %v5433 = vmul.f32 %v5306, %v5337
    %v5434 = vmul.f32 %v5307, %v5341
    %v5435 = vmul.f32 %v5308, %v5345
    %v5436 = vmul.f32 %v5309, %v5325
    %v5437 = vmul.f32 %v5310, %v5329
    %v5438 = vmul.f32 %v5311, %v5333
    %v5439 = vmul.f32 %v5312, %v5337
    %v5440 = vmul.f32 %v5313, %v5341
    %v5441 = vmul.f32 %v5314, %v5345
    %v5442 = vmul.f32 %v5315, %v5325
    %v5443 = vmul.f32 %v5316, %v5329
    %v5444 = vmul.f32 %v5317, %v5333
    %v5445 = vmul.f32 %v5318, %v5337
    %v5446 = vmul.f32 %v5319, %v5341
    %v5447 = vmul.f32 %v5320, %v5345
    %v5449 = vlaneseq
    %v5450 = vshrl.u32 %v5449, 7
    %v5451 = vsub.s32 0, %v5450
    %v5452 = vrot.slane %v4743, %v5451
    %v5453 = vlaneseq
    %v5454 = vshrl.u32 %v5453, 7
    %v5455 = vsub.s32 1, %v5454
    %v5456 = vrot.slane %v4743, %v5455
    %v5457 = vlaneseq
    %v5458 = vshrl.u32 %v5457, 7
    %v5459 = vsub.s32 2, %v5458
    %v5460 = vrot.slane %v4743, %v5459
    %v5461 = vlaneseq
    %v5462 = vshrl.u32 %v5461, 7
    %v5463 = vsub.s32 3, %v5462
    %v5464 = vrot.slane %v4743, %v5463
    %v5465 = vlaneseq
    %v5466 = vshrl.u32 %v5465, 7
    %v5467 = vsub.s32 4, %v5466
    %v5468 = vrot.slane %v4743, %v5467
    %v5469 = vlaneseq
    %v5470 = vshrl.u32 %v5469, 7
    %v5471 = vsub.s32 5, %v5470
    %v5472 = vrot.slane %v4743, %v5471
    %v5479 = vadd.f32 %v5352, %v5452
    %v5480 = vadd.f32 %v5353, %v5456
    %v5481 = vadd.f32 %v5354, %v5460
    %v5482 = vadd.f32 %v5355, %v5464
    %v5483 = vadd.f32 %v5356, %v5468
    %v5484 = vadd.f32 %v5357, %v5472
    %v5485 = vadd.f32 %v5358, %v5452
    %v5486 = vadd.f32 %v5359, %v5456
    %v5487 = vadd.f32 %v5360, %v5460
    %v5488 = vadd.f32 %v5361, %v5464
    %v5489 = vadd.f32 %v5362, %v5468
    %v5490 = vadd.f32 %v5363, %v5472
    %v5491 = vadd.f32 %v5364, %v5452
    %v5492 = vadd.f32 %v5365, %v5456
    %v5493 = vadd.f32 %v5366, %v5460
    %v5494 = vadd.f32 %v5367, %v5464
    %v5495 = vadd.f32 %v5368, %v5468
    %v5496 = vadd.f32 %v5369, %v5472
    %v5497 = vadd.f32 %v5370, %v5452
    %v5498 = vadd.f32 %v5371, %v5456
    %v5499 = vadd.f32 %v5372, %v5460
    %v5500 = vadd.f32 %v5373, %v5464
    %v5501 = vadd.f32 %v5374, %v5468
    %v5502 = vadd.f32 %v5375, %v5472
    %v5503 = vadd.f32 %v5376, %v5452
    %v5504 = vadd.f32 %v5377, %v5456
    %v5505 = vadd.f32 %v5378, %v5460
    %v5506 = vadd.f32 %v5379, %v5464
    %v5507 = vadd.f32 %v5380, %v5468
    %v5508 = vadd.f32 %v5381, %v5472
    %v5509 = vadd.f32 %v5382, %v5452
    %v5510 = vadd.f32 %v5383, %v5456
    %v5511 = vadd.f32 %v5384, %v5460
    %v5512 = vadd.f32 %v5385, %v5464
    %v5513 = vadd.f32 %v5386, %v5468
    %v5514 = vadd.f32 %v5387, %v5472
    %v5515 = vadd.f32 %v5388, %v5452
    %v5516 = vadd.f32 %v5389, %v5456
    %v5517 = vadd.f32 %v5390, %v5460
    %v5518 = vadd.f32 %v5391, %v5464
    %v5519 = vadd.f32 %v5392, %v5468
    %v5520 = vadd.f32 %v5393, %v5472
    %v5521 = vadd.f32 %v5394, %v5452
    %v5522 = vadd.f32 %v5395, %v5456
    %v5523 = vadd.f32 %v5396, %v5460
    %v5524 = vadd.f32 %v5397, %v5464
    %v5525 = vadd.f32 %v5398, %v5468
    %v5526 = vadd.f32 %v5399, %v5472
    %v5527 = vadd.f32 %v5400, %v5452
    %v5528 = vadd.f32 %v5401, %v5456
    %v5529 = vadd.f32 %v5402, %v5460
    %v5530 = vadd.f32 %v5403, %v5464
    %v5531 = vadd.f32 %v5404, %v5468
    %v5532 = vadd.f32 %v5405, %v5472
    %v5533 = vadd.f32 %v5406, %v5452
    %v5534 = vadd.f32 %v5407, %v5456
    %v5535 = vadd.f32 %v5408, %v5460
    %v5536 = vadd.f32 %v5409, %v5464
    %v5537 = vadd.f32 %v5410, %v5468
    %v5538 = vadd.f32 %v5411, %v5472
    %v5539 = vadd.f32 %v5412, %v5452
    %v5540 = vadd.f32 %v5413, %v5456
    %v5541 = vadd.f32 %v5414, %v5460
    %v5542 = vadd.f32 %v5415, %v5464
    %v5543 = vadd.f32 %v5416, %v5468
    %v5544 = vadd.f32 %v5417, %v5472
    %v5545 = vadd.f32 %v5418, %v5452
    %v5546 = vadd.f32 %v5419, %v5456
    %v5547 = vadd.f32 %v5420, %v5460
    %v5548 = vadd.f32 %v5421, %v5464
    %v5549 = vadd.f32 %v5422, %v5468
    %v5550 = vadd.f32 %v5423, %v5472
    %v5551 = vadd.f32 %v5424, %v5452
    %v5552 = vadd.f32 %v5425, %v5456
    %v5553 = vadd.f32 %v5426, %v5460
    %v5554 = vadd.f32 %v5427, %v5464
    %v5555 = vadd.f32 %v5428, %v5468
    %v5556 = vadd.f32 %v5429, %v5472
    %v5557 = vadd.f32 %v5430, %v5452
    %v5558 = vadd.f32 %v5431, %v5456
    %v5559 = vadd.f32 %v5432, %v5460
    %v5560 = vadd.f32 %v5433, %v5464
    %v5561 = vadd.f32 %v5434, %v5468
    %v5562 = vadd.f32 %v5435, %v5472
    %v5563 = vadd.f32 %v5436, %v5452
    %v5564 = vadd.f32 %v5437, %v5456
    %v5565 = vadd.f32 %v5438, %v5460
    %v5566 = vadd.f32 %v5439, %v5464
    %v5567 = vadd.f32 %v5440, %v5468
    %v5568 = vadd.f32 %v5441, %v5472
    %v5569 = vadd.f32 %v5442, %v5452
    %v5570 = vadd.f32 %v5443, %v5456
    %v5571 = vadd.f32 %v5444, %v5460
    %v5572 = vadd.f32 %v5445, %v5464
    %v5573 = vadd.f32 %v5446, %v5468
    %v5574 = vadd.f32 %v5447, %v5472
    %v5575 = vadd.f32 %v5479, %v5485
    %v5576 = vadd.f32 %v5575, %v5491
    %v5577 = vadd.f32 %v5576, %v5497
    %v5578 = vadd.f32 %v5577, %v5503
    %v5579 = vadd.f32 %v5578, %v5509
    %v5580 = vadd.f32 %v5579, %v5515
    %v5581 = vadd.f32 %v5580, %v5521
    %v5582 = vrot.slane %v5581, 4
    %v5583 = vadd.f32 %v5581, %v5582
    %v5584 = vrot.slane %v5583, 2
    %v5585 = vadd.f32 %v5583, %v5584
    %v5586 = vrot.slane %v5585, 1
    %v5587 = vadd.f32 %v5585, %v5586
    %v5588 = vadd.f32 %v5480, %v5486
    %v5589 = vadd.f32 %v5588, %v5492
    %v5590 = vadd.f32 %v5589, %v5498
    %v5591 = vadd.f32 %v5590, %v5504
    %v5592 = vadd.f32 %v5591, %v5510
    %v5593 = vadd.f32 %v5592, %v5516
    %v5594 = vadd.f32 %v5593, %v5522
    %v5595 = vrot.slane %v5594, 4
    %v5596 = vadd.f32 %v5594, %v5595
    %v5597 = vrot.slane %v5596, 2
    %v5598 = vadd.f32 %v5596, %v5597
    %v5599 = vrot.slane %v5598, 1
    %v5600 = vadd.f32 %v5598, %v5599
    %v5601 = vadd.f32 %v5481, %v5487
    %v5602 = vadd.f32 %v5601, %v5493
    %v5603 = vadd.f32 %v5602, %v5499
    %v5604 = vadd.f32 %v5603, %v5505
    %v5605 = vadd.f32 %v5604, %v5511
    %v5606 = vadd.f32 %v5605, %v5517
    %v5607 = vadd.f32 %v5606, %v5523
    %v5608 = vrot.slane %v5607, 4
    %v5609 = vadd.f32 %v5607, %v5608
    %v5610 = vrot.slane %v5609, 2
    %v5611 = vadd.f32 %v5609, %v5610
    %v5612 = vrot.slane %v5611, 1
    %v5613 = vadd.f32 %v5611, %v5612
    %v5614 = vadd.f32 %v5482, %v5488
    %v5615 = vadd.f32 %v5614, %v5494
    %v5616 = vadd.f32 %v5615, %v5500
    %v5617 = vadd.f32 %v5616, %v5506
    %v5618 = vadd.f32 %v5617, %v5512
    %v5619 = vadd.f32 %v5618, %v5518
    %v5620 = vadd.f32 %v5619, %v5524
    %v5621 = vrot.slane %v5620, 4
    %v5622 = vadd.f32 %v5620, %v5621
    %v5623 = vrot.slane %v5622, 2
    %v5624 = vadd.f32 %v5622, %v5623
    %v5625 = vrot.slane %v5624, 1
    %v5626 = vadd.f32 %v5624, %v5625
    %v5627 = vadd.f32 %v5483, %v5489
    %v5628 = vadd.f32 %v5627, %v5495
    %v5629 = vadd.f32 %v5628, %v5501
    %v5630 = vadd.f32 %v5629, %v5507
    %v5631 = vadd.f32 %v5630, %v5513
    %v5632 = vadd.f32 %v5631, %v5519
    %v5633 = vadd.f32 %v5632, %v5525
    %v5634 = vrot.slane %v5633, 4
    %v5635 = vadd.f32 %v5633, %v5634
    %v5636 = vrot.slane %v5635, 2
    %v5637 = vadd.f32 %v5635, %v5636
    %v5638 = vrot.slane %v5637, 1
    %v5639 = vadd.f32 %v5637, %v5638
    %v5640 = vadd.f32 %v5484, %v5490
    %v5641 = vadd.f32 %v5640, %v5496
    %v5642 = vadd.f32 %v5641, %v5502
    %v5643 = vadd.f32 %v5642, %v5508
    %v5644 = vadd.f32 %v5643, %v5514
    %v5645 = vadd.f32 %v5644, %v5520
    %v5646 = vadd.f32 %v5645, %v5526
    %v5647 = vrot.slane %v5646, 4
    %v5648 = vadd.f32 %v5646, %v5647
    %v5649 = vrot.slane %v5648, 2
    %v5650 = vadd.f32 %v5648, %v5649
    %v5651 = vrot.slane %v5650, 1
    %v5652 = vadd.f32 %v5650, %v5651
    %v5653 = vrcp.pop 64.0
    %v5654 = vmul.f32 %v5587, %v5653
    %v5655 = vmul.f32 %v5600, %v5653
    %v5656 = vmul.f32 %v5613, %v5653
    %v5657 = vmul.f32 %v5626, %v5653
    %v5658 = vmul.f32 %v5639, %v5653
    %v5659 = vmul.f32 %v5652, %v5653
    %v5660 = vadd.f32 %v5527, %v5533
    %v5661 = vadd.f32 %v5660, %v5539
    %v5662 = vadd.f32 %v5661, %v5545
    %v5663 = vadd.f32 %v5662, %v5551
    %v5664 = vadd.f32 %v5663, %v5557
    %v5665 = vadd.f32 %v5664, %v5563
    %v5666 = vadd.f32 %v5665, %v5569
    %v5667 = vrot.slane %v5666, 4
    %v5668 = vadd.f32 %v5666, %v5667
    %v5669 = vrot.slane %v5668, 2
    %v5670 = vadd.f32 %v5668, %v5669
    %v5671 = vrot.slane %v5670, 1
    %v5672 = vadd.f32 %v5670, %v5671
    %v5673 = vadd.f32 %v5528, %v5534
    %v5674 = vadd.f32 %v5673, %v5540
    %v5675 = vadd.f32 %v5674, %v5546
    %v5676 = vadd.f32 %v5675, %v5552
    %v5677 = vadd.f32 %v5676, %v5558
    %v5678 = vadd.f32 %v5677, %v5564
    %v5679 = vadd.f32 %v5678, %v5570
    %v5680 = vrot.slane %v5679, 4
    %v5681 = vadd.f32 %v5679, %v5680
    %v5682 = vrot.slane %v5681, 2
    %v5683 = vadd.f32 %v5681, %v5682
    %v5684 = vrot.slane %v5683, 1
    %v5685 = vadd.f32 %v5683, %v5684
    %v5686 = vadd.f32 %v5529, %v5535
    %v5687 = vadd.f32 %v5686, %v5541
    %v5688 = vadd.f32 %v5687, %v5547
    %v5689 = vadd.f32 %v5688, %v5553
    %v5690 = vadd.f32 %v5689, %v5559
    %v5691 = vadd.f32 %v5690, %v5565
    %v5692 = vadd.f32 %v5691, %v5571
    %v5693 = vrot.slane %v5692, 4
    %v5694 = vadd.f32 %v5692, %v5693
    %v5695 = vrot.slane %v5694, 2
    %v5696 = vadd.f32 %v5694, %v5695
    %v5697 = vrot.slane %v5696, 1
    %v5698 = vadd.f32 %v5696, %v5697
    %v5699 = vadd.f32 %v5530, %v5536
    %v5700 = vadd.f32 %v5699, %v5542
    %v5701 = vadd.f32 %v5700, %v5548
    %v5702 = vadd.f32 %v5701, %v5554
    %v5703 = vadd.f32 %v5702, %v5560
    %v5704 = vadd.f32 %v5703, %v5566
    %v5705 = vadd.f32 %v5704, %v5572
    %v5706 = vrot.slane %v5705, 4
    %v5707 = vadd.f32 %v5705, %v5706
    %v5708 = vrot.slane %v5707, 2
    %v5709 = vadd.f32 %v5707, %v5708
    %v5710 = vrot.slane %v5709, 1
    %v5711 = vadd.f32 %v5709, %v5710
    %v5712 = vadd.f32 %v5531, %v5537
    %v5713 = vadd.f32 %v5712, %v5543
    %v5714 = vadd.f32 %v5713, %v5549
    %v5715 = vadd.f32 %v5714, %v5555
    %v5716 = vadd.f32 %v5715, %v5561
    %v5717 = vadd.f32 %v5716, %v5567
    %v5718 = vadd.f32 %v5717, %v5573
    %v5719 = vrot.slane %v5718, 4
    %v5720 = vadd.f32 %v5718, %v5719
    %v5721 = vrot.slane %v5720, 2
    %v5722 = vadd.f32 %v5720, %v5721
    %v5723 = vrot.slane %v5722, 1
    %v5724 = vadd.f32 %v5722, %v5723
    %v5725 = vadd.f32 %v5532, %v5538
    %v5726 = vadd.f32 %v5725, %v5544
    %v5727 = vadd.f32 %v5726, %v5550
    %v5728 = vadd.f32 %v5727, %v5556
    %v5729 = vadd.f32 %v5728, %v5562
    %v5730 = vadd.f32 %v5729, %v5568
    %v5731 = vadd.f32 %v5730, %v5574
    %v5732 = vrot.slane %v5731, 4
    %v5733 = vadd.f32 %v5731, %v5732
    %v5734 = vrot.slane %v5733, 2
    %v5735 = vadd.f32 %v5733, %v5734
    %v5736 = vrot.slane %v5735, 1
    %v5737 = vadd.f32 %v5735, %v5736
    %v5738 = vmul.f32 %v5672, %v5653
    %v5739 = vmul.f32 %v5685, %v5653
    %v5740 = vmul.f32 %v5698, %v5653
    %v5741 = vmul.f32 %v5711, %v5653
    %v5742 = vmul.f32 %v5724, %v5653
    %v5743 = vmul.f32 %v5737, %v5653
    %vm5744 = vcmask 1040384
    %v5745 = vsel %vm5744, %v5654, %v5738
    %v5746 = vsel %vm5744, %v5655, %v5739
    %v5747 = vsel %vm5744, %v5656, %v5740
    %v5748 = vsel %vm5744, %v5657, %v5741
    %v5749 = vsel %vm5744, %v5658, %v5742
    %v5750 = vsel %vm5744, %v5659, %v5743
    %v5751 = vld [vmem:[#allocation6 + $0x60] sm:$0xf]
    %v5752 = vld [vmem:[#allocation6 + $0x68] sm:$0xf]
    %v5753 = vld [vmem:[#allocation6 + $0x70] sm:$0xf]
    %v5754 = vld [vmem:[#allocation6 + $0x78] sm:$0xf]
    %v5755 = vld [vmem:[#allocation6 + $0x80] sm:$0xf]
    %v5756 = vld [vmem:[#allocation6 + $0x88] sm:$0xf]
    %s5757 = scalar_lea.vmem [#allocation6], 5
    %v5758 = vld [vmem:[%s5757] ss:$8 sm:$0xf]
    %v5759 = vld [vmem:[%s5757] ss:$8 sm:$0x30]
    %v5760 = vor.u32 %v5758, %v5759
    %v5761 = vlaneseq
    %v5762 = vshrl.u32 %v5761, 7
    %v5763 = vsub.s32 0, %v5762
    %v5764 = vrot.slane %v5751, %v5763
    %v5765 = vlaneseq
    %v5766 = vshrl.u32 %v5765, 7
    %v5767 = vsub.s32 0, %v5766
    %v5768 = vrot.slane %v5752, %v5767
    %v5769 = vlaneseq
    %v5770 = vshrl.u32 %v5769, 7
    %v5771 = vsub.s32 0, %v5770
    %v5772 = vrot.slane %v5753, %v5771
    %v5773 = vlaneseq
    %v5774 = vshrl.u32 %v5773, 7
    %v5775 = vsub.s32 0, %v5774
    %v5776 = vrot.slane %v5754, %v5775
    %v5777 = vlaneseq
    %v5778 = vshrl.u32 %v5777, 7
    %v5779 = vsub.s32 0, %v5778
    %v5780 = vrot.slane %v5755, %v5779
    %v5781 = vlaneseq
    %v5782 = vshrl.u32 %v5781, 7
    %v5783 = vsub.s32 0, %v5782
    %v5784 = vrot.slane %v5756, %v5783
    %v5785 = vmul.f32 %v5745, %v5764
    %v5786 = vmul.f32 %v5746, %v5768
    %v5787 = vmul.f32 %v5747, %v5772
    %v5788 = vmul.f32 %v5748, %v5776
    %v5789 = vmul.f32 %v5749, %v5780
    %v5790 = vmul.f32 %v5750, %v5784
    %vm5791 = vcmask 1041408
    %v5792 = vsel %vm5791, %v5785, 0.0
    %v5793 = vsel %vm5791, %v5786, 0.0
    %v5794 = vadd.f32 %v5792, %v5793
    %v5795 = vsel %vm5791, %v5787, 0.0
    %v5796 = vadd.f32 %v5794, %v5795
    %v5797 = vsel %vm5791, %v5788, 0.0
    %v5798 = vadd.f32 %v5796, %v5797
    %v5799 = vsel %vm5791, %v5789, 0.0
    %v5800 = vadd.f32 %v5798, %v5799
    %v5801 = vsel %vm5791, %v5790, 0.0
    %v5802 = vadd.f32 %v5800, %v5801
    %5803 = vadd.xlane.f32.xlu0 %v5802
    %v5804 = vpop.xlane.xlu0 %5803
    %v5805 = vlaneseq
    %v5806 = vshrl.u32 %v5805, 7
    %v5807 = vsub.s32 1, %v5806
    %v5808 = vrot.slane %v5751, %v5807
    %v5809 = vlaneseq
    %v5810 = vshrl.u32 %v5809, 7
    %v5811 = vsub.s32 1, %v5810
    %v5812 = vrot.slane %v5752, %v5811
    %v5813 = vlaneseq
    %v5814 = vshrl.u32 %v5813, 7
    %v5815 = vsub.s32 1, %v5814
    %v5816 = vrot.slane %v5753, %v5815
    %v5817 = vlaneseq
    %v5818 = vshrl.u32 %v5817, 7
    %v5819 = vsub.s32 1, %v5818
    %v5820 = vrot.slane %v5754, %v5819
    %v5821 = vlaneseq
    %v5822 = vshrl.u32 %v5821, 7
    %v5823 = vsub.s32 1, %v5822
    %v5824 = vrot.slane %v5755, %v5823
    %v5825 = vlaneseq
    %v5826 = vshrl.u32 %v5825, 7
    %v5827 = vsub.s32 1, %v5826
    %v5828 = vrot.slane %v5756, %v5827
    %v5829 = vmul.f32 %v5745, %v5808
    %v5830 = vmul.f32 %v5746, %v5812
    %v5831 = vmul.f32 %v5747, %v5816
    %v5832 = vmul.f32 %v5748, %v5820
    %v5833 = vmul.f32 %v5749, %v5824
    %v5834 = vmul.f32 %v5750, %v5828
    %v5835 = vsel %vm5791, %v5829, 0.0
    %v5836 = vsel %vm5791, %v5830, 0.0
    %v5837 = vadd.f32 %v5835, %v5836
    %v5838 = vsel %vm5791, %v5831, 0.0
    %v5839 = vadd.f32 %v5837, %v5838
    %v5840 = vsel %vm5791, %v5832, 0.0
    %v5841 = vadd.f32 %v5839, %v5840
    %v5842 = vsel %vm5791, %v5833, 0.0
    %v5843 = vadd.f32 %v5841, %v5842
    %v5844 = vsel %vm5791, %v5834, 0.0
    %v5845 = vadd.f32 %v5843, %v5844
    %5846 = vadd.xlane.f32.xlu0 %v5845
    %v5847 = vpop.xlane.xlu0 %5846
    %v5848 = vlaneseq
    %v5849 = vshrl.u32 %v5848, 7
    %v5850 = vsub.s32 2, %v5849
    %v5851 = vrot.slane %v5751, %v5850
    %v5852 = vlaneseq
    %v5853 = vshrl.u32 %v5852, 7
    %v5854 = vsub.s32 2, %v5853
    %v5855 = vrot.slane %v5752, %v5854
    %v5856 = vlaneseq
    %v5857 = vshrl.u32 %v5856, 7
    %v5858 = vsub.s32 2, %v5857
    %v5859 = vrot.slane %v5753, %v5858
    %v5860 = vlaneseq
    %v5861 = vshrl.u32 %v5860, 7
    %v5862 = vsub.s32 2, %v5861
    %v5863 = vrot.slane %v5754, %v5862
    %v5864 = vlaneseq
    %v5865 = vshrl.u32 %v5864, 7
    %v5866 = vsub.s32 2, %v5865
    %v5867 = vrot.slane %v5755, %v5866
    %v5868 = vlaneseq
    %v5869 = vshrl.u32 %v5868, 7
    %v5870 = vsub.s32 2, %v5869
    %v5871 = vrot.slane %v5756, %v5870
    %v5872 = vmul.f32 %v5745, %v5851
    %v5873 = vmul.f32 %v5746, %v5855
    %v5874 = vmul.f32 %v5747, %v5859
    %v5875 = vmul.f32 %v5748, %v5863
    %v5876 = vmul.f32 %v5749, %v5867
    %v5877 = vmul.f32 %v5750, %v5871
    %v5878 = vsel %vm5791, %v5872, 0.0
    %v5879 = vsel %vm5791, %v5873, 0.0
    %v5880 = vadd.f32 %v5878, %v5879
    %v5881 = vsel %vm5791, %v5874, 0.0
    %v5882 = vadd.f32 %v5880, %v5881
    %v5883 = vsel %vm5791, %v5875, 0.0
    %v5884 = vadd.f32 %v5882, %v5883
    %v5885 = vsel %vm5791, %v5876, 0.0
    %v5886 = vadd.f32 %v5884, %v5885
    %v5887 = vsel %vm5791, %v5877, 0.0
    %v5888 = vadd.f32 %v5886, %v5887
    %5889 = vadd.xlane.f32.xlu0 %v5888
    %v5890 = vpop.xlane.xlu0 %5889
    %v5891 = vlaneseq
    %v5892 = vshrl.u32 %v5891, 7
    %v5893 = vsub.s32 3, %v5892
    %v5894 = vrot.slane %v5751, %v5893
    %v5895 = vlaneseq
    %v5896 = vshrl.u32 %v5895, 7
    %v5897 = vsub.s32 3, %v5896
    %v5898 = vrot.slane %v5752, %v5897
    %v5899 = vlaneseq
    %v5900 = vshrl.u32 %v5899, 7
    %v5901 = vsub.s32 3, %v5900
    %v5902 = vrot.slane %v5753, %v5901
    %v5903 = vlaneseq
    %v5904 = vshrl.u32 %v5903, 7
    %v5905 = vsub.s32 3, %v5904
    %v5906 = vrot.slane %v5754, %v5905
    %v5907 = vlaneseq
    %v5908 = vshrl.u32 %v5907, 7
    %v5909 = vsub.s32 3, %v5908
    %v5910 = vrot.slane %v5755, %v5909
    %v5911 = vlaneseq
    %v5912 = vshrl.u32 %v5911, 7
    %v5913 = vsub.s32 3, %v5912
    %v5914 = vrot.slane %v5756, %v5913
    %v5915 = vmul.f32 %v5745, %v5894
    %v5916 = vmul.f32 %v5746, %v5898
    %v5917 = vmul.f32 %v5747, %v5902
    %v5918 = vmul.f32 %v5748, %v5906
    %v5919 = vmul.f32 %v5749, %v5910
    %v5920 = vmul.f32 %v5750, %v5914
    %v5921 = vsel %vm5791, %v5915, 0.0
    %v5922 = vsel %vm5791, %v5916, 0.0
    %v5923 = vadd.f32 %v5921, %v5922
    %v5924 = vsel %vm5791, %v5917, 0.0
    %v5925 = vadd.f32 %v5923, %v5924
    %v5926 = vsel %vm5791, %v5918, 0.0
    %v5927 = vadd.f32 %v5925, %v5926
    %v5928 = vsel %vm5791, %v5919, 0.0
    %v5929 = vadd.f32 %v5927, %v5928
    %v5930 = vsel %vm5791, %v5920, 0.0
    %v5931 = vadd.f32 %v5929, %v5930
    %5932 = vadd.xlane.f32.xlu0 %v5931
    %v5933 = vpop.xlane.xlu0 %5932
    %vm5934 = vcmask 7168
    %v5935 = vsel %vm5934, %v5804, %v5847
    %vm5936 = vcmask 15360
    %v5937 = vsel %vm5936, %v5935, %v5890
    %vm5938 = vcmask 23552
    %v5939 = vsel %vm5938, %v5937, %v5933
    %v5941 = vlaneseq
    %v5942 = vshrl.u32 %v5941, 7
    %v5943 = vsub.s32 0, %v5942
    %v5944 = vrot.slane %v5760, %v5943
    %v5946 = vadd.f32 %v5939, %v5944
    %vm5947 = vcmask 25600
    %v5948 = vsel %vm5947, %v5946, -inf
    %5949 = vmax.xlane.f32.xlu0 %v5948
    %v5950 = vpop.xlane.xlu0 %5949
    %v5951 = vsub.f32 %v5946, %v5950
    %v5952 = vmul.f32 %v5951, 1.442695
    %v5953 = vpow.pop %v5952
    %v5954 = vsel %vm5947, %v5953, 0.0
    %5955 = vadd.xlane.f32.xlu0 %v5954
    %v5956 = vpop.xlane.xlu0 %5955
    %v5957 = vlog2.pop %v5956
    %v5958 = vmul.f32 %v5957, 0.6931472
    %v5959 = vsub.f32 %v5951, %v5958
    %5960 = vst.msk [vmem:[#allocation9] sm:$0x3] %vm5947, %v5959
    // Predicated region
    $region26: #{forward.1} parent=1 // pred_check
      _
    $region27: #{forward.1} parent=1 // pred_check_branch
      %5962 = sbr.rel (0) target = $region29
    $region28: #{forward.1} parent=1 // pred_region
      %s5964 = ssub.s32 32, 32
      %5965 = vsyncadd [#allocation4], %s5964
      %s5967 = sshll.u32 [#allocation9], 4
      %s5968 = int_to_ptr.vmem [resolvable:$true] %s5967
      %5970 = dma.vmem_to_hbm [thread:$0]  %s5968, 32, %s3, [#allocation4]
    $region29: #{forward.1} parent=1 // pred_fallthru
      _
    // Predicated region
    $region30: #{forward.1} parent=1 // pred_check
      _
    $region31: #{forward.1} parent=1 // pred_check_branch
      %5972 = sbr.rel (0) target = $region33
    $region32: #{forward.1} parent=1 // pred_region
      %5973 = dma.done [#allocation4], 32
    $region33: #{forward.1} parent=1 // pred_fallthru
      _
    %5974 = vsyncpa [#allocation3], 1
    %5975 = vsyncpa [#allocation8], 1
    %5976 = vsyncpa [#allocation4], 1
    %5977 = vsyncpa [#allocation5], 1

</llo_original>
